<compile_context>
chip_gen: v6e
topology: v6e:2x2x1
jax: 0.10.0
libtpu: 0.0.40
codegen_flags: <defaults>
</compile_context>

<pallas_src>
import numpy as np
import jax
import jax.numpy as jnp
from jax.experimental import pallas as pl
from jax.experimental.pallas import tpu as pltpu

# ----------------- small, module-consistent hyper-parameters -----------------
VOCAB   = 50
V_PAD   = 128          # lane-dense padded vocab (multiple of 128)
MAX_LEN = 20
N_DEC   = 2
PAD_IDX = 0
D_MODEL = 32
D_K     = 8
D_V     = 8
H       = 4
D_FF    = 64
LN_EPS  = 1e-5
NEG_INF = -1e30        # additive mask value (matches masked_fill(-inf) numerically)

B, SEQ, ENC_LEN = 2, 8, 8
SCALE = np.float32(1.0 / np.sqrt(D_K))

# -------- packed weight-slab layout (rows x 128 lanes, all f32) ---------------
HK  = H * D_K           # 32
HK3 = 3 * HK            # 96
ATTN_ROWS = D_MODEL                                   # 32 rows per attention block
OFF_ATTN  = 0                                         # L0 self, L0 cross, L1 self, L1 cross
OFF_FC    = OFF_ATTN + 2 * N_DEC * ATTN_ROWS          # 128 : vocab projection (32,128)
OFF_VECS  = OFF_FC + D_MODEL                          # 160 : 16 bias/LN rows per layer
VEC_ROWS  = 16
OFF_FFW   = OFF_VECS + N_DEC * VEC_ROWS               # 192 : FFN weights, 96 rows per layer
FFW_ROWS  = D_MODEL + D_FF                            # 96
TOT_ROWS  = OFF_FFW + N_DEC * FFW_ROWS                # 384
WSLAB_W   = 128

# rows inside a layer's 16-row bias / LayerNorm block
R_SA_BQKV, R_CA_BQKV = 0, 1
R_SA_BO, R_SA_G, R_SA_B = 2, 3, 4
R_CA_BO, R_CA_G, R_CA_B = 5, 6, 7
R_FF1_B, R_FF2_B, R_FF_G, R_FF_B = 8, 9, 10, 11


# -------------------- math shared by the kernel and the reference -------------
def _mm(a, b):
    """2-D matmul, bf16 operands / f32 accumulation (single-pass MXU)."""
    return jnp.dot(a.astype(jnp.bfloat16), b.astype(jnp.bfloat16),
                   preferred_element_type=jnp.float32)


def _layer_norm(x, g, b):
    mu = jnp.mean(x, axis=-1, keepdims=True)
    var = jnp.mean(jnp.square(x - mu), axis=-1, keepdims=True)
    return (x - mu) * jax.lax.rsqrt(var + LN_EPS) * g + b


def _softmax(x, approx):
    m = jnp.max(x, axis=-1, keepdims=True)
    e = jnp.exp(x - m)
    s = jnp.sum(e, axis=-1, keepdims=True)
    if approx:                          # EUP reciprocal (kernel only)
        return e * pl.reciprocal(s, approx=True)
    return e / s


def _attention(x_q, x_kv, bias, w_qkv, b_qkv, w_o, b_o, ln_g, ln_b, *, approx):
    """Multi-head attention + post-LN residual on a flat batch block.

    x_q: (n, D_MODEL)  x_kv: (m, D_MODEL)  bias: (n, m) additive
    w_qkv: (D_MODEL, 3*H*D_K) packed [Wq | Wk | Wv]   b_qkv: (1, 3*H*D_K)
    w_o:   (H*D_V, D_MODEL)                            b_o:   (1, D_MODEL)
    """
    if x_q is x_kv:
        qkv = _mm(x_q, w_qkv) + b_qkv                  # ONE (n,32)@(32,96) matmul
        q_pk = qkv[:, 0:HK]
        k_pk = qkv[:, HK:2 * HK]
        v_pk = qkv[:, 2 * HK:3 * HK]
    else:
        q_pk = _mm(x_q, w_qkv[:, 0:HK]) + b_qkv[:, 0:HK]
        kv = _mm(x_kv, w_qkv[:, HK:3 * HK]) + b_qkv[:, HK:3 * HK]
        k_pk = kv[:, 0:HK]
        v_pk = kv[:, HK:2 * HK]

    # lane-packed -> head-batched (H, ., D_K): cheap leading-axis restack
    q_h = jnp.stack([q_pk[:, h * D_K:(h + 1) * D_K] for h in range(H)], axis=0)
    k_h = jnp.stack([k_pk[:, h * D_K:(h + 1) * D_K] for h in range(H)], axis=0)
    v_h = jnp.stack([v_pk[:, h * D_V:(h + 1) * D_V] for h in range(H)], axis=0)

    att = jnp.einsum('hqd,hkd->hqk', q_h.astype(jnp.bfloat16),
                     k_h.astype(jnp.bfloat16),
                     preferred_element_type=jnp.float32) * SCALE
    att = _softmax(att + bias[None], approx)
    ctx_h = jnp.einsum('hqk,hkd->hqd', att.astype(jnp.bfloat16),
                       v_h.astype(jnp.bfloat16),
                       preferred_element_type=jnp.float32)       # (H, n, D_V)
    # heads packed back along lanes -> the out-projection is ONE matmul
    ctx = jnp.concatenate([ctx_h[h] for h in range(H)], axis=-1)  # (n, H*D_V)
    o = _mm(ctx, w_o) + b_o
    return _layer_norm(x_q + o, ln_g, ln_b)


def _forward(x, enc, mpad, sbias, ebias, W, *, approx):
    """Full decoder stack + padded-vocab log-softmax on one flat batch block.

    x: (n, D_MODEL) with n = bb*S, enc: (N_DEC, m, D_MODEL) with m = bb*Ke,
    mpad: (n, D_MODEL), sbias: (n, n), ebias: (n, m),
    W: (TOT_ROWS, 128) weight slab (a VMEM ref inside the kernel, a jnp array
    in the pure-JAX reference -- both support the same static slicing).
    """
    out = x
    for i in range(N_DEC):
        a_s = OFF_ATTN + (2 * i) * ATTN_ROWS
        a_c = OFF_ATTN + (2 * i + 1) * ATTN_ROWS
        aw_s = W[a_s:a_s + ATTN_ROWS, :]                  # (32,128) = [Wqkv | Wo]
        aw_c = W[a_c:a_c + ATTN_ROWS, :]
        v0 = OFF_VECS + i * VEC_ROWS
        vec = W[v0:v0 + VEC_ROWS, :]                      # (16,128) biases / LN
        f0 = OFF_FFW + i * FFW_ROWS
        w_ff1 = W[f0:f0 + D_MODEL, 0:D_FF]                # (32,64)
        w_ff2 = W[f0 + D_MODEL:f0 + FFW_ROWS, 0:D_MODEL]  # (64,32)

        sa_wqkv, sa_wo = aw_s[:, 0:HK3], aw_s[:, HK3:HK3 + D_MODEL]
        ca_wqkv, ca_wo = aw_c[:, 0:HK3], aw_c[:, HK3:HK3 + D_MODEL]
        sa_bqkv = vec[R_SA_BQKV:R_SA_BQKV + 1, 0:HK3]
        ca_bqkv = vec[R_CA_BQKV:R_CA_BQKV + 1, 0:HK3]
        sa_bo = vec[R_SA_BO:R_SA_BO + 1, 0:D_MODEL]
        sa_g  = vec[R_SA_G:R_SA_G + 1, 0:D_MODEL]
        sa_b  = vec[R_SA_B:R_SA_B + 1, 0:D_MODEL]
        ca_bo = vec[R_CA_BO:R_CA_BO + 1, 0:D_MODEL]
        ca_g  = vec[R_CA_G:R_CA_G + 1, 0:D_MODEL]
        ca_b  = vec[R_CA_B:R_CA_B + 1, 0:D_MODEL]
        ff1_b = vec[R_FF1_B:R_FF1_B + 1, 0:D_FF]
        ff2_b = vec[R_FF2_B:R_FF2_B + 1, 0:D_MODEL]
        ff_g  = vec[R_FF_G:R_FF_G + 1, 0:D_MODEL]
        ff_b  = vec[R_FF_B:R_FF_B + 1, 0:D_MODEL]

        sa = _attention(out, out, sbias, sa_wqkv, sa_bqkv, sa_wo, sa_bo,
                        sa_g, sa_b, approx=approx)
        sa = sa * mpad
        ca = _attention(sa, enc[i], ebias, ca_wqkv, ca_bqkv, ca_wo, ca_bo,
                        ca_g, ca_b, approx=approx)
        ca = ca * mpad
        hdd = jnp.maximum(_mm(ca, w_ff1) + ff1_b, 0.0)
        ff = _mm(hdd, w_ff2) + ff2_b
        out = _layer_norm(ca + ff, ff_g, ff_b) * mpad

    fc_w = W[OFF_FC:OFF_FC + D_MODEL, :]                  # (32,128) lane-dense
    logits = _mm(out, fc_w)                               # (n, 128)
    col = jax.lax.broadcasted_iota(jnp.int32, (1, V_PAD), 1)
    logits = jnp.where(col < VOCAB, logits, NEG_INF)      # mask padded vocab cols
    m = jnp.max(logits, axis=-1, keepdims=True)
    z = logits - m
    return z - jnp.log(jnp.sum(jnp.exp(z), axis=-1, keepdims=True))


# --------------------------------- masks ---------------------------------------
def _block_diag(bias):
    """(nblk, bb, s, t) per-example additive bias -> (nblk, bb*s, bb*t) where
    cross-example blocks are NEG_INF (keeps examples independent when the
    batch block is flattened along the sequence axis)."""
    nblk, bb, s, t = bias.shape
    same = (jnp.arange(bb)[:, None, None, None] ==
            jnp.arange(bb)[None, None, :, None])                    # (bb,1,bb,1)
    full = jnp.where(same, bias[:, :, :, None, :], NEG_INF)         # (nblk,bb,s,bb,t)
    return full.reshape(nblk, bb * s, bb * t)


def _build_seq(input_ids):
    b, s = input_ids.shape
    not_pad = (input_ids != PAD_IDX)
    return jnp.where(not_pad, jnp.arange(1, s + 1, dtype=jnp.int32)[None, :], 0)


def _build_mask_slab(input_ids, mask_encoder, bb):
    """Single mask operand per batch block: [mpad (32) | self bias | enc bias]."""
    b, s = input_ids.shape
    ke = mask_encoder.shape[-1]
    nblk = b // bb
    not_pad = (input_ids != PAD_IDX)
    # query-padding mask, pre-broadcast to model width (lane-dense in-kernel use)
    mpad = jnp.broadcast_to(not_pad.astype(jnp.float32)[:, :, None], (b, s, D_MODEL))
    mpad = mpad.reshape(nblk, bb * s, D_MODEL)
    # self-attention additive bias (causal + key padding), block-diagonal per block
    causal = jnp.triu(jnp.ones((s, s), jnp.bool_), k=1)[None]
    mask_self = causal | (~not_pad)[:, None, :]
    sbias = jnp.where(mask_self, NEG_INF, 0.0).astype(jnp.float32)
    sbias = _block_diag(sbias.reshape(nblk, bb, s, s))
    # encoder-attention additive bias, broadcast over queries, block-diagonal
    epad = mask_encoder[:, 0, 0]                                     # (b, ke) bool
    ebias = jnp.where(epad, NEG_INF, 0.0).astype(jnp.float32)
    ebias = jnp.broadcast_to(ebias[:, None, :], (b, s, ke))
    ebias = _block_diag(ebias.reshape(nblk, bb, s, ke))
    return jnp.concatenate([mpad, sbias, ebias], axis=-1)            # (nblk, bb*s, W)


# --------------------------------- Pallas wrapper -------------------------------
def _batch_block(bsz):
    """v7x (2 TensorCores): one example per grid step, split across cores.
    v5e/v6e (1 TensorCore): fold the whole batch into ONE grid step."""
    try:
        kind = (getattr(jax.devices()[0], 'device_kind', '') or '').lower()
    except Exception:
        kind = ''
    two_tc = ('v7' in kind) or ('7x' in kind)
    if two_tc and bsz % 2 == 0:
        return bsz // 2
    return bsz


def decoder_col_forward(input_ids, encoder_output, mask_encoder, params):
    bsz, slen = input_ids.shape
    klen = encoder_output.shape[2]
    bb = _batch_block(bsz)                       # examples per grid step
    nblk = bsz // bb
    n = bb * slen
    m = bb * klen

    seq = _build_seq(input_ids)
    x = params['word_emb'][input_ids] + params['pos_emb'][seq]        # (B, S, D)
    x = x.reshape(nblk, n, D_MODEL)
    enc = encoder_output.reshape(nblk, bb, N_DEC, klen, D_MODEL)
    enc = jnp.transpose(enc, (0, 2, 1, 3, 4)).reshape(nblk, N_DEC, m, D_MODEL)
    mask_slab = _build_mask_slab(input_ids, mask_encoder, bb)         # (nblk, n, W)
    wslab = params['wslab']
    maskw = mask_slab.shape[-1]

    def kernel(x_ref, enc_ref, mask_ref, w_ref, out_ref):
        masks = mask_ref[0]
        out_ref[0] = _forward(
            x_ref[0], enc_ref[0],
            masks[:, 0:D_MODEL],                      # mpad   (n, 32)
            masks[:, D_MODEL:D_MODEL + n],            # sbias  (n, n)
            masks[:, D_MODEL + n:],                   # ebias  (n, m)
            w_ref, approx=True)

    out = pl.pallas_call(
        kernel,
        out_shape=jax.ShapeDtypeStruct((nblk, n, V_PAD), jnp.float32),
        grid=(nblk,),
        in_specs=[
            pl.BlockSpec((1, n, D_MODEL), lambda i: (i, 0, 0)),           # x
            pl.BlockSpec((1, N_DEC, m, D_MODEL), lambda i: (i, 0, 0, 0)), # enc
            pl.BlockSpec((1, n, maskw), lambda i: (i, 0, 0)),             # masks
            pl.BlockSpec((TOT_ROWS, WSLAB_W), lambda i: (0, 0)),          # weights
        ],
        out_specs=pl.BlockSpec((1, n, V_PAD), lambda i: (i, 0, 0)),
        compiler_params=pltpu.CompilerParams(
            dimension_semantics=("parallel",)),
    )(x, enc, mask_slab, wslab)
    return out.reshape(bsz, slen, V_PAD)[:, :, :VOCAB]


# --------------------------------- parameters ----------------------------------
def sinusoid_encoding_table(n_pos, d_model, padding_idx=None):
    pos = np.arange(n_pos, dtype=np.float32)[:, None]
    dim = np.arange(d_model, dtype=np.float32)[None, :]
    angle = pos / np.power(10000.0, 2.0 * np.floor(dim / 2.0) / d_model)
    tbl = np.zeros((n_pos, d_model), dtype=np.float32)
    tbl[:, 0::2] = np.sin(angle[:, 0::2])
    tbl[:, 1::2] = np.cos(angle[:, 1::2])
    if padding_idx is not None:
        tbl[padding_idx] = 0.0
    return jnp.asarray(tbl)


def _lin(key, fan_in, fan_out, scale=0.02):
    return jax.random.normal(key, (fan_in, fan_out), jnp.float32) * scale


def _bias(key, nn, scale=0.02):
    return jax.random.normal(key, (1, nn), jnp.float32) * scale


def init_params(key):
    kw, kfc, *kl = jax.random.split(key, 2 + N_DEC)
    word_emb = jax.random.normal(kw, (VOCAB, D_MODEL), jnp.float32)
    word_emb = word_emb.at[PAD_IDX].set(0.0)                 # padding_idx row zeroed

    W = np.zeros((TOT_ROWS, WSLAB_W), np.float32)

    def put(r, c, a):
        a = np.asarray(a, np.float32)
        W[r:r + a.shape[0], c:c + a.shape[1]] = a

    ones = np.ones((1, D_MODEL), np.float32)
    zeros = np.zeros((1, D_MODEL), np.float32)

    for i, k in enumerate(kl):
        ks = jax.random.split(k, 20)
        sa_wq, sa_bq = _lin(ks[0], D_MODEL, HK), _bias(ks[1], HK)
        sa_wk, sa_bk = _lin(ks[2], D_MODEL, HK), _bias(ks[3], HK)
        sa_wv, sa_bv = _lin(ks[4], D_MODEL, H * D_V), _bias(ks[5], H * D_V)
        sa_wo, sa_bo = _lin(ks[6], H * D_V, D_MODEL), _bias(ks[7], D_MODEL)
        ca_wq, ca_bq = _lin(ks[8], D_MODEL, HK), _bias(ks[9], HK)
        ca_wk, ca_bk = _lin(ks[10], D_MODEL, HK), _bias(ks[11], HK)
        ca_wv, ca_bv = _lin(ks[12], D_MODEL, H * D_V), _bias(ks[13], H * D_V)
        ca_wo, ca_bo = _lin(ks[14], H * D_V, D_MODEL), _bias(ks[15], D_MODEL)
        ff1_w, ff1_b = _lin(ks[16], D_MODEL, D_FF), _bias(ks[17], D_FF)
        ff2_w, ff2_b = _lin(ks[18], D_FF, D_MODEL), _bias(ks[19], D_MODEL)

        a_s = OFF_ATTN + (2 * i) * ATTN_ROWS
        a_c = OFF_ATTN + (2 * i + 1) * ATTN_ROWS
        put(a_s, 0, np.concatenate([np.asarray(sa_wq), np.asarray(sa_wk),
                                    np.asarray(sa_wv)], axis=1))      # [Wq|Wk|Wv]
        put(a_s, HK3, sa_wo)                                          # Wo
        put(a_c, 0, np.concatenate([np.asarray(ca_wq), np.asarray(ca_wk),
                                    np.asarray(ca_wv)], axis=1))
        put(a_c, HK3, ca_wo)

        v0 = OFF_VECS + i * VEC_ROWS
        put(v0 + R_SA_BQKV, 0, np.concatenate([np.asarray(sa_bq), np.asarray(sa_bk),
                                               np.asarray(sa_bv)], axis=1))
        put(v0 + R_CA_BQKV, 0, np.concatenate([np.asarray(ca_bq), np.asarray(ca_bk),
                                               np.asarray(ca_bv)], axis=1))
        put(v0 + R_SA_BO, 0, sa_bo)
        put(v0 + R_SA_G, 0, ones)
        put(v0 + R_SA_B, 0, zeros)
        put(v0 + R_CA_BO, 0, ca_bo)
        put(v0 + R_CA_G, 0, ones)
        put(v0 + R_CA_B, 0, zeros)
        put(v0 + R_FF1_B, 0, ff1_b)
        put(v0 + R_FF2_B, 0, ff2_b)
        put(v0 + R_FF_G, 0, ones)
        put(v0 + R_FF_B, 0, zeros)

        f0 = OFF_FFW + i * FFW_ROWS
        put(f0, 0, ff1_w)
        put(f0 + D_MODEL, 0, ff2_w)

    fc_w = _lin(kfc, D_MODEL, VOCAB)            # nn.Linear(d_model, vocab, bias=False)
    put(OFF_FC, 0, fc_w)                        # lanes 50:128 stay zero, masked in-kernel

    return {
        'word_emb': word_emb,
        'pos_emb': sinusoid_encoding_table(MAX_LEN + 1, D_MODEL, padding_idx=0),
        'wslab': jnp.asarray(W),                # (384, 128) packed weight slab
    }


# --------------------------------- reference ------------------------------------
def decoder_col_reference(input_ids, encoder_output, mask_encoder, params):
    """Pure-JAX reference using the same math (no pallas_call, exact divide)."""
    bsz, slen = input_ids.shape
    klen = encoder_output.shape[2]
    seq = _build_seq(input_ids)
    x = (params['word_emb'][input_ids] + params['pos_emb'][seq]
         ).reshape(bsz * slen, D_MODEL)
    enc = jnp.transpose(encoder_output, (1, 0, 2, 3)).reshape(N_DEC, bsz * klen,
                                                              D_MODEL)
    masks = _build_mask_slab(input_ids, mask_encoder, bsz)[0]
    out = _forward(x, enc,
                   masks[:, 0:D_MODEL],
                   masks[:, D_MODEL:D_MODEL + bsz * slen],
                   masks[:, D_MODEL + bsz * slen:],
                   params['wslab'], approx=False)
    return out.reshape(bsz, slen, V_PAD)[:, :, :VOCAB]


# ------------------------------------ main --------------------------------------
if __name__ == "__main__":
    key = jax.random.PRNGKey(0)
    k_tok, k_enc, k_par = jax.random.split(key, 3)

    # token ids: first positions are real tokens, second sample has padding
    input_ids = jax.random.randint(k_tok, (B, SEQ), 1, VOCAB, dtype=jnp.int32)
    input_ids = input_ids.at[1, 6:].set(PAD_IDX)

    # one encoder output per decoder layer: (b, N_dec, enc_len, d_model)
    encoder_output = jax.random.normal(
        k_enc, (B, N_DEC, ENC_LEN, D_MODEL), jnp.float32)

    # encoder attention mask (True = masked/pad), shape (b, 1, 1, enc_len)
    mask_encoder = jnp.zeros((B, 1, 1, ENC_LEN), jnp.bool_)
    mask_encoder = mask_encoder.at[1, :, :, 6:].set(True)

    params = init_params(k_par)

    log_probs = decoder_col_forward(input_ids, encoder_output, mask_encoder, params)
    log_probs = jax.block_until_ready(log_probs)

    ref = decoder_col_reference(input_ids, encoder_output, mask_encoder, params)
    ref = jax.block_until_ready(ref)

    assert log_probs.shape == (B, SEQ, VOCAB)
    assert np.all(np.isfinite(np.asarray(log_probs)))
    np.testing.assert_allclose(np.asarray(log_probs), np.asarray(ref),
                               rtol=2e-3, atol=2e-3)
    print("KERNEL_OK")
</pallas_src>

<mosaic_0001>
module attributes {stable_mosaic.version = 11 : i64} {
  func.func @kernel(%arg0: i32, %arg1: memref<1x16x32xf32, #tpu.memory_space<vmem>>, %arg2: memref<1x2x16x32xf32, #tpu.memory_space<vmem>>, %arg3: memref<1x16x64xf32, #tpu.memory_space<vmem>>, %arg4: memref<384x128xf32, #tpu.memory_space<vmem>>, %arg5: memref<1x16x128xf32, #tpu.memory_space<vmem>>) attributes {dimension_semantics = [#tpu.dimension_semantics<parallel>], iteration_bounds = array<i64: 1>, scalar_prefetch = 0 : i64, scratch_operands = 0 : i64, tpu.core_type = #tpu.core_type<tc>, window_params = [{transform_indices = @transform_0, window_bounds = array<i64: 1, 16, 32>}, {transform_indices = @transform_1, window_bounds = array<i64: 1, 2, 16, 32>}, {transform_indices = @transform_2, window_bounds = array<i64: 1, 16, 64>}, {pipeline_mode = #tpu.pipeline_mode<synchronous>, transform_indices = @transform_3, window_bounds = array<i64: 384, 128>}, {transform_indices = @transform_4, window_bounds = array<i64: 1, 16, 128>}]} {
    %c0 = arith.constant 0 : index
    %c0_0 = arith.constant 0 : index
    %c0_1 = arith.constant 0 : index
    %0 = vector.load %arg3[%c0, %c0_0, %c0_1] : memref<1x16x64xf32, #tpu.memory_space<vmem>>, vector<1x16x64xf32>
    %1 = vector.shape_cast %0 : vector<1x16x64xf32> to vector<16x64xf32>
    %c0_2 = arith.constant 0 : index
    %c0_3 = arith.constant 0 : index
    %c0_4 = arith.constant 0 : index
    %2 = vector.load %arg1[%c0_2, %c0_3, %c0_4] : memref<1x16x32xf32, #tpu.memory_space<vmem>>, vector<1x16x32xf32>
    %3 = vector.shape_cast %2 : vector<1x16x32xf32> to vector<16x32xf32>
    %c0_5 = arith.constant 0 : index
    %c0_6 = arith.constant 0 : index
    %c0_7 = arith.constant 0 : index
    %c0_8 = arith.constant 0 : index
    %4 = vector.load %arg2[%c0_5, %c0_6, %c0_7, %c0_8] : memref<1x2x16x32xf32, #tpu.memory_space<vmem>>, vector<1x2x16x32xf32>
    %5 = vector.shape_cast %4 : vector<1x2x16x32xf32> to vector<2x16x32xf32>
    %6 = vector.extract_strided_slice %1 {offsets = [0, 0], sizes = [16, 32], strides = [1, 1]} : vector<16x64xf32> to vector<16x32xf32>
    %7 = vector.extract_strided_slice %1 {offsets = [0, 32], sizes = [16, 16], strides = [1, 1]} : vector<16x64xf32> to vector<16x16xf32>
    %8 = vector.extract_strided_slice %1 {offsets = [0, 48], sizes = [16, 16], strides = [1, 1]} : vector<16x64xf32> to vector<16x16xf32>
    %c0_9 = arith.constant 0 : index
    %c0_10 = arith.constant 0 : index
    %9 = vector.load %arg4[%c0_9, %c0_10] : memref<384x128xf32, #tpu.memory_space<vmem>>, vector<32x128xf32>
    %c32 = arith.constant 32 : index
    %c0_11 = arith.constant 0 : index
    %10 = vector.load %arg4[%c32, %c0_11] : memref<384x128xf32, #tpu.memory_space<vmem>>, vector<32x128xf32>
    %c160 = arith.constant 160 : index
    %c0_12 = arith.constant 0 : index
    %11 = vector.load %arg4[%c160, %c0_12] : memref<384x128xf32, #tpu.memory_space<vmem>>, vector<16x128xf32>
    %c192 = arith.constant 192 : index
    %c0_13 = arith.constant 0 : index
    %12 = vector.load %arg4[%c192, %c0_13] : memref<384x128xf32, #tpu.memory_space<vmem>>, vector<32x64xf32>
    %c224 = arith.constant 224 : index
    %c0_14 = arith.constant 0 : index
    %13 = vector.load %arg4[%c224, %c0_14] : memref<384x128xf32, #tpu.memory_space<vmem>>, vector<64x32xf32>
    %14 = vector.extract_strided_slice %9 {offsets = [0, 0], sizes = [32, 96], strides = [1, 1]} : vector<32x128xf32> to vector<32x96xf32>
    %15 = vector.extract_strided_slice %9 {offsets = [0, 96], sizes = [32, 32], strides = [1, 1]} : vector<32x128xf32> to vector<32x32xf32>
    %16 = vector.extract_strided_slice %10 {offsets = [0, 0], sizes = [32, 96], strides = [1, 1]} : vector<32x128xf32> to vector<32x96xf32>
    %17 = vector.extract_strided_slice %10 {offsets = [0, 96], sizes = [32, 32], strides = [1, 1]} : vector<32x128xf32> to vector<32x32xf32>
    %18 = vector.extract_strided_slice %11 {offsets = [0, 0], sizes = [1, 96], strides = [1, 1]} : vector<16x128xf32> to vector<1x96xf32>
    %19 = vector.extract_strided_slice %11 {offsets = [1, 0], sizes = [1, 96], strides = [1, 1]} : vector<16x128xf32> to vector<1x96xf32>
    %20 = vector.extract_strided_slice %11 {offsets = [2, 0], sizes = [1, 32], strides = [1, 1]} : vector<16x128xf32> to vector<1x32xf32>
    %21 = vector.extract_strided_slice %11 {offsets = [3, 0], sizes = [1, 32], strides = [1, 1]} : vector<16x128xf32> to vector<1x32xf32>
    %22 = vector.extract_strided_slice %11 {offsets = [4, 0], sizes = [1, 32], strides = [1, 1]} : vector<16x128xf32> to vector<1x32xf32>
    %23 = vector.extract_strided_slice %11 {offsets = [5, 0], sizes = [1, 32], strides = [1, 1]} : vector<16x128xf32> to vector<1x32xf32>
    %24 = vector.extract_strided_slice %11 {offsets = [6, 0], sizes = [1, 32], strides = [1, 1]} : vector<16x128xf32> to vector<1x32xf32>
    %25 = vector.extract_strided_slice %11 {offsets = [7, 0], sizes = [1, 32], strides = [1, 1]} : vector<16x128xf32> to vector<1x32xf32>
    %26 = vector.extract_strided_slice %11 {offsets = [8, 0], sizes = [1, 64], strides = [1, 1]} : vector<16x128xf32> to vector<1x64xf32>
    %27 = vector.extract_strided_slice %11 {offsets = [9, 0], sizes = [1, 32], strides = [1, 1]} : vector<16x128xf32> to vector<1x32xf32>
    %28 = vector.extract_strided_slice %11 {offsets = [10, 0], sizes = [1, 32], strides = [1, 1]} : vector<16x128xf32> to vector<1x32xf32>
    %29 = vector.extract_strided_slice %11 {offsets = [11, 0], sizes = [1, 32], strides = [1, 1]} : vector<16x128xf32> to vector<1x32xf32>
    %30 = arith.truncf %3 : vector<16x32xf32> to vector<16x32xbf16>
    %31 = arith.truncf %14 : vector<32x96xf32> to vector<32x96xbf16>
    %cst = arith.constant dense<0.000000e+00> : vector<16x96xf32>
    %32 = tpu.matmul %30, %31, %cst {dimension_numbers = #tpu.dot_dimension_numbers<[1], [0], [0], [1], [0, 0, 1, 1], [], []>} : vector<16x32xbf16>, vector<32x96xbf16>, vector<16x96xf32> -> vector<16x96xf32>
    %33 = vector.broadcast %18 : vector<1x96xf32> to vector<16x96xf32>
    %34 = arith.addf %32, %33 : vector<16x96xf32>
    %35 = vector.extract_strided_slice %34 {offsets = [0, 0], sizes = [16, 32], strides = [1, 1]} : vector<16x96xf32> to vector<16x32xf32>
    %36 = vector.extract_strided_slice %34 {offsets = [0, 32], sizes = [16, 32], strides = [1, 1]} : vector<16x96xf32> to vector<16x32xf32>
    %37 = vector.extract_strided_slice %34 {offsets = [0, 64], sizes = [16, 32], strides = [1, 1]} : vector<16x96xf32> to vector<16x32xf32>
    %38 = vector.extract_strided_slice %35 {offsets = [0, 0], sizes = [16, 8], strides = [1, 1]} : vector<16x32xf32> to vector<16x8xf32>
    %39 = vector.extract_strided_slice %35 {offsets = [0, 8], sizes = [16, 8], strides = [1, 1]} : vector<16x32xf32> to vector<16x8xf32>
    %40 = vector.extract_strided_slice %35 {offsets = [0, 16], sizes = [16, 8], strides = [1, 1]} : vector<16x32xf32> to vector<16x8xf32>
    %41 = vector.extract_strided_slice %35 {offsets = [0, 24], sizes = [16, 8], strides = [1, 1]} : vector<16x32xf32> to vector<16x8xf32>
    %42 = vector.shape_cast %38 : vector<16x8xf32> to vector<1x16x8xf32>
    %43 = vector.shape_cast %39 : vector<16x8xf32> to vector<1x16x8xf32>
    %44 = vector.shape_cast %40 : vector<16x8xf32> to vector<1x16x8xf32>
    %45 = vector.shape_cast %41 : vector<16x8xf32> to vector<1x16x8xf32>
    %46 = tpu.concatenate %42, %43, %44, %45 in 0 : vector<1x16x8xf32>, vector<1x16x8xf32>, vector<1x16x8xf32>, vector<1x16x8xf32> -> vector<4x16x8xf32>
    %47 = vector.extract_strided_slice %36 {offsets = [0, 0], sizes = [16, 8], strides = [1, 1]} : vector<16x32xf32> to vector<16x8xf32>
    %48 = vector.extract_strided_slice %36 {offsets = [0, 8], sizes = [16, 8], strides = [1, 1]} : vector<16x32xf32> to vector<16x8xf32>
    %49 = vector.extract_strided_slice %36 {offsets = [0, 16], sizes = [16, 8], strides = [1, 1]} : vector<16x32xf32> to vector<16x8xf32>
    %50 = vector.extract_strided_slice %36 {offsets = [0, 24], sizes = [16, 8], strides = [1, 1]} : vector<16x32xf32> to vector<16x8xf32>
    %51 = vector.shape_cast %47 : vector<16x8xf32> to vector<1x16x8xf32>
    %52 = vector.shape_cast %48 : vector<16x8xf32> to vector<1x16x8xf32>
    %53 = vector.shape_cast %49 : vector<16x8xf32> to vector<1x16x8xf32>
    %54 = vector.shape_cast %50 : vector<16x8xf32> to vector<1x16x8xf32>
    %55 = tpu.concatenate %51, %52, %53, %54 in 0 : vector<1x16x8xf32>, vector<1x16x8xf32>, vector<1x16x8xf32>, vector<1x16x8xf32> -> vector<4x16x8xf32>
    %56 = vector.extract_strided_slice %37 {offsets = [0, 0], sizes = [16, 8], strides = [1, 1]} : vector<16x32xf32> to vector<16x8xf32>
    %57 = vector.extract_strided_slice %37 {offsets = [0, 8], sizes = [16, 8], strides = [1, 1]} : vector<16x32xf32> to vector<16x8xf32>
    %58 = vector.extract_strided_slice %37 {offsets = [0, 16], sizes = [16, 8], strides = [1, 1]} : vector<16x32xf32> to vector<16x8xf32>
    %59 = vector.extract_strided_slice %37 {offsets = [0, 24], sizes = [16, 8], strides = [1, 1]} : vector<16x32xf32> to vector<16x8xf32>
    %60 = vector.shape_cast %56 : vector<16x8xf32> to vector<1x16x8xf32>
    %61 = vector.shape_cast %57 : vector<16x8xf32> to vector<1x16x8xf32>
    %62 = vector.shape_cast %58 : vector<16x8xf32> to vector<1x16x8xf32>
    %63 = vector.shape_cast %59 : vector<16x8xf32> to vector<1x16x8xf32>
    %64 = tpu.concatenate %60, %61, %62, %63 in 0 : vector<1x16x8xf32>, vector<1x16x8xf32>, vector<1x16x8xf32>, vector<1x16x8xf32> -> vector<4x16x8xf32>
    %65 = arith.truncf %46 : vector<4x16x8xf32> to vector<4x16x8xbf16>
    %66 = arith.truncf %55 : vector<4x16x8xf32> to vector<4x16x8xbf16>
    "tpu.trace_start"() <{level = 10 : i32, message = "hqd,hkd->hqk"}> : () -> ()
    %cst_15 = arith.constant dense<0.000000e+00> : vector<4x16x16xf32>
    %67 = tpu.matmul %65, %66, %cst_15 {dimension_numbers = #tpu.dot_dimension_numbers<[2], [2], [1], [1], [0, 0, 0, 1, 1, 1], [0], [0]>} : vector<4x16x8xbf16>, vector<4x16x8xbf16>, vector<4x16x16xf32> -> vector<4x16x16xf32>
    "tpu.trace_stop"() : () -> ()
    %cst_16 = arith.constant 0.353553385 : f32
    %68 = vector.broadcast %cst_16 : f32 to vector<4x16x16xf32>
    %69 = arith.mulf %67, %68 : vector<4x16x16xf32>
    %70 = vector.shape_cast %7 : vector<16x16xf32> to vector<1x16x16xf32>
    %71 = vector.broadcast %70 : vector<1x16x16xf32> to vector<4x16x16xf32>
    %72 = arith.addf %69, %71 : vector<4x16x16xf32>
    %cst_17 = arith.constant dense<0xFF800000> : vector<4x16xf32>
    %73 = vector.multi_reduction <maximumf>, %72, %cst_17 [2] : vector<4x16x16xf32> to vector<4x16xf32>
    %74 = vector.shape_cast %73 : vector<4x16xf32> to vector<4x16x1xf32>
    %75 = vector.broadcast %74 : vector<4x16x1xf32> to vector<4x16x16xf32>
    %76 = arith.subf %72, %75 : vector<4x16x16xf32>
    %77 = math.exp %76 : vector<4x16x16xf32>
    %cst_18 = arith.constant dense<0.000000e+00> : vector<4x16xf32>
    %78 = vector.multi_reduction <add>, %77, %cst_18 [2] : vector<4x16x16xf32> to vector<4x16xf32>
    %79 = vector.shape_cast %78 : vector<4x16xf32> to vector<4x16x1xf32>
    %80 = tpu.reciprocal %79 {approx = true} : vector<4x16x1xf32> -> vector<4x16x1xf32>
    %81 = vector.broadcast %80 : vector<4x16x1xf32> to vector<4x16x16xf32>
    %82 = arith.mulf %77, %81 : vector<4x16x16xf32>
    %83 = arith.truncf %82 : vector<4x16x16xf32> to vector<4x16x16xbf16>
    %84 = arith.truncf %64 : vector<4x16x8xf32> to vector<4x16x8xbf16>
    "tpu.trace_start"() <{level = 10 : i32, message = "hqk,hkd->hqd"}> : () -> ()
    %cst_19 = arith.constant dense<0.000000e+00> : vector<4x16x8xf32>
    %85 = tpu.matmul %83, %84, %cst_19 {dimension_numbers = #tpu.dot_dimension_numbers<[2], [1], [1], [2], [0, 0, 0, 1, 1, 2], [0], [0]>} : vector<4x16x16xbf16>, vector<4x16x8xbf16>, vector<4x16x8xf32> -> vector<4x16x8xf32>
    "tpu.trace_stop"() : () -> ()
    %86 = vector.extract_strided_slice %85 {offsets = [0, 0, 0], sizes = [1, 16, 8], strides = [1, 1, 1]} : vector<4x16x8xf32> to vector<1x16x8xf32>
    %87 = vector.shape_cast %86 : vector<1x16x8xf32> to vector<16x8xf32>
    %88 = vector.extract_strided_slice %85 {offsets = [1, 0, 0], sizes = [1, 16, 8], strides = [1, 1, 1]} : vector<4x16x8xf32> to vector<1x16x8xf32>
    %89 = vector.shape_cast %88 : vector<1x16x8xf32> to vector<16x8xf32>
    %90 = vector.extract_strided_slice %85 {offsets = [2, 0, 0], sizes = [1, 16, 8], strides = [1, 1, 1]} : vector<4x16x8xf32> to vector<1x16x8xf32>
    %91 = vector.shape_cast %90 : vector<1x16x8xf32> to vector<16x8xf32>
    %92 = vector.extract_strided_slice %85 {offsets = [3, 0, 0], sizes = [1, 16, 8], strides = [1, 1, 1]} : vector<4x16x8xf32> to vector<1x16x8xf32>
    %93 = vector.shape_cast %92 : vector<1x16x8xf32> to vector<16x8xf32>
    %94 = tpu.concatenate %87, %89, %91, %93 in 1 : vector<16x8xf32>, vector<16x8xf32>, vector<16x8xf32>, vector<16x8xf32> -> vector<16x32xf32>
    %95 = arith.truncf %94 : vector<16x32xf32> to vector<16x32xbf16>
    %96 = arith.truncf %15 : vector<32x32xf32> to vector<32x32xbf16>
    %cst_20 = arith.constant dense<0.000000e+00> : vector<16x32xf32>
    %97 = tpu.matmul %95, %96, %cst_20 {dimension_numbers = #tpu.dot_dimension_numbers<[1], [0], [0], [1], [0, 0, 1, 1], [], []>} : vector<16x32xbf16>, vector<32x32xbf16>, vector<16x32xf32> -> vector<16x32xf32>
    %98 = vector.broadcast %20 : vector<1x32xf32> to vector<16x32xf32>
    %99 = arith.addf %97, %98 : vector<16x32xf32>
    %100 = arith.addf %3, %99 : vector<16x32xf32>
    %cst_21 = arith.constant dense<0.000000e+00> : vector<16xf32>
    %101 = vector.multi_reduction <add>, %100, %cst_21 [1] : vector<16x32xf32> to vector<16xf32>
    %102 = vector.shape_cast %101 : vector<16xf32> to vector<16x1xf32>
    %cst_22 = arith.constant 3.200000e+01 : f32
    %103 = vector.broadcast %cst_22 : f32 to vector<16x1xf32>
    %104 = arith.divf %102, %103 : vector<16x1xf32>
    %105 = vector.broadcast %104 : vector<16x1xf32> to vector<16x32xf32>
    %106 = arith.subf %100, %105 : vector<16x32xf32>
    %107 = arith.mulf %106, %106 : vector<16x32xf32>
    %cst_23 = arith.constant dense<0.000000e+00> : vector<16xf32>
    %108 = vector.multi_reduction <add>, %107, %cst_23 [1] : vector<16x32xf32> to vector<16xf32>
    %109 = vector.shape_cast %108 : vector<16xf32> to vector<16x1xf32>
    %cst_24 = arith.constant 3.200000e+01 : f32
    %110 = vector.broadcast %cst_24 : f32 to vector<16x1xf32>
    %111 = arith.divf %109, %110 : vector<16x1xf32>
    %112 = vector.broadcast %104 : vector<16x1xf32> to vector<16x32xf32>
    %113 = arith.subf %100, %112 : vector<16x32xf32>
    %cst_25 = arith.constant 9.99999974E-6 : f32
    %114 = vector.broadcast %cst_25 : f32 to vector<16x1xf32>
    %115 = arith.addf %111, %114 : vector<16x1xf32>
    %116 = math.rsqrt %115 : vector<16x1xf32>
    %117 = vector.broadcast %116 : vector<16x1xf32> to vector<16x32xf32>
    %118 = arith.mulf %113, %117 : vector<16x32xf32>
    %119 = vector.broadcast %21 : vector<1x32xf32> to vector<16x32xf32>
    %120 = arith.mulf %118, %119 : vector<16x32xf32>
    %121 = vector.broadcast %22 : vector<1x32xf32> to vector<16x32xf32>
    %122 = arith.addf %120, %121 : vector<16x32xf32>
    %123 = arith.mulf %122, %6 : vector<16x32xf32>
    %124 = vector.extract_strided_slice %5 {offsets = [0, 0, 0], sizes = [1, 16, 32], strides = [1, 1, 1]} : vector<2x16x32xf32> to vector<1x16x32xf32>
    %125 = vector.shape_cast %124 : vector<1x16x32xf32> to vector<16x32xf32>
    %126 = vector.extract_strided_slice %16 {offsets = [0, 0], sizes = [32, 32], strides = [1, 1]} : vector<32x96xf32> to vector<32x32xf32>
    %127 = arith.truncf %123 : vector<16x32xf32> to vector<16x32xbf16>
    %128 = arith.truncf %126 : vector<32x32xf32> to vector<32x32xbf16>
    %cst_26 = arith.constant dense<0.000000e+00> : vector<16x32xf32>
    %129 = tpu.matmul %127, %128, %cst_26 {dimension_numbers = #tpu.dot_dimension_numbers<[1], [0], [0], [1], [0, 0, 1, 1], [], []>} : vector<16x32xbf16>, vector<32x32xbf16>, vector<16x32xf32> -> vector<16x32xf32>
    %130 = vector.extract_strided_slice %19 {offsets = [0, 0], sizes = [1, 32], strides = [1, 1]} : vector<1x96xf32> to vector<1x32xf32>
    %131 = vector.broadcast %130 : vector<1x32xf32> to vector<16x32xf32>
    %132 = arith.addf %129, %131 : vector<16x32xf32>
    %133 = vector.extract_strided_slice %16 {offsets = [0, 32], sizes = [32, 64], strides = [1, 1]} : vector<32x96xf32> to vector<32x64xf32>
    %134 = arith.truncf %125 : vector<16x32xf32> to vector<16x32xbf16>
    %135 = arith.truncf %133 : vector<32x64xf32> to vector<32x64xbf16>
    %cst_27 = arith.constant dense<0.000000e+00> : vector<16x64xf32>
    %136 = tpu.matmul %134, %135, %cst_27 {dimension_numbers = #tpu.dot_dimension_numbers<[1], [0], [0], [1], [0, 0, 1, 1], [], []>} : vector<16x32xbf16>, vector<32x64xbf16>, vector<16x64xf32> -> vector<16x64xf32>
    %137 = vector.extract_strided_slice %19 {offsets = [0, 32], sizes = [1, 64], strides = [1, 1]} : vector<1x96xf32> to vector<1x64xf32>
    %138 = vector.broadcast %137 : vector<1x64xf32> to vector<16x64xf32>
    %139 = arith.addf %136, %138 : vector<16x64xf32>
    %140 = vector.extract_strided_slice %139 {offsets = [0, 0], sizes = [16, 32], strides = [1, 1]} : vector<16x64xf32> to vector<16x32xf32>
    %141 = vector.extract_strided_slice %139 {offsets = [0, 32], sizes = [16, 32], strides = [1, 1]} : vector<16x64xf32> to vector<16x32xf32>
    %142 = vector.extract_strided_slice %132 {offsets = [0, 0], sizes = [16, 8], strides = [1, 1]} : vector<16x32xf32> to vector<16x8xf32>
    %143 = vector.extract_strided_slice %132 {offsets = [0, 8], sizes = [16, 8], strides = [1, 1]} : vector<16x32xf32> to vector<16x8xf32>
    %144 = vector.extract_strided_slice %132 {offsets = [0, 16], sizes = [16, 8], strides = [1, 1]} : vector<16x32xf32> to vector<16x8xf32>
    %145 = vector.extract_strided_slice %132 {offsets = [0, 24], sizes = [16, 8], strides = [1, 1]} : vector<16x32xf32> to vector<16x8xf32>
    %146 = vector.shape_cast %142 : vector<16x8xf32> to vector<1x16x8xf32>
    %147 = vector.shape_cast %143 : vector<16x8xf32> to vector<1x16x8xf32>
    %148 = vector.shape_cast %144 : vector<16x8xf32> to vector<1x16x8xf32>
    %149 = vector.shape_cast %145 : vector<16x8xf32> to vector<1x16x8xf32>
    %150 = tpu.concatenate %146, %147, %148, %149 in 0 : vector<1x16x8xf32>, vector<1x16x8xf32>, vector<1x16x8xf32>, vector<1x16x8xf32> -> vector<4x16x8xf32>
    %151 = vector.extract_strided_slice %140 {offsets = [0, 0], sizes = [16, 8], strides = [1, 1]} : vector<16x32xf32> to vector<16x8xf32>
    %152 = vector.extract_strided_slice %140 {offsets = [0, 8], sizes = [16, 8], strides = [1, 1]} : vector<16x32xf32> to vector<16x8xf32>
    %153 = vector.extract_strided_slice %140 {offsets = [0, 16], sizes = [16, 8], strides = [1, 1]} : vector<16x32xf32> to vector<16x8xf32>
    %154 = vector.extract_strided_slice %140 {offsets = [0, 24], sizes = [16, 8], strides = [1, 1]} : vector<16x32xf32> to vector<16x8xf32>
    %155 = vector.shape_cast %151 : vector<16x8xf32> to vector<1x16x8xf32>
    %156 = vector.shape_cast %152 : vector<16x8xf32> to vector<1x16x8xf32>
    %157 = vector.shape_cast %153 : vector<16x8xf32> to vector<1x16x8xf32>
    %158 = vector.shape_cast %154 : vector<16x8xf32> to vector<1x16x8xf32>
    %159 = tpu.concatenate %155, %156, %157, %158 in 0 : vector<1x16x8xf32>, vector<1x16x8xf32>, vector<1x16x8xf32>, vector<1x16x8xf32> -> vector<4x16x8xf32>
    %160 = vector.extract_strided_slice %141 {offsets = [0, 0], sizes = [16, 8], strides = [1, 1]} : vector<16x32xf32> to vector<16x8xf32>
    %161 = vector.extract_strided_slice %141 {offsets = [0, 8], sizes = [16, 8], strides = [1, 1]} : vector<16x32xf32> to vector<16x8xf32>
    %162 = vector.extract_strided_slice %141 {offsets = [0, 16], sizes = [16, 8], strides = [1, 1]} : vector<16x32xf32> to vector<16x8xf32>
    %163 = vector.extract_strided_slice %141 {offsets = [0, 24], sizes = [16, 8], strides = [1, 1]} : vector<16x32xf32> to vector<16x8xf32>
    %164 = vector.shape_cast %160 : vector<16x8xf32> to vector<1x16x8xf32>
    %165 = vector.shape_cast %161 : vector<16x8xf32> to vector<1x16x8xf32>
    %166 = vector.shape_cast %162 : vector<16x8xf32> to vector<1x16x8xf32>
    %167 = vector.shape_cast %163 : vector<16x8xf32> to vector<1x16x8xf32>
    %168 = tpu.concatenate %164, %165, %166, %167 in 0 : vector<1x16x8xf32>, vector<1x16x8xf32>, vector<1x16x8xf32>, vector<1x16x8xf32> -> vector<4x16x8xf32>
    %169 = arith.truncf %150 : vector<4x16x8xf32> to vector<4x16x8xbf16>
    %170 = arith.truncf %159 : vector<4x16x8xf32> to vector<4x16x8xbf16>
    "tpu.trace_start"() <{level = 10 : i32, message = "hqd,hkd->hqk"}> : () -> ()
    %cst_28 = arith.constant dense<0.000000e+00> : vector<4x16x16xf32>
    %171 = tpu.matmul %169, %170, %cst_28 {dimension_numbers = #tpu.dot_dimension_numbers<[2], [2], [1], [1], [0, 0, 0, 1, 1, 1], [0], [0]>} : vector<4x16x8xbf16>, vector<4x16x8xbf16>, vector<4x16x16xf32> -> vector<4x16x16xf32>
    "tpu.trace_stop"() : () -> ()
    %cst_29 = arith.constant 0.353553385 : f32
    %172 = vector.broadcast %cst_29 : f32 to vector<4x16x16xf32>
    %173 = arith.mulf %171, %172 : vector<4x16x16xf32>
    %174 = vector.shape_cast %8 : vector<16x16xf32> to vector<1x16x16xf32>
    %175 = vector.broadcast %174 : vector<1x16x16xf32> to vector<4x16x16xf32>
    %176 = arith.addf %173, %175 : vector<4x16x16xf32>
    %cst_30 = arith.constant dense<0xFF800000> : vector<4x16xf32>
    %177 = vector.multi_reduction <maximumf>, %176, %cst_30 [2] : vector<4x16x16xf32> to vector<4x16xf32>
    %178 = vector.shape_cast %177 : vector<4x16xf32> to vector<4x16x1xf32>
    %179 = vector.broadcast %178 : vector<4x16x1xf32> to vector<4x16x16xf32>
    %180 = arith.subf %176, %179 : vector<4x16x16xf32>
    %181 = math.exp %180 : vector<4x16x16xf32>
    %cst_31 = arith.constant dense<0.000000e+00> : vector<4x16xf32>
    %182 = vector.multi_reduction <add>, %181, %cst_31 [2] : vector<4x16x16xf32> to vector<4x16xf32>
    %183 = vector.shape_cast %182 : vector<4x16xf32> to vector<4x16x1xf32>
    %184 = tpu.reciprocal %183 {approx = true} : vector<4x16x1xf32> -> vector<4x16x1xf32>
    %185 = vector.broadcast %184 : vector<4x16x1xf32> to vector<4x16x16xf32>
    %186 = arith.mulf %181, %185 : vector<4x16x16xf32>
    %187 = arith.truncf %186 : vector<4x16x16xf32> to vector<4x16x16xbf16>
    %188 = arith.truncf %168 : vector<4x16x8xf32> to vector<4x16x8xbf16>
    "tpu.trace_start"() <{level = 10 : i32, message = "hqk,hkd->hqd"}> : () -> ()
    %cst_32 = arith.constant dense<0.000000e+00> : vector<4x16x8xf32>
    %189 = tpu.matmul %187, %188, %cst_32 {dimension_numbers = #tpu.dot_dimension_numbers<[2], [1], [1], [2], [0, 0, 0, 1, 1, 2], [0], [0]>} : vector<4x16x16xbf16>, vector<4x16x8xbf16>, vector<4x16x8xf32> -> vector<4x16x8xf32>
    "tpu.trace_stop"() : () -> ()
    %190 = vector.extract_strided_slice %189 {offsets = [0, 0, 0], sizes = [1, 16, 8], strides = [1, 1, 1]} : vector<4x16x8xf32> to vector<1x16x8xf32>
    %191 = vector.shape_cast %190 : vector<1x16x8xf32> to vector<16x8xf32>
    %192 = vector.extract_strided_slice %189 {offsets = [1, 0, 0], sizes = [1, 16, 8], strides = [1, 1, 1]} : vector<4x16x8xf32> to vector<1x16x8xf32>
    %193 = vector.shape_cast %192 : vector<1x16x8xf32> to vector<16x8xf32>
    %194 = vector.extract_strided_slice %189 {offsets = [2, 0, 0], sizes = [1, 16, 8], strides = [1, 1, 1]} : vector<4x16x8xf32> to vector<1x16x8xf32>
    %195 = vector.shape_cast %194 : vector<1x16x8xf32> to vector<16x8xf32>
    %196 = vector.extract_strided_slice %189 {offsets = [3, 0, 0], sizes = [1, 16, 8], strides = [1, 1, 1]} : vector<4x16x8xf32> to vector<1x16x8xf32>
    %197 = vector.shape_cast %196 : vector<1x16x8xf32> to vector<16x8xf32>
    %198 = tpu.concatenate %191, %193, %195, %197 in 1 : vector<16x8xf32>, vector<16x8xf32>, vector<16x8xf32>, vector<16x8xf32> -> vector<16x32xf32>
    %199 = arith.truncf %198 : vector<16x32xf32> to vector<16x32xbf16>
    %200 = arith.truncf %17 : vector<32x32xf32> to vector<32x32xbf16>
    %cst_33 = arith.constant dense<0.000000e+00> : vector<16x32xf32>
    %201 = tpu.matmul %199, %200, %cst_33 {dimension_numbers = #tpu.dot_dimension_numbers<[1], [0], [0], [1], [0, 0, 1, 1], [], []>} : vector<16x32xbf16>, vector<32x32xbf16>, vector<16x32xf32> -> vector<16x32xf32>
    %202 = vector.broadcast %23 : vector<1x32xf32> to vector<16x32xf32>
    %203 = arith.addf %201, %202 : vector<16x32xf32>
    %204 = arith.addf %123, %203 : vector<16x32xf32>
    %cst_34 = arith.constant dense<0.000000e+00> : vector<16xf32>
    %205 = vector.multi_reduction <add>, %204, %cst_34 [1] : vector<16x32xf32> to vector<16xf32>
    %206 = vector.shape_cast %205 : vector<16xf32> to vector<16x1xf32>
    %cst_35 = arith.constant 3.200000e+01 : f32
    %207 = vector.broadcast %cst_35 : f32 to vector<16x1xf32>
    %208 = arith.divf %206, %207 : vector<16x1xf32>
    %209 = vector.broadcast %208 : vector<16x1xf32> to vector<16x32xf32>
    %210 = arith.subf %204, %209 : vector<16x32xf32>
    %211 = arith.mulf %210, %210 : vector<16x32xf32>
    %cst_36 = arith.constant dense<0.000000e+00> : vector<16xf32>
    %212 = vector.multi_reduction <add>, %211, %cst_36 [1] : vector<16x32xf32> to vector<16xf32>
    %213 = vector.shape_cast %212 : vector<16xf32> to vector<16x1xf32>
    %cst_37 = arith.constant 3.200000e+01 : f32
    %214 = vector.broadcast %cst_37 : f32 to vector<16x1xf32>
    %215 = arith.divf %213, %214 : vector<16x1xf32>
    %216 = vector.broadcast %208 : vector<16x1xf32> to vector<16x32xf32>
    %217 = arith.subf %204, %216 : vector<16x32xf32>
    %cst_38 = arith.constant 9.99999974E-6 : f32
    %218 = vector.broadcast %cst_38 : f32 to vector<16x1xf32>
    %219 = arith.addf %215, %218 : vector<16x1xf32>
    %220 = math.rsqrt %219 : vector<16x1xf32>
    %221 = vector.broadcast %220 : vector<16x1xf32> to vector<16x32xf32>
    %222 = arith.mulf %217, %221 : vector<16x32xf32>
    %223 = vector.broadcast %24 : vector<1x32xf32> to vector<16x32xf32>
    %224 = arith.mulf %222, %223 : vector<16x32xf32>
    %225 = vector.broadcast %25 : vector<1x32xf32> to vector<16x32xf32>
    %226 = arith.addf %224, %225 : vector<16x32xf32>
    %227 = arith.mulf %226, %6 : vector<16x32xf32>
    %228 = arith.truncf %227 : vector<16x32xf32> to vector<16x32xbf16>
    %229 = arith.truncf %12 : vector<32x64xf32> to vector<32x64xbf16>
    %cst_39 = arith.constant dense<0.000000e+00> : vector<16x64xf32>
    %230 = tpu.matmul %228, %229, %cst_39 {dimension_numbers = #tpu.dot_dimension_numbers<[1], [0], [0], [1], [0, 0, 1, 1], [], []>} : vector<16x32xbf16>, vector<32x64xbf16>, vector<16x64xf32> -> vector<16x64xf32>
    %231 = vector.broadcast %26 : vector<1x64xf32> to vector<16x64xf32>
    %232 = arith.addf %230, %231 : vector<16x64xf32>
    %cst_40 = arith.constant 0.000000e+00 : f32
    %233 = vector.broadcast %cst_40 : f32 to vector<16x64xf32>
    %234 = arith.maximumf %232, %233 : vector<16x64xf32>
    %235 = arith.truncf %234 : vector<16x64xf32> to vector<16x64xbf16>
    %236 = arith.truncf %13 : vector<64x32xf32> to vector<64x32xbf16>
    %cst_41 = arith.constant dense<0.000000e+00> : vector<16x32xf32>
    %237 = tpu.matmul %235, %236, %cst_41 {dimension_numbers = #tpu.dot_dimension_numbers<[1], [0], [0], [1], [0, 0, 1, 1], [], []>} : vector<16x64xbf16>, vector<64x32xbf16>, vector<16x32xf32> -> vector<16x32xf32>
    %238 = vector.broadcast %27 : vector<1x32xf32> to vector<16x32xf32>
    %239 = arith.addf %237, %238 : vector<16x32xf32>
    %240 = arith.addf %227, %239 : vector<16x32xf32>
    %cst_42 = arith.constant dense<0.000000e+00> : vector<16xf32>
    %241 = vector.multi_reduction <add>, %240, %cst_42 [1] : vector<16x32xf32> to vector<16xf32>
    %242 = vector.shape_cast %241 : vector<16xf32> to vector<16x1xf32>
    %cst_43 = arith.constant 3.200000e+01 : f32
    %243 = vector.broadcast %cst_43 : f32 to vector<16x1xf32>
    %244 = arith.divf %242, %243 : vector<16x1xf32>
    %245 = vector.broadcast %244 : vector<16x1xf32> to vector<16x32xf32>
    %246 = arith.subf %240, %245 : vector<16x32xf32>
    %247 = arith.mulf %246, %246 : vector<16x32xf32>
    %cst_44 = arith.constant dense<0.000000e+00> : vector<16xf32>
    %248 = vector.multi_reduction <add>, %247, %cst_44 [1] : vector<16x32xf32> to vector<16xf32>
    %249 = vector.shape_cast %248 : vector<16xf32> to vector<16x1xf32>
    %cst_45 = arith.constant 3.200000e+01 : f32
    %250 = vector.broadcast %cst_45 : f32 to vector<16x1xf32>
    %251 = arith.divf %249, %250 : vector<16x1xf32>
    %252 = vector.broadcast %244 : vector<16x1xf32> to vector<16x32xf32>
    %253 = arith.subf %240, %252 : vector<16x32xf32>
    %cst_46 = arith.constant 9.99999974E-6 : f32
    %254 = vector.broadcast %cst_46 : f32 to vector<16x1xf32>
    %255 = arith.addf %251, %254 : vector<16x1xf32>
    %256 = math.rsqrt %255 : vector<16x1xf32>
    %257 = vector.broadcast %256 : vector<16x1xf32> to vector<16x32xf32>
    %258 = arith.mulf %253, %257 : vector<16x32xf32>
    %259 = vector.broadcast %28 : vector<1x32xf32> to vector<16x32xf32>
    %260 = arith.mulf %258, %259 : vector<16x32xf32>
    %261 = vector.broadcast %29 : vector<1x32xf32> to vector<16x32xf32>
    %262 = arith.addf %260, %261 : vector<16x32xf32>
    %263 = arith.mulf %262, %6 : vector<16x32xf32>
    %c64 = arith.constant 64 : index
    %c0_47 = arith.constant 0 : index
    %264 = vector.load %arg4[%c64, %c0_47] : memref<384x128xf32, #tpu.memory_space<vmem>>, vector<32x128xf32>
    %c96 = arith.constant 96 : index
    %c0_48 = arith.constant 0 : index
    %265 = vector.load %arg4[%c96, %c0_48] : memref<384x128xf32, #tpu.memory_space<vmem>>, vector<32x128xf32>
    %c176 = arith.constant 176 : index
    %c0_49 = arith.constant 0 : index
    %266 = vector.load %arg4[%c176, %c0_49] : memref<384x128xf32, #tpu.memory_space<vmem>>, vector<16x128xf32>
    %c288 = arith.constant 288 : index
    %c0_50 = arith.constant 0 : index
    %267 = vector.load %arg4[%c288, %c0_50] : memref<384x128xf32, #tpu.memory_space<vmem>>, vector<32x64xf32>
    %c320 = arith.constant 320 : index
    %c0_51 = arith.constant 0 : index
    %268 = vector.load %arg4[%c320, %c0_51] : memref<384x128xf32, #tpu.memory_space<vmem>>, vector<64x32xf32>
    %269 = vector.extract_strided_slice %264 {offsets = [0, 0], sizes = [32, 96], strides = [1, 1]} : vector<32x128xf32> to vector<32x96xf32>
    %270 = vector.extract_strided_slice %264 {offsets = [0, 96], sizes = [32, 32], strides = [1, 1]} : vector<32x128xf32> to vector<32x32xf32>
    %271 = vector.extract_strided_slice %265 {offsets = [0, 0], sizes = [32, 96], strides = [1, 1]} : vector<32x128xf32> to vector<32x96xf32>
    %272 = vector.extract_strided_slice %265 {offsets = [0, 96], sizes = [32, 32], strides = [1, 1]} : vector<32x128xf32> to vector<32x32xf32>
    %273 = vector.extract_strided_slice %266 {offsets = [0, 0], sizes = [1, 96], strides = [1, 1]} : vector<16x128xf32> to vector<1x96xf32>
    %274 = vector.extract_strided_slice %266 {offsets = [1, 0], sizes = [1, 96], strides = [1, 1]} : vector<16x128xf32> to vector<1x96xf32>
    %275 = vector.extract_strided_slice %266 {offsets = [2, 0], sizes = [1, 32], strides = [1, 1]} : vector<16x128xf32> to vector<1x32xf32>
    %276 = vector.extract_strided_slice %266 {offsets = [3, 0], sizes = [1, 32], strides = [1, 1]} : vector<16x128xf32> to vector<1x32xf32>
    %277 = vector.extract_strided_slice %266 {offsets = [4, 0], sizes = [1, 32], strides = [1, 1]} : vector<16x128xf32> to vector<1x32xf32>
    %278 = vector.extract_strided_slice %266 {offsets = [5, 0], sizes = [1, 32], strides = [1, 1]} : vector<16x128xf32> to vector<1x32xf32>
    %279 = vector.extract_strided_slice %266 {offsets = [6, 0], sizes = [1, 32], strides = [1, 1]} : vector<16x128xf32> to vector<1x32xf32>
    %280 = vector.extract_strided_slice %266 {offsets = [7, 0], sizes = [1, 32], strides = [1, 1]} : vector<16x128xf32> to vector<1x32xf32>
    %281 = vector.extract_strided_slice %266 {offsets = [8, 0], sizes = [1, 64], strides = [1, 1]} : vector<16x128xf32> to vector<1x64xf32>
    %282 = vector.extract_strided_slice %266 {offsets = [9, 0], sizes = [1, 32], strides = [1, 1]} : vector<16x128xf32> to vector<1x32xf32>
    %283 = vector.extract_strided_slice %266 {offsets = [10, 0], sizes = [1, 32], strides = [1, 1]} : vector<16x128xf32> to vector<1x32xf32>
    %284 = vector.extract_strided_slice %266 {offsets = [11, 0], sizes = [1, 32], strides = [1, 1]} : vector<16x128xf32> to vector<1x32xf32>
    %285 = arith.truncf %263 : vector<16x32xf32> to vector<16x32xbf16>
    %286 = arith.truncf %269 : vector<32x96xf32> to vector<32x96xbf16>
    %cst_52 = arith.constant dense<0.000000e+00> : vector<16x96xf32>
    %287 = tpu.matmul %285, %286, %cst_52 {dimension_numbers = #tpu.dot_dimension_numbers<[1], [0], [0], [1], [0, 0, 1, 1], [], []>} : vector<16x32xbf16>, vector<32x96xbf16>, vector<16x96xf32> -> vector<16x96xf32>
    %288 = vector.broadcast %273 : vector<1x96xf32> to vector<16x96xf32>
    %289 = arith.addf %287, %288 : vector<16x96xf32>
    %290 = vector.extract_strided_slice %289 {offsets = [0, 0], sizes = [16, 32], strides = [1, 1]} : vector<16x96xf32> to vector<16x32xf32>
    %291 = vector.extract_strided_slice %289 {offsets = [0, 32], sizes = [16, 32], strides = [1, 1]} : vector<16x96xf32> to vector<16x32xf32>
    %292 = vector.extract_strided_slice %289 {offsets = [0, 64], sizes = [16, 32], strides = [1, 1]} : vector<16x96xf32> to vector<16x32xf32>
    %293 = vector.extract_strided_slice %290 {offsets = [0, 0], sizes = [16, 8], strides = [1, 1]} : vector<16x32xf32> to vector<16x8xf32>
    %294 = vector.extract_strided_slice %290 {offsets = [0, 8], sizes = [16, 8], strides = [1, 1]} : vector<16x32xf32> to vector<16x8xf32>
    %295 = vector.extract_strided_slice %290 {offsets = [0, 16], sizes = [16, 8], strides = [1, 1]} : vector<16x32xf32> to vector<16x8xf32>
    %296 = vector.extract_strided_slice %290 {offsets = [0, 24], sizes = [16, 8], strides = [1, 1]} : vector<16x32xf32> to vector<16x8xf32>
    %297 = vector.shape_cast %293 : vector<16x8xf32> to vector<1x16x8xf32>
    %298 = vector.shape_cast %294 : vector<16x8xf32> to vector<1x16x8xf32>
    %299 = vector.shape_cast %295 : vector<16x8xf32> to vector<1x16x8xf32>
    %300 = vector.shape_cast %296 : vector<16x8xf32> to vector<1x16x8xf32>
    %301 = tpu.concatenate %297, %298, %299, %300 in 0 : vector<1x16x8xf32>, vector<1x16x8xf32>, vector<1x16x8xf32>, vector<1x16x8xf32> -> vector<4x16x8xf32>
    %302 = vector.extract_strided_slice %291 {offsets = [0, 0], sizes = [16, 8], strides = [1, 1]} : vector<16x32xf32> to vector<16x8xf32>
    %303 = vector.extract_strided_slice %291 {offsets = [0, 8], sizes = [16, 8], strides = [1, 1]} : vector<16x32xf32> to vector<16x8xf32>
    %304 = vector.extract_strided_slice %291 {offsets = [0, 16], sizes = [16, 8], strides = [1, 1]} : vector<16x32xf32> to vector<16x8xf32>
    %305 = vector.extract_strided_slice %291 {offsets = [0, 24], sizes = [16, 8], strides = [1, 1]} : vector<16x32xf32> to vector<16x8xf32>
    %306 = vector.shape_cast %302 : vector<16x8xf32> to vector<1x16x8xf32>
    %307 = vector.shape_cast %303 : vector<16x8xf32> to vector<1x16x8xf32>
    %308 = vector.shape_cast %304 : vector<16x8xf32> to vector<1x16x8xf32>
    %309 = vector.shape_cast %305 : vector<16x8xf32> to vector<1x16x8xf32>
    %310 = tpu.concatenate %306, %307, %308, %309 in 0 : vector<1x16x8xf32>, vector<1x16x8xf32>, vector<1x16x8xf32>, vector<1x16x8xf32> -> vector<4x16x8xf32>
    %311 = vector.extract_strided_slice %292 {offsets = [0, 0], sizes = [16, 8], strides = [1, 1]} : vector<16x32xf32> to vector<16x8xf32>
    %312 = vector.extract_strided_slice %292 {offsets = [0, 8], sizes = [16, 8], strides = [1, 1]} : vector<16x32xf32> to vector<16x8xf32>
    %313 = vector.extract_strided_slice %292 {offsets = [0, 16], sizes = [16, 8], strides = [1, 1]} : vector<16x32xf32> to vector<16x8xf32>
    %314 = vector.extract_strided_slice %292 {offsets = [0, 24], sizes = [16, 8], strides = [1, 1]} : vector<16x32xf32> to vector<16x8xf32>
    %315 = vector.shape_cast %311 : vector<16x8xf32> to vector<1x16x8xf32>
    %316 = vector.shape_cast %312 : vector<16x8xf32> to vector<1x16x8xf32>
    %317 = vector.shape_cast %313 : vector<16x8xf32> to vector<1x16x8xf32>
    %318 = vector.shape_cast %314 : vector<16x8xf32> to vector<1x16x8xf32>
    %319 = tpu.concatenate %315, %316, %317, %318 in 0 : vector<1x16x8xf32>, vector<1x16x8xf32>, vector<1x16x8xf32>, vector<1x16x8xf32> -> vector<4x16x8xf32>
    %320 = arith.truncf %301 : vector<4x16x8xf32> to vector<4x16x8xbf16>
    %321 = arith.truncf %310 : vector<4x16x8xf32> to vector<4x16x8xbf16>
    "tpu.trace_start"() <{level = 10 : i32, message = "hqd,hkd->hqk"}> : () -> ()
    %cst_53 = arith.constant dense<0.000000e+00> : vector<4x16x16xf32>
    %322 = tpu.matmul %320, %321, %cst_53 {dimension_numbers = #tpu.dot_dimension_numbers<[2], [2], [1], [1], [0, 0, 0, 1, 1, 1], [0], [0]>} : vector<4x16x8xbf16>, vector<4x16x8xbf16>, vector<4x16x16xf32> -> vector<4x16x16xf32>
    "tpu.trace_stop"() : () -> ()
    %cst_54 = arith.constant 0.353553385 : f32
    %323 = vector.broadcast %cst_54 : f32 to vector<4x16x16xf32>
    %324 = arith.mulf %322, %323 : vector<4x16x16xf32>
    %325 = vector.shape_cast %7 : vector<16x16xf32> to vector<1x16x16xf32>
    %326 = vector.broadcast %325 : vector<1x16x16xf32> to vector<4x16x16xf32>
    %327 = arith.addf %324, %326 : vector<4x16x16xf32>
    %cst_55 = arith.constant dense<0xFF800000> : vector<4x16xf32>
    %328 = vector.multi_reduction <maximumf>, %327, %cst_55 [2] : vector<4x16x16xf32> to vector<4x16xf32>
    %329 = vector.shape_cast %328 : vector<4x16xf32> to vector<4x16x1xf32>
    %330 = vector.broadcast %329 : vector<4x16x1xf32> to vector<4x16x16xf32>
    %331 = arith.subf %327, %330 : vector<4x16x16xf32>
    %332 = math.exp %331 : vector<4x16x16xf32>
    %cst_56 = arith.constant dense<0.000000e+00> : vector<4x16xf32>
    %333 = vector.multi_reduction <add>, %332, %cst_56 [2] : vector<4x16x16xf32> to vector<4x16xf32>
    %334 = vector.shape_cast %333 : vector<4x16xf32> to vector<4x16x1xf32>
    %335 = tpu.reciprocal %334 {approx = true} : vector<4x16x1xf32> -> vector<4x16x1xf32>
    %336 = vector.broadcast %335 : vector<4x16x1xf32> to vector<4x16x16xf32>
    %337 = arith.mulf %332, %336 : vector<4x16x16xf32>
    %338 = arith.truncf %337 : vector<4x16x16xf32> to vector<4x16x16xbf16>
    %339 = arith.truncf %319 : vector<4x16x8xf32> to vector<4x16x8xbf16>
    "tpu.trace_start"() <{level = 10 : i32, message = "hqk,hkd->hqd"}> : () -> ()
    %cst_57 = arith.constant dense<0.000000e+00> : vector<4x16x8xf32>
    %340 = tpu.matmul %338, %339, %cst_57 {dimension_numbers = #tpu.dot_dimension_numbers<[2], [1], [1], [2], [0, 0, 0, 1, 1, 2], [0], [0]>} : vector<4x16x16xbf16>, vector<4x16x8xbf16>, vector<4x16x8xf32> -> vector<4x16x8xf32>
    "tpu.trace_stop"() : () -> ()
    %341 = vector.extract_strided_slice %340 {offsets = [0, 0, 0], sizes = [1, 16, 8], strides = [1, 1, 1]} : vector<4x16x8xf32> to vector<1x16x8xf32>
    %342 = vector.shape_cast %341 : vector<1x16x8xf32> to vector<16x8xf32>
    %343 = vector.extract_strided_slice %340 {offsets = [1, 0, 0], sizes = [1, 16, 8], strides = [1, 1, 1]} : vector<4x16x8xf32> to vector<1x16x8xf32>
    %344 = vector.shape_cast %343 : vector<1x16x8xf32> to vector<16x8xf32>
    %345 = vector.extract_strided_slice %340 {offsets = [2, 0, 0], sizes = [1, 16, 8], strides = [1, 1, 1]} : vector<4x16x8xf32> to vector<1x16x8xf32>
    %346 = vector.shape_cast %345 : vector<1x16x8xf32> to vector<16x8xf32>
    %347 = vector.extract_strided_slice %340 {offsets = [3, 0, 0], sizes = [1, 16, 8], strides = [1, 1, 1]} : vector<4x16x8xf32> to vector<1x16x8xf32>
    %348 = vector.shape_cast %347 : vector<1x16x8xf32> to vector<16x8xf32>
    %349 = tpu.concatenate %342, %344, %346, %348 in 1 : vector<16x8xf32>, vector<16x8xf32>, vector<16x8xf32>, vector<16x8xf32> -> vector<16x32xf32>
    %350 = arith.truncf %349 : vector<16x32xf32> to vector<16x32xbf16>
    %351 = arith.truncf %270 : vector<32x32xf32> to vector<32x32xbf16>
    %cst_58 = arith.constant dense<0.000000e+00> : vector<16x32xf32>
    %352 = tpu.matmul %350, %351, %cst_58 {dimension_numbers = #tpu.dot_dimension_numbers<[1], [0], [0], [1], [0, 0, 1, 1], [], []>} : vector<16x32xbf16>, vector<32x32xbf16>, vector<16x32xf32> -> vector<16x32xf32>
    %353 = vector.broadcast %275 : vector<1x32xf32> to vector<16x32xf32>
    %354 = arith.addf %352, %353 : vector<16x32xf32>
    %355 = arith.addf %263, %354 : vector<16x32xf32>
    %cst_59 = arith.constant dense<0.000000e+00> : vector<16xf32>
    %356 = vector.multi_reduction <add>, %355, %cst_59 [1] : vector<16x32xf32> to vector<16xf32>
    %357 = vector.shape_cast %356 : vector<16xf32> to vector<16x1xf32>
    %cst_60 = arith.constant 3.200000e+01 : f32
    %358 = vector.broadcast %cst_60 : f32 to vector<16x1xf32>
    %359 = arith.divf %357, %358 : vector<16x1xf32>
    %360 = vector.broadcast %359 : vector<16x1xf32> to vector<16x32xf32>
    %361 = arith.subf %355, %360 : vector<16x32xf32>
    %362 = arith.mulf %361, %361 : vector<16x32xf32>
    %cst_61 = arith.constant dense<0.000000e+00> : vector<16xf32>
    %363 = vector.multi_reduction <add>, %362, %cst_61 [1] : vector<16x32xf32> to vector<16xf32>
    %364 = vector.shape_cast %363 : vector<16xf32> to vector<16x1xf32>
    %cst_62 = arith.constant 3.200000e+01 : f32
    %365 = vector.broadcast %cst_62 : f32 to vector<16x1xf32>
    %366 = arith.divf %364, %365 : vector<16x1xf32>
    %367 = vector.broadcast %359 : vector<16x1xf32> to vector<16x32xf32>
    %368 = arith.subf %355, %367 : vector<16x32xf32>
    %cst_63 = arith.constant 9.99999974E-6 : f32
    %369 = vector.broadcast %cst_63 : f32 to vector<16x1xf32>
    %370 = arith.addf %366, %369 : vector<16x1xf32>
    %371 = math.rsqrt %370 : vector<16x1xf32>
    %372 = vector.broadcast %371 : vector<16x1xf32> to vector<16x32xf32>
    %373 = arith.mulf %368, %372 : vector<16x32xf32>
    %374 = vector.broadcast %276 : vector<1x32xf32> to vector<16x32xf32>
    %375 = arith.mulf %373, %374 : vector<16x32xf32>
    %376 = vector.broadcast %277 : vector<1x32xf32> to vector<16x32xf32>
    %377 = arith.addf %375, %376 : vector<16x32xf32>
    %378 = arith.mulf %377, %6 : vector<16x32xf32>
    %379 = vector.extract_strided_slice %5 {offsets = [1, 0, 0], sizes = [1, 16, 32], strides = [1, 1, 1]} : vector<2x16x32xf32> to vector<1x16x32xf32>
    %380 = vector.shape_cast %379 : vector<1x16x32xf32> to vector<16x32xf32>
    %381 = vector.extract_strided_slice %271 {offsets = [0, 0], sizes = [32, 32], strides = [1, 1]} : vector<32x96xf32> to vector<32x32xf32>
    %382 = arith.truncf %378 : vector<16x32xf32> to vector<16x32xbf16>
    %383 = arith.truncf %381 : vector<32x32xf32> to vector<32x32xbf16>
    %cst_64 = arith.constant dense<0.000000e+00> : vector<16x32xf32>
    %384 = tpu.matmul %382, %383, %cst_64 {dimension_numbers = #tpu.dot_dimension_numbers<[1], [0], [0], [1], [0, 0, 1, 1], [], []>} : vector<16x32xbf16>, vector<32x32xbf16>, vector<16x32xf32> -> vector<16x32xf32>
    %385 = vector.extract_strided_slice %274 {offsets = [0, 0], sizes = [1, 32], strides = [1, 1]} : vector<1x96xf32> to vector<1x32xf32>
    %386 = vector.broadcast %385 : vector<1x32xf32> to vector<16x32xf32>
    %387 = arith.addf %384, %386 : vector<16x32xf32>
    %388 = vector.extract_strided_slice %271 {offsets = [0, 32], sizes = [32, 64], strides = [1, 1]} : vector<32x96xf32> to vector<32x64xf32>
    %389 = arith.truncf %380 : vector<16x32xf32> to vector<16x32xbf16>
    %390 = arith.truncf %388 : vector<32x64xf32> to vector<32x64xbf16>
    %cst_65 = arith.constant dense<0.000000e+00> : vector<16x64xf32>
    %391 = tpu.matmul %389, %390, %cst_65 {dimension_numbers = #tpu.dot_dimension_numbers<[1], [0], [0], [1], [0, 0, 1, 1], [], []>} : vector<16x32xbf16>, vector<32x64xbf16>, vector<16x64xf32> -> vector<16x64xf32>
    %392 = vector.extract_strided_slice %274 {offsets = [0, 32], sizes = [1, 64], strides = [1, 1]} : vector<1x96xf32> to vector<1x64xf32>
    %393 = vector.broadcast %392 : vector<1x64xf32> to vector<16x64xf32>
    %394 = arith.addf %391, %393 : vector<16x64xf32>
    %395 = vector.extract_strided_slice %394 {offsets = [0, 0], sizes = [16, 32], strides = [1, 1]} : vector<16x64xf32> to vector<16x32xf32>
    %396 = vector.extract_strided_slice %394 {offsets = [0, 32], sizes = [16, 32], strides = [1, 1]} : vector<16x64xf32> to vector<16x32xf32>
    %397 = vector.extract_strided_slice %387 {offsets = [0, 0], sizes = [16, 8], strides = [1, 1]} : vector<16x32xf32> to vector<16x8xf32>
    %398 = vector.extract_strided_slice %387 {offsets = [0, 8], sizes = [16, 8], strides = [1, 1]} : vector<16x32xf32> to vector<16x8xf32>
    %399 = vector.extract_strided_slice %387 {offsets = [0, 16], sizes = [16, 8], strides = [1, 1]} : vector<16x32xf32> to vector<16x8xf32>
    %400 = vector.extract_strided_slice %387 {offsets = [0, 24], sizes = [16, 8], strides = [1, 1]} : vector<16x32xf32> to vector<16x8xf32>
    %401 = vector.shape_cast %397 : vector<16x8xf32> to vector<1x16x8xf32>
    %402 = vector.shape_cast %398 : vector<16x8xf32> to vector<1x16x8xf32>
    %403 = vector.shape_cast %399 : vector<16x8xf32> to vector<1x16x8xf32>
    %404 = vector.shape_cast %400 : vector<16x8xf32> to vector<1x16x8xf32>
    %405 = tpu.concatenate %401, %402, %403, %404 in 0 : vector<1x16x8xf32>, vector<1x16x8xf32>, vector<1x16x8xf32>, vector<1x16x8xf32> -> vector<4x16x8xf32>
    %406 = vector.extract_strided_slice %395 {offsets = [0, 0], sizes = [16, 8], strides = [1, 1]} : vector<16x32xf32> to vector<16x8xf32>
    %407 = vector.extract_strided_slice %395 {offsets = [0, 8], sizes = [16, 8], strides = [1, 1]} : vector<16x32xf32> to vector<16x8xf32>
    %408 = vector.extract_strided_slice %395 {offsets = [0, 16], sizes = [16, 8], strides = [1, 1]} : vector<16x32xf32> to vector<16x8xf32>
    %409 = vector.extract_strided_slice %395 {offsets = [0, 24], sizes = [16, 8], strides = [1, 1]} : vector<16x32xf32> to vector<16x8xf32>
    %410 = vector.shape_cast %406 : vector<16x8xf32> to vector<1x16x8xf32>
    %411 = vector.shape_cast %407 : vector<16x8xf32> to vector<1x16x8xf32>
    %412 = vector.shape_cast %408 : vector<16x8xf32> to vector<1x16x8xf32>
    %413 = vector.shape_cast %409 : vector<16x8xf32> to vector<1x16x8xf32>
    %414 = tpu.concatenate %410, %411, %412, %413 in 0 : vector<1x16x8xf32>, vector<1x16x8xf32>, vector<1x16x8xf32>, vector<1x16x8xf32> -> vector<4x16x8xf32>
    %415 = vector.extract_strided_slice %396 {offsets = [0, 0], sizes = [16, 8], strides = [1, 1]} : vector<16x32xf32> to vector<16x8xf32>
    %416 = vector.extract_strided_slice %396 {offsets = [0, 8], sizes = [16, 8], strides = [1, 1]} : vector<16x32xf32> to vector<16x8xf32>
    %417 = vector.extract_strided_slice %396 {offsets = [0, 16], sizes = [16, 8], strides = [1, 1]} : vector<16x32xf32> to vector<16x8xf32>
    %418 = vector.extract_strided_slice %396 {offsets = [0, 24], sizes = [16, 8], strides = [1, 1]} : vector<16x32xf32> to vector<16x8xf32>
    %419 = vector.shape_cast %415 : vector<16x8xf32> to vector<1x16x8xf32>
    %420 = vector.shape_cast %416 : vector<16x8xf32> to vector<1x16x8xf32>
    %421 = vector.shape_cast %417 : vector<16x8xf32> to vector<1x16x8xf32>
    %422 = vector.shape_cast %418 : vector<16x8xf32> to vector<1x16x8xf32>
    %423 = tpu.concatenate %419, %420, %421, %422 in 0 : vector<1x16x8xf32>, vector<1x16x8xf32>, vector<1x16x8xf32>, vector<1x16x8xf32> -> vector<4x16x8xf32>
    %424 = arith.truncf %405 : vector<4x16x8xf32> to vector<4x16x8xbf16>
    %425 = arith.truncf %414 : vector<4x16x8xf32> to vector<4x16x8xbf16>
    "tpu.trace_start"() <{level = 10 : i32, message = "hqd,hkd->hqk"}> : () -> ()
    %cst_66 = arith.constant dense<0.000000e+00> : vector<4x16x16xf32>
    %426 = tpu.matmul %424, %425, %cst_66 {dimension_numbers = #tpu.dot_dimension_numbers<[2], [2], [1], [1], [0, 0, 0, 1, 1, 1], [0], [0]>} : vector<4x16x8xbf16>, vector<4x16x8xbf16>, vector<4x16x16xf32> -> vector<4x16x16xf32>
    "tpu.trace_stop"() : () -> ()
    %cst_67 = arith.constant 0.353553385 : f32
    %427 = vector.broadcast %cst_67 : f32 to vector<4x16x16xf32>
    %428 = arith.mulf %426, %427 : vector<4x16x16xf32>
    %429 = vector.shape_cast %8 : vector<16x16xf32> to vector<1x16x16xf32>
    %430 = vector.broadcast %429 : vector<1x16x16xf32> to vector<4x16x16xf32>
    %431 = arith.addf %428, %430 : vector<4x16x16xf32>
    %cst_68 = arith.constant dense<0xFF800000> : vector<4x16xf32>
    %432 = vector.multi_reduction <maximumf>, %431, %cst_68 [2] : vector<4x16x16xf32> to vector<4x16xf32>
    %433 = vector.shape_cast %432 : vector<4x16xf32> to vector<4x16x1xf32>
    %434 = vector.broadcast %433 : vector<4x16x1xf32> to vector<4x16x16xf32>
    %435 = arith.subf %431, %434 : vector<4x16x16xf32>
    %436 = math.exp %435 : vector<4x16x16xf32>
    %cst_69 = arith.constant dense<0.000000e+00> : vector<4x16xf32>
    %437 = vector.multi_reduction <add>, %436, %cst_69 [2] : vector<4x16x16xf32> to vector<4x16xf32>
    %438 = vector.shape_cast %437 : vector<4x16xf32> to vector<4x16x1xf32>
    %439 = tpu.reciprocal %438 {approx = true} : vector<4x16x1xf32> -> vector<4x16x1xf32>
    %440 = vector.broadcast %439 : vector<4x16x1xf32> to vector<4x16x16xf32>
    %441 = arith.mulf %436, %440 : vector<4x16x16xf32>
    %442 = arith.truncf %441 : vector<4x16x16xf32> to vector<4x16x16xbf16>
    %443 = arith.truncf %423 : vector<4x16x8xf32> to vector<4x16x8xbf16>
    "tpu.trace_start"() <{level = 10 : i32, message = "hqk,hkd->hqd"}> : () -> ()
    %cst_70 = arith.constant dense<0.000000e+00> : vector<4x16x8xf32>
    %444 = tpu.matmul %442, %443, %cst_70 {dimension_numbers = #tpu.dot_dimension_numbers<[2], [1], [1], [2], [0, 0, 0, 1, 1, 2], [0], [0]>} : vector<4x16x16xbf16>, vector<4x16x8xbf16>, vector<4x16x8xf32> -> vector<4x16x8xf32>
    "tpu.trace_stop"() : () -> ()
    %445 = vector.extract_strided_slice %444 {offsets = [0, 0, 0], sizes = [1, 16, 8], strides = [1, 1, 1]} : vector<4x16x8xf32> to vector<1x16x8xf32>
    %446 = vector.shape_cast %445 : vector<1x16x8xf32> to vector<16x8xf32>
    %447 = vector.extract_strided_slice %444 {offsets = [1, 0, 0], sizes = [1, 16, 8], strides = [1, 1, 1]} : vector<4x16x8xf32> to vector<1x16x8xf32>
    %448 = vector.shape_cast %447 : vector<1x16x8xf32> to vector<16x8xf32>
    %449 = vector.extract_strided_slice %444 {offsets = [2, 0, 0], sizes = [1, 16, 8], strides = [1, 1, 1]} : vector<4x16x8xf32> to vector<1x16x8xf32>
    %450 = vector.shape_cast %449 : vector<1x16x8xf32> to vector<16x8xf32>
    %451 = vector.extract_strided_slice %444 {offsets = [3, 0, 0], sizes = [1, 16, 8], strides = [1, 1, 1]} : vector<4x16x8xf32> to vector<1x16x8xf32>
    %452 = vector.shape_cast %451 : vector<1x16x8xf32> to vector<16x8xf32>
    %453 = tpu.concatenate %446, %448, %450, %452 in 1 : vector<16x8xf32>, vector<16x8xf32>, vector<16x8xf32>, vector<16x8xf32> -> vector<16x32xf32>
    %454 = arith.truncf %453 : vector<16x32xf32> to vector<16x32xbf16>
    %455 = arith.truncf %272 : vector<32x32xf32> to vector<32x32xbf16>
    %cst_71 = arith.constant dense<0.000000e+00> : vector<16x32xf32>
    %456 = tpu.matmul %454, %455, %cst_71 {dimension_numbers = #tpu.dot_dimension_numbers<[1], [0], [0], [1], [0, 0, 1, 1], [], []>} : vector<16x32xbf16>, vector<32x32xbf16>, vector<16x32xf32> -> vector<16x32xf32>
    %457 = vector.broadcast %278 : vector<1x32xf32> to vector<16x32xf32>
    %458 = arith.addf %456, %457 : vector<16x32xf32>
    %459 = arith.addf %378, %458 : vector<16x32xf32>
    %cst_72 = arith.constant dense<0.000000e+00> : vector<16xf32>
    %460 = vector.multi_reduction <add>, %459, %cst_72 [1] : vector<16x32xf32> to vector<16xf32>
    %461 = vector.shape_cast %460 : vector<16xf32> to vector<16x1xf32>
    %cst_73 = arith.constant 3.200000e+01 : f32
    %462 = vector.broadcast %cst_73 : f32 to vector<16x1xf32>
    %463 = arith.divf %461, %462 : vector<16x1xf32>
    %464 = vector.broadcast %463 : vector<16x1xf32> to vector<16x32xf32>
    %465 = arith.subf %459, %464 : vector<16x32xf32>
    %466 = arith.mulf %465, %465 : vector<16x32xf32>
    %cst_74 = arith.constant dense<0.000000e+00> : vector<16xf32>
    %467 = vector.multi_reduction <add>, %466, %cst_74 [1] : vector<16x32xf32> to vector<16xf32>
    %468 = vector.shape_cast %467 : vector<16xf32> to vector<16x1xf32>
    %cst_75 = arith.constant 3.200000e+01 : f32
    %469 = vector.broadcast %cst_75 : f32 to vector<16x1xf32>
    %470 = arith.divf %468, %469 : vector<16x1xf32>
    %471 = vector.broadcast %463 : vector<16x1xf32> to vector<16x32xf32>
    %472 = arith.subf %459, %471 : vector<16x32xf32>
    %cst_76 = arith.constant 9.99999974E-6 : f32
    %473 = vector.broadcast %cst_76 : f32 to vector<16x1xf32>
    %474 = arith.addf %470, %473 : vector<16x1xf32>
    %475 = math.rsqrt %474 : vector<16x1xf32>
    %476 = vector.broadcast %475 : vector<16x1xf32> to vector<16x32xf32>
    %477 = arith.mulf %472, %476 : vector<16x32xf32>
    %478 = vector.broadcast %279 : vector<1x32xf32> to vector<16x32xf32>
    %479 = arith.mulf %477, %478 : vector<16x32xf32>
    %480 = vector.broadcast %280 : vector<1x32xf32> to vector<16x32xf32>
    %481 = arith.addf %479, %480 : vector<16x32xf32>
    %482 = arith.mulf %481, %6 : vector<16x32xf32>
    %483 = arith.truncf %482 : vector<16x32xf32> to vector<16x32xbf16>
    %484 = arith.truncf %267 : vector<32x64xf32> to vector<32x64xbf16>
    %cst_77 = arith.constant dense<0.000000e+00> : vector<16x64xf32>
    %485 = tpu.matmul %483, %484, %cst_77 {dimension_numbers = #tpu.dot_dimension_numbers<[1], [0], [0], [1], [0, 0, 1, 1], [], []>} : vector<16x32xbf16>, vector<32x64xbf16>, vector<16x64xf32> -> vector<16x64xf32>
    %486 = vector.broadcast %281 : vector<1x64xf32> to vector<16x64xf32>
    %487 = arith.addf %485, %486 : vector<16x64xf32>
    %cst_78 = arith.constant 0.000000e+00 : f32
    %488 = vector.broadcast %cst_78 : f32 to vector<16x64xf32>
    %489 = arith.maximumf %487, %488 : vector<16x64xf32>
    %490 = arith.truncf %489 : vector<16x64xf32> to vector<16x64xbf16>
    %491 = arith.truncf %268 : vector<64x32xf32> to vector<64x32xbf16>
    %cst_79 = arith.constant dense<0.000000e+00> : vector<16x32xf32>
    %492 = tpu.matmul %490, %491, %cst_79 {dimension_numbers = #tpu.dot_dimension_numbers<[1], [0], [0], [1], [0, 0, 1, 1], [], []>} : vector<16x64xbf16>, vector<64x32xbf16>, vector<16x32xf32> -> vector<16x32xf32>
    %493 = vector.broadcast %282 : vector<1x32xf32> to vector<16x32xf32>
    %494 = arith.addf %492, %493 : vector<16x32xf32>
    %495 = arith.addf %482, %494 : vector<16x32xf32>
    %cst_80 = arith.constant dense<0.000000e+00> : vector<16xf32>
    %496 = vector.multi_reduction <add>, %495, %cst_80 [1] : vector<16x32xf32> to vector<16xf32>
    %497 = vector.shape_cast %496 : vector<16xf32> to vector<16x1xf32>
    %cst_81 = arith.constant 3.200000e+01 : f32
    %498 = vector.broadcast %cst_81 : f32 to vector<16x1xf32>
    %499 = arith.divf %497, %498 : vector<16x1xf32>
    %500 = vector.broadcast %499 : vector<16x1xf32> to vector<16x32xf32>
    %501 = arith.subf %495, %500 : vector<16x32xf32>
    %502 = arith.mulf %501, %501 : vector<16x32xf32>
    %cst_82 = arith.constant dense<0.000000e+00> : vector<16xf32>
    %503 = vector.multi_reduction <add>, %502, %cst_82 [1] : vector<16x32xf32> to vector<16xf32>
    %504 = vector.shape_cast %503 : vector<16xf32> to vector<16x1xf32>
    %cst_83 = arith.constant 3.200000e+01 : f32
    %505 = vector.broadcast %cst_83 : f32 to vector<16x1xf32>
    %506 = arith.divf %504, %505 : vector<16x1xf32>
    %507 = vector.broadcast %499 : vector<16x1xf32> to vector<16x32xf32>
    %508 = arith.subf %495, %507 : vector<16x32xf32>
    %cst_84 = arith.constant 9.99999974E-6 : f32
    %509 = vector.broadcast %cst_84 : f32 to vector<16x1xf32>
    %510 = arith.addf %506, %509 : vector<16x1xf32>
    %511 = math.rsqrt %510 : vector<16x1xf32>
    %512 = vector.broadcast %511 : vector<16x1xf32> to vector<16x32xf32>
    %513 = arith.mulf %508, %512 : vector<16x32xf32>
    %514 = vector.broadcast %283 : vector<1x32xf32> to vector<16x32xf32>
    %515 = arith.mulf %513, %514 : vector<16x32xf32>
    %516 = vector.broadcast %284 : vector<1x32xf32> to vector<16x32xf32>
    %517 = arith.addf %515, %516 : vector<16x32xf32>
    %518 = arith.mulf %517, %6 : vector<16x32xf32>
    %c128 = arith.constant 128 : index
    %c0_85 = arith.constant 0 : index
    %519 = vector.load %arg4[%c128, %c0_85] : memref<384x128xf32, #tpu.memory_space<vmem>>, vector<32x128xf32>
    %520 = arith.truncf %518 : vector<16x32xf32> to vector<16x32xbf16>
    %521 = arith.truncf %519 : vector<32x128xf32> to vector<32x128xbf16>
    %cst_86 = arith.constant dense<0.000000e+00> : vector<16x128xf32>
    %522 = tpu.matmul %520, %521, %cst_86 {dimension_numbers = #tpu.dot_dimension_numbers<[1], [0], [0], [1], [0, 0, 1, 1], [], []>} : vector<16x32xbf16>, vector<32x128xbf16>, vector<16x128xf32> -> vector<16x128xf32>
    %523 = tpu.iota {dimensions = array<i32: 1>} : vector<1x128xi32>
    %c50_i32 = arith.constant 50 : i32
    %524 = vector.broadcast %c50_i32 : i32 to vector<1x128xi32>
    %525 = arith.cmpi slt, %523, %524 : vector<1x128xi32>
    %cst_87 = arith.constant -1.000000e+30 : f32
    %526 = vector.shape_cast %525 : vector<1x128xi1> to vector<1x128xi1>
    %527 = vector.broadcast %526 : vector<1x128xi1> to vector<16x128xi1>
    %528 = vector.broadcast %cst_87 : f32 to vector<16x128xf32>
    %529 = arith.select %527, %522, %528 : vector<16x128xi1>, vector<16x128xf32>
    %cst_88 = arith.constant dense<0xFF800000> : vector<16xf32>
    %530 = vector.multi_reduction <maximumf>, %529, %cst_88 [1] : vector<16x128xf32> to vector<16xf32>
    %531 = vector.shape_cast %530 : vector<16xf32> to vector<16x1xf32>
    %532 = vector.broadcast %531 : vector<16x1xf32> to vector<16x128xf32>
    %533 = arith.subf %529, %532 : vector<16x128xf32>
    %534 = math.exp %533 : vector<16x128xf32>
    %cst_89 = arith.constant dense<0.000000e+00> : vector<16xf32>
    %535 = vector.multi_reduction <add>, %534, %cst_89 [1] : vector<16x128xf32> to vector<16xf32>
    %536 = vector.shape_cast %535 : vector<16xf32> to vector<16x1xf32>
    %537 = math.log %536 : vector<16x1xf32>
    %538 = vector.broadcast %537 : vector<16x1xf32> to vector<16x128xf32>
    %539 = arith.subf %533, %538 : vector<16x128xf32>
    %c0_90 = arith.constant 0 : index
    %c0_91 = arith.constant 0 : index
    %c0_92 = arith.constant 0 : index
    %540 = vector.load %arg5[%c0_90, %c0_91, %c0_92] : memref<1x16x128xf32, #tpu.memory_space<vmem>>, vector<1x16x128xf32>
    %541 = vector.shape_cast %540 : vector<1x16x128xf32> to vector<16x128xf32>
    %542 = vector.shape_cast %539 : vector<16x128xf32> to vector<1x16x128xf32>
    tpu.vector_store %arg5[%c0_90, %c0_91, %c0_92], %542 {strides = array<i32>} : memref<1x16x128xf32, #tpu.memory_space<vmem>>, vector<1x16x128xf32>,
    return
  }
  func.func @transform_0(%arg0: i32) -> (i32, i32, i32) {
    %c0_i32 = arith.constant 0 : i32
    %c0_i32_0 = arith.constant 0 : i32
    %c0_i32_1 = arith.constant 0 : i32
    return %arg0, %c0_i32, %c0_i32_0 : i32, i32, i32
  }
  func.func @transform_1(%arg0: i32) -> (i32, i32, i32, i32) {
    %c0_i32 = arith.constant 0 : i32
    %c0_i32_0 = arith.constant 0 : i32
    %c0_i32_1 = arith.constant 0 : i32
    %c0_i32_2 = arith.constant 0 : i32
    return %arg0, %c0_i32, %c0_i32_0, %c0_i32_1 : i32, i32, i32, i32
  }
  func.func @transform_2(%arg0: i32) -> (i32, i32, i32) {
    %c0_i32 = arith.constant 0 : i32
    %c0_i32_0 = arith.constant 0 : i32
    %c0_i32_1 = arith.constant 0 : i32
    return %arg0, %c0_i32, %c0_i32_0 : i32, i32, i32
  }
  func.func @transform_3(%arg0: i32) -> (i32, i32) {
    %c0_i32 = arith.constant 0 : i32
    %c0_i32_0 = arith.constant 0 : i32
    %c0_i32_1 = arith.constant 0 : i32
    return %c0_i32, %c0_i32_0 : i32, i32
  }
  func.func @transform_4(%arg0: i32) -> (i32, i32, i32) {
    %c0_i32 = arith.constant 0 : i32
    %c0_i32_0 = arith.constant 0 : i32
    %c0_i32_1 = arith.constant 0 : i32
    return %arg0, %c0_i32, %c0_i32_0 : i32, i32, i32
  }
}

</mosaic_0001>

<llo_original>
// kernel: tpu_custom_call.1
$region0: #{tpu_custom_call.1}
  #allocation0 [shape = 'u32[]', space=smem, size = 0x4, offset = 0x4, fixed_abs, tag = 'smem constant byte address 0x4 - core index']
  #allocation1 [shape = 'u32[144,128]{1,0:T(1,128)}', space=vmem, size = 0x12000, scoped, tag = 'internal scratch']
  %s0 = inlined_call_operand.hbm [shape: f32[1,16,32], index: 0, kind: input, shape index: {}]
  %s1 = inlined_call_operand.hbm [shape: f32[1,2,16,32], index: 1, kind: input, shape index: {}]
  %s2 = inlined_call_operand.hbm [shape: f32[1,16,64], index: 2, kind: input, shape index: {}]
  %s3 = inlined_call_operand.hbm [shape: f32[384,128], index: 3, kind: input, shape index: {}]
  %s4 = inlined_call_operand.hbm [shape: f32[1,16,128], index: 4, kind: output, shape index: {}]
  %s5 = sld [smem:[#allocation0]]
  $region42: #{tpu_custom_call.1} parent=0
    _
  %s7 = ssub.s32 1, %s5
  %s8 = scalar_select 0, %s7, %s5
  $region1: #{tpu_custom_call.1} parent=0
    #allocation2 [shape = 'u8[8192]{0}', space=vmem, size = 0x2000, scoped, tag = 'input window, operand 0, single buffered']
    #allocation3 [shape = 's32[1]{0}', space=sflag, size = 0x4, scoped, tag = 'scoped memory for tpu_custom_call.1']
    #allocation4 [shape = 's32[1]{0}', space=sflag, size = 0x4, scoped, tag = 'scoped memory for tpu_custom_call.1']
    #allocation5 [shape = 'u8[16384]{0}', space=vmem, size = 0x4000, scoped, tag = 'input window, operand 1, single buffered']
    #allocation6 [shape = 's32[1]{0}', space=sflag, size = 0x4, scoped, tag = 'scoped memory for tpu_custom_call.1']
    #allocation7 [shape = 'u8[8192]{0}', space=vmem, size = 0x2000, scoped, tag = 'input window, operand 2, single buffered']
    #allocation8 [shape = 'u8[196608]{0}', space=vmem, size = 0x30000, scoped, tag = 'input window, operand 3, single buffered']
    #allocation9 [shape = 's32[1]{0}', space=sflag, size = 0x4, scoped, tag = 'scoped memory for tpu_custom_call.1']
    #allocation10 [shape = 'u8[8192]{0}', space=vmem, size = 0x2000, scoped, tag = 'output window, operand 0, single buffered']
    %9 = vsyncpa [#allocation3], 0
    %10 = vsyncpa [#allocation6], 0
    %11 = vsyncpa [#allocation9], 0
    %12 = vsyncpa [#allocation4], 0
    // Predicated region
    $region2: #{tpu_custom_call.1} parent=1 // pred_check
      _
    $region3: #{tpu_custom_call.1} parent=1 // pred_check_branch
      %14 = sbr.rel (0) target = $region5
    $region4: #{tpu_custom_call.1} parent=1 // pred_region
      %s16 = ssub.s32 256, 256
      %17 = vsyncadd [#allocation3], %s16
      %s18 = sshll.u32 [#allocation2], 4
      %s19 = int_to_ptr.vmem [resolvable:$true] %s18
      %24 = dma.hbm_to_vmem [thread:$0]  %s0, 256, %s19, [#allocation3], 128, 128, 8
    $region5: #{tpu_custom_call.1} parent=1 // pred_fallthru
      _
    // Predicated region
    $region6: #{tpu_custom_call.1} parent=1 // pred_check
      _
    $region7: #{tpu_custom_call.1} parent=1 // pred_check_branch
      %26 = sbr.rel (0) target = $region9
    $region8: #{tpu_custom_call.1} parent=1 // pred_region
      %s28 = ssub.s32 512, 512
      %29 = vsyncadd [#allocation6], %s28
      %s30 = sshll.u32 [#allocation5], 4
      %s31 = int_to_ptr.vmem [resolvable:$true] %s30
      %36 = dma.hbm_to_vmem [thread:$0]  %s1, 512, %s31, [#allocation6], 128, 128, 8
    $region9: #{tpu_custom_call.1} parent=1 // pred_fallthru
      _
    // Predicated region
    $region10: #{tpu_custom_call.1} parent=1 // pred_check
      _
    $region11: #{tpu_custom_call.1} parent=1 // pred_check_branch
      %38 = sbr.rel (0) target = $region13
    $region12: #{tpu_custom_call.1} parent=1 // pred_region
      %s40 = ssub.s32 256, 256
      %41 = vsyncadd [#allocation6], %s40
      %s42 = sshll.u32 [#allocation7], 4
      %s43 = int_to_ptr.vmem [resolvable:$true] %s42
      %48 = dma.hbm_to_vmem [thread:$0]  %s2, 256, %s43, [#allocation6], 128, 128, 8
    $region13: #{tpu_custom_call.1} parent=1 // pred_fallthru
      _
    // Predicated region
    $region14: #{tpu_custom_call.1} parent=1 // pred_check
      _
    $region15: #{tpu_custom_call.1} parent=1 // pred_check_branch
      %50 = sbr.rel (0) target = $region17
    $region16: #{tpu_custom_call.1} parent=1 // pred_region
      %s52 = ssub.s32 6144, 6144
      %53 = vsyncadd [#allocation9], %s52
      %s54 = sshll.u32 [#allocation8], 4
      %s55 = int_to_ptr.vmem [resolvable:$true] %s54
      %60 = dma.hbm_to_vmem [thread:$0]  %s3, 6144, %s55, [#allocation9], 128, 128, 8
    $region17: #{tpu_custom_call.1} parent=1 // pred_fallthru
      _
    // Predicated region
    $region18: #{tpu_custom_call.1} parent=1 // pred_check
      _
    $region19: #{tpu_custom_call.1} parent=1 // pred_check_branch
      %62 = sbr.rel (0) target = $region21
    $region20: #{tpu_custom_call.1} parent=1 // pred_region
      %63 = dma.done [#allocation3], 256
    $region21: #{tpu_custom_call.1} parent=1 // pred_fallthru
      _
    // Predicated region
    $region22: #{tpu_custom_call.1} parent=1 // pred_check
      _
    $region23: #{tpu_custom_call.1} parent=1 // pred_check_branch
      %65 = sbr.rel (0) target = $region25
    $region24: #{tpu_custom_call.1} parent=1 // pred_region
      %66 = dma.done [#allocation6], 512
    $region25: #{tpu_custom_call.1} parent=1 // pred_fallthru
      _
    // Predicated region
    $region26: #{tpu_custom_call.1} parent=1 // pred_check
      _
    $region27: #{tpu_custom_call.1} parent=1 // pred_check_branch
      %68 = sbr.rel (0) target = $region29
    $region28: #{tpu_custom_call.1} parent=1 // pred_region
      %69 = dma.done [#allocation6], 256
    $region29: #{tpu_custom_call.1} parent=1 // pred_fallthru
      _
    // Predicated region
    $region30: #{tpu_custom_call.1} parent=1 // pred_check
      _
    $region31: #{tpu_custom_call.1} parent=1 // pred_check_branch
      %71 = sbr.rel (0) target = $region33
    $region32: #{tpu_custom_call.1} parent=1 // pred_region
      %72 = dma.done [#allocation9], 6144
    $region33: #{tpu_custom_call.1} parent=1 // pred_fallthru
      _
    %v74 = vld [vmem:[#allocation7] sm:$0xff]
    %v75 = vld [vmem:[#allocation7 + $0x8] sm:$0xff]
    %v76 = vld [vmem:[#allocation2] sm:$0xff]
    %v77 = vld [vmem:[#allocation2 + $0x8] sm:$0xff]
    %v78 = vld [vmem:[#allocation5] sm:$0xff]
    %v79 = vld [vmem:[#allocation5 + $0x8] sm:$0xff]
    %v80 = vld [vmem:[#allocation5 + $0x10] sm:$0xff]
    %v81 = vld [vmem:[#allocation5 + $0x18] sm:$0xff]
    %v82 = vld [vmem:[#allocation8] sm:$0xff]
    %v83 = vld [vmem:[#allocation8 + $0x8] sm:$0xff]
    %v84 = vld [vmem:[#allocation8 + $0x10] sm:$0xff]
    %v85 = vld [vmem:[#allocation8 + $0x18] sm:$0xff]
    %v86 = vld [vmem:[#allocation8 + $0x20] sm:$0xff]
    %v87 = vld [vmem:[#allocation8 + $0x28] sm:$0xff]
    %v88 = vld [vmem:[#allocation8 + $0x30] sm:$0xff]
    %v89 = vld [vmem:[#allocation8 + $0x38] sm:$0xff]
    %v90 = vld [vmem:[#allocation8 + $0xa0] sm:$0xff]
    %v91 = vld [vmem:[#allocation8 + $0xa8] sm:$0xff]
    %v92 = vld [vmem:[#allocation8 + $0xc0] sm:$0xff]
    %v93 = vld [vmem:[#allocation8 + $0xc8] sm:$0xff]
    %v94 = vld [vmem:[#allocation8 + $0xd0] sm:$0xff]
    %v95 = vld [vmem:[#allocation8 + $0xd8] sm:$0xff]
    %v96 = vld [vmem:[#allocation8 + $0xe0] sm:$0xff]
    %v97 = vld [vmem:[#allocation8 + $0xe8] sm:$0xff]
    %v98 = vld [vmem:[#allocation8 + $0xf0] sm:$0xff]
    %v99 = vld [vmem:[#allocation8 + $0xf8] sm:$0xff]
    %v100 = vld [vmem:[#allocation8 + $0x100] sm:$0xff]
    %v101 = vld [vmem:[#allocation8 + $0x108] sm:$0xff]
    %v102 = vld [vmem:[#allocation8 + $0x110] sm:$0xff]
    %v103 = vld [vmem:[#allocation8 + $0x118] sm:$0xff]
    %v104 = vpack.c.bf16 %v77, %v76
    %v105 = vpack.c.bf16 %v83, %v82
    %v106 = vpack.c.bf16 %v85, %v84
    %v107 = vlaneseq
    %v108 = vshrl.u32 %v107, 7
    %v109 = vsub.s32 0, %v108
    %v110 = vrot.slane %v90, %v109
    %vm111 = vcmask 261120
    %v113 = vsel %vm111, %v104, 0
    %115 = vmatprep.subr.bf16.mxu0 0
    %116 = vmatpush1.bf16.msra.mxu0 0
    %117 = vmatprep.subr.bf16.mxu0 0
    %118 = vmatpush1.bf16.msra.mxu0 0
    %119 = vmatprep.subr.bf16.mxu0 0
    %120 = vmatpush1.bf16.msra.mxu0 0
    %121 = vmatprep.subr.bf16.mxu0 0
    %122 = vmatpush1.bf16.msra.mxu0 0
    %123 = vmatprep.subr.bf16.mxu0 0
    %124 = vmatpush1.bf16.msra.mxu0 0
    %125 = vmatprep.subr.bf16.mxu0 0
    %126 = vmatpush1.bf16.msra.mxu0 0
    %127 = vmatprep.subr.bf16.mxu0 0
    %128 = vmatpush1.bf16.msra.mxu0 %v106
    %129 = vmatprep.subr.bf16.mxu0 0
    %130 = vmatpush1.bf16.msra.mxu0 %v105
    %131 = vmatprep.subr.bf16.mxu0 0
    %132 = vmatpush2.bf16.msra.mxu0 0
    %133 = vmatprep.subr.bf16.mxu0 0
    %134 = vmatpush2.bf16.msra.mxu0 0
    %135 = vmatprep.subr.bf16.mxu0 0
    %136 = vmatpush2.bf16.msra.mxu0 0
    %137 = vmatprep.subr.bf16.mxu0 0
    %138 = vmatpush2.bf16.msra.mxu0 0
    %139 = vmatprep.subr.bf16.mxu0 0
    %140 = vmatpush2.bf16.msra.mxu0 0
    %141 = vmatprep.subr.bf16.mxu0 0
    %142 = vmatpush2.bf16.msra.mxu0 0
    %143 = vmatprep.subr.bf16.mxu0 0
    %144 = vmatpush2.bf16.msra.mxu0 0
    %145 = vmatprep.subr.bf16.mxu0 0
    %146 = vmatpush2.bf16.msra.mxu0 0
    %147 = vmatprep.mubr.bf16.mxu0 0
    %148 = vmatmul.mubr.bf16.gmra.mxu0 %v113
    %v149 = vpop.f32.mrf.mxu0
    %v150 = vadd.f32 %v110, %v149
    %v151 = vpop.f32.mrf.mxu0
    %v152 = vpop.f32.mrf.mxu0
    %v153 = vadd.f32 %v110, %v152
    %v154 = vpop.f32.mrf.mxu0
    %155 = vdwg.mxu0
    %158 = vrot.lane.b32.xlu0 %v150, 120
    %v159 = vpop.permute.xlu0 %158
    %160 = vrot.lane.b32.xlu0 %v153, 120
    %v161 = vpop.permute.xlu0 %160
    %164 = vrot.lane.b32.xlu0 %v150, 112
    %v165 = vpop.permute.xlu0 %164
    %166 = vrot.lane.b32.xlu0 %v153, 112
    %v167 = vpop.permute.xlu0 %166
    %170 = vrot.lane.b32.xlu0 %v150, 104
    %v171 = vpop.permute.xlu0 %170
    %172 = vrot.lane.b32.xlu0 %v153, 104
    %v173 = vpop.permute.xlu0 %172
    %v176 = vpack.c.bf16 %v153, %v150
    %v177 = vpack.c.bf16 %v161, %v159
    %v178 = vpack.c.bf16 %v167, %v165
    %v179 = vpack.c.bf16 %v173, %v171
    %181 = vrot.lane.b32.xlu0 %v176, 96
    %v182 = vpop.permute.xlu0 %181
    %vm183 = vcmask 64512
    %v185 = vsel %vm183, %v176, 0
    %v188 = vsel %vm183, %v182, 0
    %190 = vmatprep.subr.bf16.mxu0 0
    %191 = vmatpush1.bf16.xpose.msra.mxu0 0
    %192 = vmatprep.subr.bf16.mxu0 0
    %193 = vmatpush1.bf16.xpose.msra.mxu0 0
    %194 = vmatprep.subr.bf16.mxu0 0
    %195 = vmatpush1.bf16.xpose.msra.mxu0 0
    %196 = vmatprep.subr.bf16.mxu0 0
    %197 = vmatpush1.bf16.xpose.msra.mxu0 0
    %198 = vmatprep.subr.bf16.mxu0 0
    %199 = vmatpush1.bf16.xpose.msra.mxu0 0
    %200 = vmatprep.subr.bf16.mxu0 0
    %201 = vmatpush1.bf16.xpose.msra.mxu0 0
    %202 = vmatprep.subr.bf16.mxu0 0
    %203 = vmatpush1.bf16.xpose.msra.mxu0 0
    %204 = vmatprep.subr.bf16.mxu0 0
    %205 = vmatpush1.bf16.xpose.msra.mxu0 %v188
    %206 = vmatprep.subr.bf16.mxu0 0
    %207 = vmatpush2.bf16.xpose.msra.mxu0 0
    %208 = vmatprep.subr.bf16.mxu0 0
    %209 = vmatpush2.bf16.xpose.msra.mxu0 0
    %210 = vmatprep.subr.bf16.mxu0 0
    %211 = vmatpush2.bf16.xpose.msra.mxu0 0
    %212 = vmatprep.subr.bf16.mxu0 0
    %213 = vmatpush2.bf16.xpose.msra.mxu0 0
    %214 = vmatprep.subr.bf16.mxu0 0
    %215 = vmatpush2.bf16.xpose.msra.mxu0 0
    %216 = vmatprep.subr.bf16.mxu0 0
    %217 = vmatpush2.bf16.xpose.msra.mxu0 0
    %218 = vmatprep.subr.bf16.mxu0 0
    %219 = vmatpush2.bf16.xpose.msra.mxu0 0
    %220 = vmatprep.subr.bf16.mxu0 0
    %221 = vmatpush2.bf16.xpose.msra.mxu0 0
    %222 = vmatprep.mubr.bf16.mxu0 0
    %223 = vmatmul.mubr.bf16.gmra.mxu0 %v185
    %v224 = vpop.f32.mrf.mxu0
    %v225 = vadd.f32 0.0, %v224
    %v226 = vpop.f32.mrf.mxu0
    %v227 = vpop.f32.mrf.mxu0
    %v228 = vadd.f32 0.0, %v227
    %v229 = vpop.f32.mrf.mxu0
    %230 = vdwg.mxu0
    %232 = vrot.lane.b32.xlu0 %v177, 96
    %v233 = vpop.permute.xlu0 %232
    %v235 = vsel %vm183, %v177, 0
    %v238 = vsel %vm183, %v233, 0
    %240 = vmatprep.subr.bf16.mxu0 0
    %241 = vmatpush1.bf16.xpose.msra.mxu0 0
    %242 = vmatprep.subr.bf16.mxu0 0
    %243 = vmatpush1.bf16.xpose.msra.mxu0 0
    %244 = vmatprep.subr.bf16.mxu0 0
    %245 = vmatpush1.bf16.xpose.msra.mxu0 0
    %246 = vmatprep.subr.bf16.mxu0 0
    %247 = vmatpush1.bf16.xpose.msra.mxu0 0
    %248 = vmatprep.subr.bf16.mxu0 0
    %249 = vmatpush1.bf16.xpose.msra.mxu0 0
    %250 = vmatprep.subr.bf16.mxu0 0
    %251 = vmatpush1.bf16.xpose.msra.mxu0 0
    %252 = vmatprep.subr.bf16.mxu0 0
    %253 = vmatpush1.bf16.xpose.msra.mxu0 0
    %254 = vmatprep.subr.bf16.mxu0 0
    %255 = vmatpush1.bf16.xpose.msra.mxu0 %v238
    %256 = vmatprep.subr.bf16.mxu0 0
    %257 = vmatpush2.bf16.xpose.msra.mxu0 0
    %258 = vmatprep.subr.bf16.mxu0 0
    %259 = vmatpush2.bf16.xpose.msra.mxu0 0
    %260 = vmatprep.subr.bf16.mxu0 0
    %261 = vmatpush2.bf16.xpose.msra.mxu0 0
    %262 = vmatprep.subr.bf16.mxu0 0
    %263 = vmatpush2.bf16.xpose.msra.mxu0 0
    %264 = vmatprep.subr.bf16.mxu0 0
    %265 = vmatpush2.bf16.xpose.msra.mxu0 0
    %266 = vmatprep.subr.bf16.mxu0 0
    %267 = vmatpush2.bf16.xpose.msra.mxu0 0
    %268 = vmatprep.subr.bf16.mxu0 0
    %269 = vmatpush2.bf16.xpose.msra.mxu0 0
    %270 = vmatprep.subr.bf16.mxu0 0
    %271 = vmatpush2.bf16.xpose.msra.mxu0 0
    %272 = vmatprep.mubr.bf16.mxu0 0
    %273 = vmatmul.mubr.bf16.gmra.mxu0 %v235
    %v274 = vpop.f32.mrf.mxu0
    %v275 = vadd.f32 0.0, %v274
    %v276 = vpop.f32.mrf.mxu0
    %v277 = vpop.f32.mrf.mxu0
    %v278 = vadd.f32 0.0, %v277
    %v279 = vpop.f32.mrf.mxu0
    %280 = vdwg.mxu0
    %282 = vrot.lane.b32.xlu0 %v178, 96
    %v283 = vpop.permute.xlu0 %282
    %v285 = vsel %vm183, %v178, 0
    %v288 = vsel %vm183, %v283, 0
    %290 = vmatprep.subr.bf16.mxu0 0
    %291 = vmatpush1.bf16.xpose.msra.mxu0 0
    %292 = vmatprep.subr.bf16.mxu0 0
    %293 = vmatpush1.bf16.xpose.msra.mxu0 0
    %294 = vmatprep.subr.bf16.mxu0 0
    %295 = vmatpush1.bf16.xpose.msra.mxu0 0
    %296 = vmatprep.subr.bf16.mxu0 0
    %297 = vmatpush1.bf16.xpose.msra.mxu0 0
    %298 = vmatprep.subr.bf16.mxu0 0
    %299 = vmatpush1.bf16.xpose.msra.mxu0 0
    %300 = vmatprep.subr.bf16.mxu0 0
    %301 = vmatpush1.bf16.xpose.msra.mxu0 0
    %302 = vmatprep.subr.bf16.mxu0 0
    %303 = vmatpush1.bf16.xpose.msra.mxu0 0
    %304 = vmatprep.subr.bf16.mxu0 0
    %305 = vmatpush1.bf16.xpose.msra.mxu0 %v288
    %306 = vmatprep.subr.bf16.mxu0 0
    %307 = vmatpush2.bf16.xpose.msra.mxu0 0
    %308 = vmatprep.subr.bf16.mxu0 0
    %309 = vmatpush2.bf16.xpose.msra.mxu0 0
    %310 = vmatprep.subr.bf16.mxu0 0
    %311 = vmatpush2.bf16.xpose.msra.mxu0 0
    %312 = vmatprep.subr.bf16.mxu0 0
    %313 = vmatpush2.bf16.xpose.msra.mxu0 0
    %314 = vmatprep.subr.bf16.mxu0 0
    %315 = vmatpush2.bf16.xpose.msra.mxu0 0
    %316 = vmatprep.subr.bf16.mxu0 0
    %317 = vmatpush2.bf16.xpose.msra.mxu0 0
    %318 = vmatprep.subr.bf16.mxu0 0
    %319 = vmatpush2.bf16.xpose.msra.mxu0 0
    %320 = vmatprep.subr.bf16.mxu0 0
    %321 = vmatpush2.bf16.xpose.msra.mxu0 0
    %322 = vmatprep.mubr.bf16.mxu0 0
    %323 = vmatmul.mubr.bf16.gmra.mxu0 %v285
    %v324 = vpop.f32.mrf.mxu0
    %v325 = vadd.f32 0.0, %v324
    %v326 = vpop.f32.mrf.mxu0
    %v327 = vpop.f32.mrf.mxu0
    %v328 = vadd.f32 0.0, %v327
    %v329 = vpop.f32.mrf.mxu0
    %330 = vdwg.mxu0
    %332 = vrot.lane.b32.xlu0 %v179, 96
    %v333 = vpop.permute.xlu0 %332
    %v335 = vsel %vm183, %v179, 0
    %v338 = vsel %vm183, %v333, 0
    %340 = vmatprep.subr.bf16.mxu0 0
    %341 = vmatpush1.bf16.xpose.msra.mxu0 0
    %342 = vmatprep.subr.bf16.mxu0 0
    %343 = vmatpush1.bf16.xpose.msra.mxu0 0
    %344 = vmatprep.subr.bf16.mxu0 0
    %345 = vmatpush1.bf16.xpose.msra.mxu0 0
    %346 = vmatprep.subr.bf16.mxu0 0
    %347 = vmatpush1.bf16.xpose.msra.mxu0 0
    %348 = vmatprep.subr.bf16.mxu0 0
    %349 = vmatpush1.bf16.xpose.msra.mxu0 0
    %350 = vmatprep.subr.bf16.mxu0 0
    %351 = vmatpush1.bf16.xpose.msra.mxu0 0
    %352 = vmatprep.subr.bf16.mxu0 0
    %353 = vmatpush1.bf16.xpose.msra.mxu0 0
    %354 = vmatprep.subr.bf16.mxu0 0
    %355 = vmatpush1.bf16.xpose.msra.mxu0 %v338
    %356 = vmatprep.subr.bf16.mxu0 0
    %357 = vmatpush2.bf16.xpose.msra.mxu0 0
    %358 = vmatprep.subr.bf16.mxu0 0
    %359 = vmatpush2.bf16.xpose.msra.mxu0 0
    %360 = vmatprep.subr.bf16.mxu0 0
    %361 = vmatpush2.bf16.xpose.msra.mxu0 0
    %362 = vmatprep.subr.bf16.mxu0 0
    %363 = vmatpush2.bf16.xpose.msra.mxu0 0
    %364 = vmatprep.subr.bf16.mxu0 0
    %365 = vmatpush2.bf16.xpose.msra.mxu0 0
    %366 = vmatprep.subr.bf16.mxu0 0
    %367 = vmatpush2.bf16.xpose.msra.mxu0 0
    %368 = vmatprep.subr.bf16.mxu0 0
    %369 = vmatpush2.bf16.xpose.msra.mxu0 0
    %370 = vmatprep.subr.bf16.mxu0 0
    %371 = vmatpush2.bf16.xpose.msra.mxu0 0
    %372 = vmatprep.mubr.bf16.mxu0 0
    %373 = vmatmul.mubr.bf16.gmra.mxu0 %v335
    %v374 = vpop.f32.mrf.mxu0
    %v375 = vadd.f32 0.0, %v374
    %v376 = vpop.f32.mrf.mxu0
    %v377 = vpop.f32.mrf.mxu0
    %v378 = vadd.f32 0.0, %v377
    %v379 = vpop.f32.mrf.mxu0
    %380 = vdwg.mxu0
    %v381 = vmul.f32 %v225, 0.35355338
    %v382 = vmul.f32 %v228, 0.35355338
    %v383 = vmul.f32 %v275, 0.35355338
    %v384 = vmul.f32 %v278, 0.35355338
    %v385 = vmul.f32 %v325, 0.35355338
    %v386 = vmul.f32 %v328, 0.35355338
    %v387 = vmul.f32 %v375, 0.35355338
    %v388 = vmul.f32 %v378, 0.35355338
    %391 = vrot.lane.b32.xlu0 %v74, 96
    %v392 = vpop.permute.xlu0 %391
    %393 = vrot.lane.b32.xlu0 %v75, 96
    %v394 = vpop.permute.xlu0 %393
    %v397 = vadd.f32 %v381, %v392
    %v398 = vadd.f32 %v382, %v394
    %v399 = vadd.f32 %v383, %v392
    %v400 = vadd.f32 %v384, %v394
    %v401 = vadd.f32 %v385, %v392
    %v402 = vadd.f32 %v386, %v394
    %v403 = vadd.f32 %v387, %v392
    %v404 = vadd.f32 %v388, %v394
    %vm405 = vcmask 130048
    %v406 = vsel %vm405, %v397, -inf
    %407 = vmax.xlane.f32.xlu0 %v406
    %v408 = vpop.xlane.xlu0 %407
    %v409 = vsel %vm405, %v398, -inf
    %410 = vmax.xlane.f32.xlu0 %v409
    %v411 = vpop.xlane.xlu0 %410
    %v412 = vsel %vm405, %v399, -inf
    %413 = vmax.xlane.f32.xlu0 %v412
    %v414 = vpop.xlane.xlu0 %413
    %v415 = vsel %vm405, %v400, -inf
    %416 = vmax.xlane.f32.xlu0 %v415
    %v417 = vpop.xlane.xlu0 %416
    %v418 = vsel %vm405, %v401, -inf
    %419 = vmax.xlane.f32.xlu0 %v418
    %v420 = vpop.xlane.xlu0 %419
    %v421 = vsel %vm405, %v402, -inf
    %422 = vmax.xlane.f32.xlu0 %v421
    %v423 = vpop.xlane.xlu0 %422
    %v424 = vsel %vm405, %v403, -inf
    %425 = vmax.xlane.f32.xlu0 %v424
    %v426 = vpop.xlane.xlu0 %425
    %v427 = vsel %vm405, %v404, -inf
    %428 = vmax.xlane.f32.xlu0 %v427
    %v429 = vpop.xlane.xlu0 %428
    %v430 = vsub.f32 %v397, %v408
    %v431 = vsub.f32 %v398, %v411
    %v432 = vsub.f32 %v399, %v414
    %v433 = vsub.f32 %v400, %v417
    %v434 = vsub.f32 %v401, %v420
    %v435 = vsub.f32 %v402, %v423
    %v436 = vsub.f32 %v403, %v426
    %v437 = vsub.f32 %v404, %v429
    %v438 = vmul.f32 %v430, 1.442695
    %v439 = vpow.pop %v438
    %v440 = vmul.f32 %v431, 1.442695
    %v441 = vpow.pop %v440
    %v442 = vmul.f32 %v432, 1.442695
    %v443 = vpow.pop %v442
    %v444 = vmul.f32 %v433, 1.442695
    %v445 = vpow.pop %v444
    %v446 = vmul.f32 %v434, 1.442695
    %v447 = vpow.pop %v446
    %v448 = vmul.f32 %v435, 1.442695
    %v449 = vpow.pop %v448
    %v450 = vmul.f32 %v436, 1.442695
    %v451 = vpow.pop %v450
    %v452 = vmul.f32 %v437, 1.442695
    %v453 = vpow.pop %v452
    %v454 = vsel %vm405, %v439, 0.0
    %455 = vadd.xlane.f32.xlu0 %v454
    %v456 = vpop.xlane.xlu0 %455
    %v457 = vsel %vm405, %v441, 0.0
    %458 = vadd.xlane.f32.xlu0 %v457
    %v459 = vpop.xlane.xlu0 %458
    %v460 = vsel %vm405, %v443, 0.0
    %461 = vadd.xlane.f32.xlu0 %v460
    %v462 = vpop.xlane.xlu0 %461
    %v463 = vsel %vm405, %v445, 0.0
    %464 = vadd.xlane.f32.xlu0 %v463
    %v465 = vpop.xlane.xlu0 %464
    %v466 = vsel %vm405, %v447, 0.0
    %467 = vadd.xlane.f32.xlu0 %v466
    %v468 = vpop.xlane.xlu0 %467
    %v469 = vsel %vm405, %v449, 0.0
    %470 = vadd.xlane.f32.xlu0 %v469
    %v471 = vpop.xlane.xlu0 %470
    %v472 = vsel %vm405, %v451, 0.0
    %473 = vadd.xlane.f32.xlu0 %v472
    %v474 = vpop.xlane.xlu0 %473
    %v475 = vsel %vm405, %v453, 0.0
    %476 = vadd.xlane.f32.xlu0 %v475
    %v477 = vpop.xlane.xlu0 %476
    %v478 = vrcp.pop %v456
    %v479 = vrcp.pop %v459
    %v480 = vrcp.pop %v462
    %v481 = vrcp.pop %v465
    %v482 = vrcp.pop %v468
    %v483 = vrcp.pop %v471
    %v484 = vrcp.pop %v474
    %v485 = vrcp.pop %v477
    %v486 = vmul.f32 %v439, %v478
    %v487 = vmul.f32 %v441, %v479
    %v488 = vmul.f32 %v443, %v480
    %v489 = vmul.f32 %v445, %v481
    %v490 = vmul.f32 %v447, %v482
    %v491 = vmul.f32 %v449, %v483
    %v492 = vmul.f32 %v451, %v484
    %v493 = vmul.f32 %v453, %v485
    %v494 = vpack.c.bf16 %v487, %v486
    %v495 = vpack.c.bf16 %v489, %v488
    %v496 = vpack.c.bf16 %v491, %v490
    %v497 = vpack.c.bf16 %v493, %v492
    %498 = vrot.lane.b32.xlu0 %v176, 64
    %v499 = vpop.permute.xlu0 %498
    %v502 = vsel %vm405, %v494, 0
    %504 = vmatprep.subr.bf16.mxu0 0
    %505 = vmatpush1.bf16.msra.mxu0 0
    %506 = vmatprep.subr.bf16.mxu0 0
    %507 = vmatpush1.bf16.msra.mxu0 0
    %508 = vmatprep.subr.bf16.mxu0 0
    %509 = vmatpush1.bf16.msra.mxu0 0
    %510 = vmatprep.subr.bf16.mxu0 0
    %511 = vmatpush1.bf16.msra.mxu0 0
    %512 = vmatprep.subr.bf16.mxu0 0
    %513 = vmatpush1.bf16.msra.mxu0 0
    %514 = vmatprep.subr.bf16.mxu0 0
    %515 = vmatpush1.bf16.msra.mxu0 0
    %516 = vmatprep.subr.bf16.mxu0 0
    %517 = vmatpush1.bf16.msra.mxu0 0
    %518 = vmatprep.subr.bf16.mxu0 0
    %519 = vmatpush1.bf16.msra.mxu0 %v499
    %520 = vmatprep.subr.bf16.mxu0 0
    %521 = vmatpush2.bf16.msra.mxu0 0
    %522 = vmatprep.subr.bf16.mxu0 0
    %523 = vmatpush2.bf16.msra.mxu0 0
    %524 = vmatprep.subr.bf16.mxu0 0
    %525 = vmatpush2.bf16.msra.mxu0 0
    %526 = vmatprep.subr.bf16.mxu0 0
    %527 = vmatpush2.bf16.msra.mxu0 0
    %528 = vmatprep.subr.bf16.mxu0 0
    %529 = vmatpush2.bf16.msra.mxu0 0
    %530 = vmatprep.subr.bf16.mxu0 0
    %531 = vmatpush2.bf16.msra.mxu0 0
    %532 = vmatprep.subr.bf16.mxu0 0
    %533 = vmatpush2.bf16.msra.mxu0 0
    %534 = vmatprep.subr.bf16.mxu0 0
    %535 = vmatpush2.bf16.msra.mxu0 0
    %536 = vmatprep.mubr.bf16.mxu0 0
    %537 = vmatmul.mubr.bf16.gmra.mxu0 %v502
    %v538 = vpop.f32.mrf.mxu0
    %v539 = vadd.f32 0.0, %v538
    %v540 = vpop.f32.mrf.mxu0
    %v541 = vpop.f32.mrf.mxu0
    %v542 = vadd.f32 0.0, %v541
    %v543 = vpop.f32.mrf.mxu0
    %544 = vdwg.mxu0
    %545 = vrot.lane.b32.xlu0 %v177, 64
    %v546 = vpop.permute.xlu0 %545
    %v549 = vsel %vm405, %v495, 0
    %551 = vmatprep.subr.bf16.mxu0 0
    %552 = vmatpush1.bf16.msra.mxu0 0
    %553 = vmatprep.subr.bf16.mxu0 0
    %554 = vmatpush1.bf16.msra.mxu0 0
    %555 = vmatprep.subr.bf16.mxu0 0
    %556 = vmatpush1.bf16.msra.mxu0 0
    %557 = vmatprep.subr.bf16.mxu0 0
    %558 = vmatpush1.bf16.msra.mxu0 0
    %559 = vmatprep.subr.bf16.mxu0 0
    %560 = vmatpush1.bf16.msra.mxu0 0
    %561 = vmatprep.subr.bf16.mxu0 0
    %562 = vmatpush1.bf16.msra.mxu0 0
    %563 = vmatprep.subr.bf16.mxu0 0
    %564 = vmatpush1.bf16.msra.mxu0 0
    %565 = vmatprep.subr.bf16.mxu0 0
    %566 = vmatpush1.bf16.msra.mxu0 %v546
    %567 = vmatprep.subr.bf16.mxu0 0
    %568 = vmatpush2.bf16.msra.mxu0 0
    %569 = vmatprep.subr.bf16.mxu0 0
    %570 = vmatpush2.bf16.msra.mxu0 0
    %571 = vmatprep.subr.bf16.mxu0 0
    %572 = vmatpush2.bf16.msra.mxu0 0
    %573 = vmatprep.subr.bf16.mxu0 0
    %574 = vmatpush2.bf16.msra.mxu0 0
    %575 = vmatprep.subr.bf16.mxu0 0
    %576 = vmatpush2.bf16.msra.mxu0 0
    %577 = vmatprep.subr.bf16.mxu0 0
    %578 = vmatpush2.bf16.msra.mxu0 0
    %579 = vmatprep.subr.bf16.mxu0 0
    %580 = vmatpush2.bf16.msra.mxu0 0
    %581 = vmatprep.subr.bf16.mxu0 0
    %582 = vmatpush2.bf16.msra.mxu0 0
    %583 = vmatprep.mubr.bf16.mxu0 0
    %584 = vmatmul.mubr.bf16.gmra.mxu0 %v549
    %v585 = vpop.f32.mrf.mxu0
    %v586 = vadd.f32 0.0, %v585
    %v587 = vpop.f32.mrf.mxu0
    %v588 = vpop.f32.mrf.mxu0
    %v589 = vadd.f32 0.0, %v588
    %v590 = vpop.f32.mrf.mxu0
    %591 = vdwg.mxu0
    %592 = vrot.lane.b32.xlu0 %v178, 64
    %v593 = vpop.permute.xlu0 %592
    %v596 = vsel %vm405, %v496, 0
    %598 = vmatprep.subr.bf16.mxu0 0
    %599 = vmatpush1.bf16.msra.mxu0 0
    %600 = vmatprep.subr.bf16.mxu0 0
    %601 = vmatpush1.bf16.msra.mxu0 0
    %602 = vmatprep.subr.bf16.mxu0 0
    %603 = vmatpush1.bf16.msra.mxu0 0
    %604 = vmatprep.subr.bf16.mxu0 0
    %605 = vmatpush1.bf16.msra.mxu0 0
    %606 = vmatprep.subr.bf16.mxu0 0
    %607 = vmatpush1.bf16.msra.mxu0 0
    %608 = vmatprep.subr.bf16.mxu0 0
    %609 = vmatpush1.bf16.msra.mxu0 0
    %610 = vmatprep.subr.bf16.mxu0 0
    %611 = vmatpush1.bf16.msra.mxu0 0
    %612 = vmatprep.subr.bf16.mxu0 0
    %613 = vmatpush1.bf16.msra.mxu0 %v593
    %614 = vmatprep.subr.bf16.mxu0 0
    %615 = vmatpush2.bf16.msra.mxu0 0
    %616 = vmatprep.subr.bf16.mxu0 0
    %617 = vmatpush2.bf16.msra.mxu0 0
    %618 = vmatprep.subr.bf16.mxu0 0
    %619 = vmatpush2.bf16.msra.mxu0 0
    %620 = vmatprep.subr.bf16.mxu0 0
    %621 = vmatpush2.bf16.msra.mxu0 0
    %622 = vmatprep.subr.bf16.mxu0 0
    %623 = vmatpush2.bf16.msra.mxu0 0
    %624 = vmatprep.subr.bf16.mxu0 0
    %625 = vmatpush2.bf16.msra.mxu0 0
    %626 = vmatprep.subr.bf16.mxu0 0
    %627 = vmatpush2.bf16.msra.mxu0 0
    %628 = vmatprep.subr.bf16.mxu0 0
    %629 = vmatpush2.bf16.msra.mxu0 0
    %630 = vmatprep.mubr.bf16.mxu0 0
    %631 = vmatmul.mubr.bf16.gmra.mxu0 %v596
    %v632 = vpop.f32.mrf.mxu0
    %v633 = vadd.f32 0.0, %v632
    %v634 = vpop.f32.mrf.mxu0
    %v635 = vpop.f32.mrf.mxu0
    %v636 = vadd.f32 0.0, %v635
    %v637 = vpop.f32.mrf.mxu0
    %638 = vdwg.mxu0
    %639 = vrot.lane.b32.xlu0 %v179, 64
    %v640 = vpop.permute.xlu0 %639
    %v643 = vsel %vm405, %v497, 0
    %645 = vmatprep.subr.bf16.mxu0 0
    %646 = vmatpush1.bf16.msra.mxu0 0
    %647 = vmatprep.subr.bf16.mxu0 0
    %648 = vmatpush1.bf16.msra.mxu0 0
    %649 = vmatprep.subr.bf16.mxu0 0
    %650 = vmatpush1.bf16.msra.mxu0 0
    %651 = vmatprep.subr.bf16.mxu0 0
    %652 = vmatpush1.bf16.msra.mxu0 0
    %653 = vmatprep.subr.bf16.mxu0 0
    %654 = vmatpush1.bf16.msra.mxu0 0
    %655 = vmatprep.subr.bf16.mxu0 0
    %656 = vmatpush1.bf16.msra.mxu0 0
    %657 = vmatprep.subr.bf16.mxu0 0
    %658 = vmatpush1.bf16.msra.mxu0 0
    %659 = vmatprep.subr.bf16.mxu0 0
    %660 = vmatpush1.bf16.msra.mxu0 %v640
    %661 = vmatprep.subr.bf16.mxu0 0
    %662 = vmatpush2.bf16.msra.mxu0 0
    %663 = vmatprep.subr.bf16.mxu0 0
    %664 = vmatpush2.bf16.msra.mxu0 0
    %665 = vmatprep.subr.bf16.mxu0 0
    %666 = vmatpush2.bf16.msra.mxu0 0
    %667 = vmatprep.subr.bf16.mxu0 0
    %668 = vmatpush2.bf16.msra.mxu0 0
    %669 = vmatprep.subr.bf16.mxu0 0
    %670 = vmatpush2.bf16.msra.mxu0 0
    %671 = vmatprep.subr.bf16.mxu0 0
    %672 = vmatpush2.bf16.msra.mxu0 0
    %673 = vmatprep.subr.bf16.mxu0 0
    %674 = vmatpush2.bf16.msra.mxu0 0
    %675 = vmatprep.subr.bf16.mxu0 0
    %676 = vmatpush2.bf16.msra.mxu0 0
    %677 = vmatprep.mubr.bf16.mxu0 0
    %678 = vmatmul.mubr.bf16.gmra.mxu0 %v643
    %v679 = vpop.f32.mrf.mxu0
    %v680 = vadd.f32 0.0, %v679
    %v681 = vpop.f32.mrf.mxu0
    %v682 = vpop.f32.mrf.mxu0
    %v683 = vadd.f32 0.0, %v682
    %v684 = vpop.f32.mrf.mxu0
    %685 = vdwg.mxu0
    %688 = vrot.lane.b32.xlu0 %v586, 8
    %v689 = vpop.permute.xlu0 %688
    %690 = vrot.lane.b32.xlu0 %v589, 8
    %v691 = vpop.permute.xlu0 %690
    %696 = vrot.lane.b32.xlu0 %v633, 16
    %v697 = vpop.permute.xlu0 %696
    %698 = vrot.lane.b32.xlu0 %v636, 16
    %v699 = vpop.permute.xlu0 %698
    %704 = vrot.lane.b32.xlu0 %v680, 24
    %v705 = vpop.permute.xlu0 %704
    %706 = vrot.lane.b32.xlu0 %v683, 24
    %v707 = vpop.permute.xlu0 %706
    %v710 = vsel %vm183, %v539, %v689
    %v711 = vsel %vm183, %v542, %v691
    %v712 = vsel %vm405, %v710, %v697
    %v713 = vsel %vm405, %v711, %v699
    %vm714 = vcmask 195584
    %v715 = vsel %vm714, %v712, %v705
    %v716 = vsel %vm714, %v713, %v707
    %v717 = vpack.c.bf16 %v716, %v715
    %v718 = vlaneseq
    %v719 = vshrl.u32 %v718, 7
    %v720 = vsub.s32 2, %v719
    %v721 = vrot.slane %v90, %v720
    %724 = vrot.lane.b32.xlu0 %v105, 32
    %v725 = vpop.permute.xlu0 %724
    %726 = vrot.lane.b32.xlu0 %v106, 32
    %v727 = vpop.permute.xlu0 %726
    %v731 = vsel %vm111, %v717, 0
    %733 = vmatprep.subr.bf16.mxu0 0
    %734 = vmatpush1.bf16.msra.mxu0 0
    %735 = vmatprep.subr.bf16.mxu0 0
    %736 = vmatpush1.bf16.msra.mxu0 0
    %737 = vmatprep.subr.bf16.mxu0 0
    %738 = vmatpush1.bf16.msra.mxu0 0
    %739 = vmatprep.subr.bf16.mxu0 0
    %740 = vmatpush1.bf16.msra.mxu0 0
    %741 = vmatprep.subr.bf16.mxu0 0
    %742 = vmatpush1.bf16.msra.mxu0 0
    %743 = vmatprep.subr.bf16.mxu0 0
    %744 = vmatpush1.bf16.msra.mxu0 0
    %745 = vmatprep.subr.bf16.mxu0 0
    %746 = vmatpush1.bf16.msra.mxu0 %v727
    %747 = vmatprep.subr.bf16.mxu0 0
    %748 = vmatpush1.bf16.msra.mxu0 %v725
    %749 = vmatprep.subr.bf16.mxu0 0
    %750 = vmatpush2.bf16.msra.mxu0 0
    %751 = vmatprep.subr.bf16.mxu0 0
    %752 = vmatpush2.bf16.msra.mxu0 0
    %753 = vmatprep.subr.bf16.mxu0 0
    %754 = vmatpush2.bf16.msra.mxu0 0
    %755 = vmatprep.subr.bf16.mxu0 0
    %756 = vmatpush2.bf16.msra.mxu0 0
    %757 = vmatprep.subr.bf16.mxu0 0
    %758 = vmatpush2.bf16.msra.mxu0 0
    %759 = vmatprep.subr.bf16.mxu0 0
    %760 = vmatpush2.bf16.msra.mxu0 0
    %761 = vmatprep.subr.bf16.mxu0 0
    %762 = vmatpush2.bf16.msra.mxu0 0
    %763 = vmatprep.subr.bf16.mxu0 0
    %764 = vmatpush2.bf16.msra.mxu0 0
    %765 = vmatprep.mubr.bf16.mxu0 0
    %766 = vmatmul.mubr.bf16.gmra.mxu0 %v731
    %v767 = vpop.f32.mrf.mxu0
    %v768 = vadd.f32 %v721, %v767
    %v769 = vpop.f32.mrf.mxu0
    %v770 = vpop.f32.mrf.mxu0
    %v771 = vadd.f32 %v721, %v770
    %v772 = vpop.f32.mrf.mxu0
    %773 = vdwg.mxu0
    %v774 = vadd.f32 %v76, %v768
    %v775 = vadd.f32 %v77, %v771
    %v776 = vsel %vm111, %v774, 0.0
    %777 = vadd.xlane.f32.xlu0 %v776
    %v778 = vpop.xlane.xlu0 %777
    %v779 = vsel %vm111, %v775, 0.0
    %780 = vadd.xlane.f32.xlu0 %v779
    %v781 = vpop.xlane.xlu0 %780
    %v782 = vrcp.pop 32.0
    %v783 = vmul.f32 %v778, %v782
    %v784 = vmul.f32 %v781, %v782
    %v785 = vsub.f32 %v774, %v783
    %v786 = vsub.f32 %v775, %v784
    %v787 = vmul.f32 %v785, %v785
    %v788 = vmul.f32 %v786, %v786
    %v789 = vsel %vm111, %v787, 0.0
    %790 = vadd.xlane.f32.xlu0 %v789
    %v791 = vpop.xlane.xlu0 %790
    %v792 = vsel %vm111, %v788, 0.0
    %793 = vadd.xlane.f32.xlu0 %v792
    %v794 = vpop.xlane.xlu0 %793
    %v795 = vmul.f32 %v791, %v782
    %v796 = vmul.f32 %v794, %v782
    %v797 = vadd.f32 %v795, 1e-05
    %v798 = vadd.f32 %v796, 1e-05
    %v799 = vrsqrt.pop %v797
    %v800 = vrsqrt.pop %v798
    %v801 = vmul.f32 %v785, %v799
    %v802 = vmul.f32 %v786, %v800
    %v803 = vlaneseq
    %v804 = vshrl.u32 %v803, 7
    %v805 = vsub.s32 3, %v804
    %v806 = vrot.slane %v90, %v805
    %v807 = vmul.f32 %v801, %v806
    %v808 = vmul.f32 %v802, %v806
    %v809 = vlaneseq
    %v810 = vshrl.u32 %v809, 7
    %v811 = vsub.s32 4, %v810
    %v812 = vrot.slane %v90, %v811
    %v813 = vadd.f32 %v807, %v812
    %v814 = vadd.f32 %v808, %v812
    %v815 = vmul.f32 %v813, %v74
    %v816 = vmul.f32 %v814, %v75
    %v817 = vpack.c.bf16 %v816, %v815
    %v818 = vpack.c.bf16 %v87, %v86
    %v819 = vpack.c.bf16 %v89, %v88
    %v820 = vlaneseq
    %v821 = vshrl.u32 %v820, 7
    %v822 = vsub.s32 1, %v821
    %v823 = vrot.slane %v90, %v822
    %v825 = vsel %vm111, %v817, 0
    %827 = vmatprep.subr.bf16.mxu0 0
    %828 = vmatpush1.bf16.msra.mxu0 0
    %829 = vmatprep.subr.bf16.mxu0 0
    %830 = vmatpush1.bf16.msra.mxu0 0
    %831 = vmatprep.subr.bf16.mxu0 0
    %832 = vmatpush1.bf16.msra.mxu0 0
    %833 = vmatprep.subr.bf16.mxu0 0
    %834 = vmatpush1.bf16.msra.mxu0 0
    %835 = vmatprep.subr.bf16.mxu0 0
    %836 = vmatpush1.bf16.msra.mxu0 0
    %837 = vmatprep.subr.bf16.mxu0 0
    %838 = vmatpush1.bf16.msra.mxu0 0
    %839 = vmatprep.subr.bf16.mxu0 0
    %840 = vmatpush1.bf16.msra.mxu0 %v819
    %841 = vmatprep.subr.bf16.mxu0 0
    %842 = vmatpush1.bf16.msra.mxu0 %v818
    %843 = vmatprep.subr.bf16.mxu0 0
    %844 = vmatpush2.bf16.msra.mxu0 0
    %845 = vmatprep.subr.bf16.mxu0 0
    %846 = vmatpush2.bf16.msra.mxu0 0
    %847 = vmatprep.subr.bf16.mxu0 0
    %848 = vmatpush2.bf16.msra.mxu0 0
    %849 = vmatprep.subr.bf16.mxu0 0
    %850 = vmatpush2.bf16.msra.mxu0 0
    %851 = vmatprep.subr.bf16.mxu0 0
    %852 = vmatpush2.bf16.msra.mxu0 0
    %853 = vmatprep.subr.bf16.mxu0 0
    %854 = vmatpush2.bf16.msra.mxu0 0
    %855 = vmatprep.subr.bf16.mxu0 0
    %856 = vmatpush2.bf16.msra.mxu0 0
    %857 = vmatprep.subr.bf16.mxu0 0
    %858 = vmatpush2.bf16.msra.mxu0 0
    %859 = vmatprep.mubr.bf16.mxu0 0
    %860 = vmatmul.mubr.bf16.gmra.mxu0 %v825
    %v861 = vpop.f32.mrf.mxu0
    %v862 = vadd.f32 %v823, %v861
    %v863 = vpop.f32.mrf.mxu0
    %v864 = vpop.f32.mrf.mxu0
    %v865 = vadd.f32 %v823, %v864
    %v866 = vpop.f32.mrf.mxu0
    %867 = vdwg.mxu0
    %v868 = vpack.c.bf16 %v79, %v78
    %871 = vrot.lane.b32.xlu0 %v818, 96
    %v872 = vpop.permute.xlu0 %871
    %873 = vrot.lane.b32.xlu0 %v819, 96
    %v874 = vpop.permute.xlu0 %873
    %878 = vrot.lane.b32.xlu0 %v823, 96
    %v879 = vpop.permute.xlu0 %878
    %v882 = vsel %vm111, %v868, 0
    %884 = vmatprep.subr.bf16.mxu0 0
    %885 = vmatpush1.bf16.msra.mxu0 0
    %886 = vmatprep.subr.bf16.mxu0 0
    %887 = vmatpush1.bf16.msra.mxu0 0
    %888 = vmatprep.subr.bf16.mxu0 0
    %889 = vmatpush1.bf16.msra.mxu0 0
    %890 = vmatprep.subr.bf16.mxu0 0
    %891 = vmatpush1.bf16.msra.mxu0 0
    %892 = vmatprep.subr.bf16.mxu0 0
    %893 = vmatpush1.bf16.msra.mxu0 0
    %894 = vmatprep.subr.bf16.mxu0 0
    %895 = vmatpush1.bf16.msra.mxu0 0
    %896 = vmatprep.subr.bf16.mxu0 0
    %897 = vmatpush1.bf16.msra.mxu0 %v874
    %898 = vmatprep.subr.bf16.mxu0 0
    %899 = vmatpush1.bf16.msra.mxu0 %v872
    %900 = vmatprep.subr.bf16.mxu0 0
    %901 = vmatpush2.bf16.msra.mxu0 0
    %902 = vmatprep.subr.bf16.mxu0 0
    %903 = vmatpush2.bf16.msra.mxu0 0
    %904 = vmatprep.subr.bf16.mxu0 0
    %905 = vmatpush2.bf16.msra.mxu0 0
    %906 = vmatprep.subr.bf16.mxu0 0
    %907 = vmatpush2.bf16.msra.mxu0 0
    %908 = vmatprep.subr.bf16.mxu0 0
    %909 = vmatpush2.bf16.msra.mxu0 0
    %910 = vmatprep.subr.bf16.mxu0 0
    %911 = vmatpush2.bf16.msra.mxu0 0
    %912 = vmatprep.subr.bf16.mxu0 0
    %913 = vmatpush2.bf16.msra.mxu0 0
    %914 = vmatprep.subr.bf16.mxu0 0
    %915 = vmatpush2.bf16.msra.mxu0 0
    %916 = vmatprep.mubr.bf16.mxu0 0
    %917 = vmatmul.mubr.bf16.gmra.mxu0 %v882
    %v918 = vpop.f32.mrf.mxu0
    %v919 = vadd.f32 %v879, %v918
    %v920 = vpop.f32.mrf.mxu0
    %v921 = vpop.f32.mrf.mxu0
    %v922 = vadd.f32 %v879, %v921
    %v923 = vpop.f32.mrf.mxu0
    %924 = vdwg.mxu0
    %927 = vrot.lane.b32.xlu0 %v862, 120
    %v928 = vpop.permute.xlu0 %927
    %929 = vrot.lane.b32.xlu0 %v865, 120
    %v930 = vpop.permute.xlu0 %929
    %933 = vrot.lane.b32.xlu0 %v862, 112
    %v934 = vpop.permute.xlu0 %933
    %935 = vrot.lane.b32.xlu0 %v865, 112
    %v936 = vpop.permute.xlu0 %935
    %939 = vrot.lane.b32.xlu0 %v862, 104
    %v940 = vpop.permute.xlu0 %939
    %941 = vrot.lane.b32.xlu0 %v865, 104
    %v942 = vpop.permute.xlu0 %941
    %947 = vrot.lane.b32.xlu0 %v919, 120
    %v948 = vpop.permute.xlu0 %947
    %949 = vrot.lane.b32.xlu0 %v922, 120
    %v950 = vpop.permute.xlu0 %949
    %953 = vrot.lane.b32.xlu0 %v919, 112
    %v954 = vpop.permute.xlu0 %953
    %955 = vrot.lane.b32.xlu0 %v922, 112
    %v956 = vpop.permute.xlu0 %955
    %959 = vrot.lane.b32.xlu0 %v919, 104
    %v960 = vpop.permute.xlu0 %959
    %961 = vrot.lane.b32.xlu0 %v922, 104
    %v962 = vpop.permute.xlu0 %961
    %v965 = vpack.c.bf16 %v865, %v862
    %v966 = vpack.c.bf16 %v930, %v928
    %v967 = vpack.c.bf16 %v936, %v934
    %v968 = vpack.c.bf16 %v942, %v940
    %v969 = vpack.c.bf16 %v922, %v919
    %v970 = vpack.c.bf16 %v950, %v948
    %v971 = vpack.c.bf16 %v956, %v954
    %v972 = vpack.c.bf16 %v962, %v960
    %v974 = vsel %vm183, %v965, 0
    %v977 = vsel %vm183, %v969, 0
    %979 = vmatprep.subr.bf16.mxu0 0
    %980 = vmatpush1.bf16.xpose.msra.mxu0 0
    %981 = vmatprep.subr.bf16.mxu0 0
    %982 = vmatpush1.bf16.xpose.msra.mxu0 0
    %983 = vmatprep.subr.bf16.mxu0 0
    %984 = vmatpush1.bf16.xpose.msra.mxu0 0
    %985 = vmatprep.subr.bf16.mxu0 0
    %986 = vmatpush1.bf16.xpose.msra.mxu0 0
    %987 = vmatprep.subr.bf16.mxu0 0
    %988 = vmatpush1.bf16.xpose.msra.mxu0 0
    %989 = vmatprep.subr.bf16.mxu0 0
    %990 = vmatpush1.bf16.xpose.msra.mxu0 0
    %991 = vmatprep.subr.bf16.mxu0 0
    %992 = vmatpush1.bf16.xpose.msra.mxu0 0
    %993 = vmatprep.subr.bf16.mxu0 0
    %994 = vmatpush1.bf16.xpose.msra.mxu0 %v977
    %995 = vmatprep.subr.bf16.mxu0 0
    %996 = vmatpush2.bf16.xpose.msra.mxu0 0
    %997 = vmatprep.subr.bf16.mxu0 0
    %998 = vmatpush2.bf16.xpose.msra.mxu0 0
    %999 = vmatprep.subr.bf16.mxu0 0
    %1000 = vmatpush2.bf16.xpose.msra.mxu0 0
    %1001 = vmatprep.subr.bf16.mxu0 0
    %1002 = vmatpush2.bf16.xpose.msra.mxu0 0
    %1003 = vmatprep.subr.bf16.mxu0 0
    %1004 = vmatpush2.bf16.xpose.msra.mxu0 0
    %1005 = vmatprep.subr.bf16.mxu0 0
    %1006 = vmatpush2.bf16.xpose.msra.mxu0 0
    %1007 = vmatprep.subr.bf16.mxu0 0
    %1008 = vmatpush2.bf16.xpose.msra.mxu0 0
    %1009 = vmatprep.subr.bf16.mxu0 0
    %1010 = vmatpush2.bf16.xpose.msra.mxu0 0
    %1011 = vmatprep.mubr.bf16.mxu0 0
    %1012 = vmatmul.mubr.bf16.gmra.mxu0 %v974
    %v1013 = vpop.f32.mrf.mxu0
    %v1014 = vadd.f32 0.0, %v1013
    %v1015 = vpop.f32.mrf.mxu0
    %v1016 = vpop.f32.mrf.mxu0
    %v1017 = vadd.f32 0.0, %v1016
    %v1018 = vpop.f32.mrf.mxu0
    %1019 = vdwg.mxu0
    %v1021 = vsel %vm183, %v966, 0
    %v1024 = vsel %vm183, %v970, 0
    %1026 = vmatprep.subr.bf16.mxu0 0
    %1027 = vmatpush1.bf16.xpose.msra.mxu0 0
    %1028 = vmatprep.subr.bf16.mxu0 0
    %1029 = vmatpush1.bf16.xpose.msra.mxu0 0
    %1030 = vmatprep.subr.bf16.mxu0 0
    %1031 = vmatpush1.bf16.xpose.msra.mxu0 0
    %1032 = vmatprep.subr.bf16.mxu0 0
    %1033 = vmatpush1.bf16.xpose.msra.mxu0 0
    %1034 = vmatprep.subr.bf16.mxu0 0
    %1035 = vmatpush1.bf16.xpose.msra.mxu0 0
    %1036 = vmatprep.subr.bf16.mxu0 0
    %1037 = vmatpush1.bf16.xpose.msra.mxu0 0
    %1038 = vmatprep.subr.bf16.mxu0 0
    %1039 = vmatpush1.bf16.xpose.msra.mxu0 0
    %1040 = vmatprep.subr.bf16.mxu0 0
    %1041 = vmatpush1.bf16.xpose.msra.mxu0 %v1024
    %1042 = vmatprep.subr.bf16.mxu0 0
    %1043 = vmatpush2.bf16.xpose.msra.mxu0 0
    %1044 = vmatprep.subr.bf16.mxu0 0
    %1045 = vmatpush2.bf16.xpose.msra.mxu0 0
    %1046 = vmatprep.subr.bf16.mxu0 0
    %1047 = vmatpush2.bf16.xpose.msra.mxu0 0
    %1048 = vmatprep.subr.bf16.mxu0 0
    %1049 = vmatpush2.bf16.xpose.msra.mxu0 0
    %1050 = vmatprep.subr.bf16.mxu0 0
    %1051 = vmatpush2.bf16.xpose.msra.mxu0 0
    %1052 = vmatprep.subr.bf16.mxu0 0
    %1053 = vmatpush2.bf16.xpose.msra.mxu0 0
    %1054 = vmatprep.subr.bf16.mxu0 0
    %1055 = vmatpush2.bf16.xpose.msra.mxu0 0
    %1056 = vmatprep.subr.bf16.mxu0 0
    %1057 = vmatpush2.bf16.xpose.msra.mxu0 0
    %1058 = vmatprep.mubr.bf16.mxu0 0
    %1059 = vmatmul.mubr.bf16.gmra.mxu0 %v1021
    %v1060 = vpop.f32.mrf.mxu0
    %v1061 = vadd.f32 0.0, %v1060
    %v1062 = vpop.f32.mrf.mxu0
    %v1063 = vpop.f32.mrf.mxu0
    %v1064 = vadd.f32 0.0, %v1063
    %v1065 = vpop.f32.mrf.mxu0
    %1066 = vdwg.mxu0
    %v1068 = vsel %vm183, %v967, 0
    %v1071 = vsel %vm183, %v971, 0
    %1073 = vmatprep.subr.bf16.mxu0 0
    %1074 = vmatpush1.bf16.xpose.msra.mxu0 0
    %1075 = vmatprep.subr.bf16.mxu0 0
    %1076 = vmatpush1.bf16.xpose.msra.mxu0 0
    %1077 = vmatprep.subr.bf16.mxu0 0
    %1078 = vmatpush1.bf16.xpose.msra.mxu0 0
    %1079 = vmatprep.subr.bf16.mxu0 0
    %1080 = vmatpush1.bf16.xpose.msra.mxu0 0
    %1081 = vmatprep.subr.bf16.mxu0 0
    %1082 = vmatpush1.bf16.xpose.msra.mxu0 0
    %1083 = vmatprep.subr.bf16.mxu0 0
    %1084 = vmatpush1.bf16.xpose.msra.mxu0 0
    %1085 = vmatprep.subr.bf16.mxu0 0
    %1086 = vmatpush1.bf16.xpose.msra.mxu0 0
    %1087 = vmatprep.subr.bf16.mxu0 0
    %1088 = vmatpush1.bf16.xpose.msra.mxu0 %v1071
    %1089 = vmatprep.subr.bf16.mxu0 0
    %1090 = vmatpush2.bf16.xpose.msra.mxu0 0
    %1091 = vmatprep.subr.bf16.mxu0 0
    %1092 = vmatpush2.bf16.xpose.msra.mxu0 0
    %1093 = vmatprep.subr.bf16.mxu0 0
    %1094 = vmatpush2.bf16.xpose.msra.mxu0 0
    %1095 = vmatprep.subr.bf16.mxu0 0
    %1096 = vmatpush2.bf16.xpose.msra.mxu0 0
    %1097 = vmatprep.subr.bf16.mxu0 0
    %1098 = vmatpush2.bf16.xpose.msra.mxu0 0
    %1099 = vmatprep.subr.bf16.mxu0 0
    %1100 = vmatpush2.bf16.xpose.msra.mxu0 0
    %1101 = vmatprep.subr.bf16.mxu0 0
    %1102 = vmatpush2.bf16.xpose.msra.mxu0 0
    %1103 = vmatprep.subr.bf16.mxu0 0
    %1104 = vmatpush2.bf16.xpose.msra.mxu0 0
    %1105 = vmatprep.mubr.bf16.mxu0 0
    %1106 = vmatmul.mubr.bf16.gmra.mxu0 %v1068
    %v1107 = vpop.f32.mrf.mxu0
    %v1108 = vadd.f32 0.0, %v1107
    %v1109 = vpop.f32.mrf.mxu0
    %v1110 = vpop.f32.mrf.mxu0
    %v1111 = vadd.f32 0.0, %v1110
    %v1112 = vpop.f32.mrf.mxu0
    %1113 = vdwg.mxu0
    %v1115 = vsel %vm183, %v968, 0
    %v1118 = vsel %vm183, %v972, 0
    %1120 = vmatprep.subr.bf16.mxu0 0
    %1121 = vmatpush1.bf16.xpose.msra.mxu0 0
    %1122 = vmatprep.subr.bf16.mxu0 0
    %1123 = vmatpush1.bf16.xpose.msra.mxu0 0
    %1124 = vmatprep.subr.bf16.mxu0 0
    %1125 = vmatpush1.bf16.xpose.msra.mxu0 0
    %1126 = vmatprep.subr.bf16.mxu0 0
    %1127 = vmatpush1.bf16.xpose.msra.mxu0 0
    %1128 = vmatprep.subr.bf16.mxu0 0
    %1129 = vmatpush1.bf16.xpose.msra.mxu0 0
    %1130 = vmatprep.subr.bf16.mxu0 0
    %1131 = vmatpush1.bf16.xpose.msra.mxu0 0
    %1132 = vmatprep.subr.bf16.mxu0 0
    %1133 = vmatpush1.bf16.xpose.msra.mxu0 0
    %1134 = vmatprep.subr.bf16.mxu0 0
    %1135 = vmatpush1.bf16.xpose.msra.mxu0 %v1118
    %1136 = vmatprep.subr.bf16.mxu0 0
    %1137 = vmatpush2.bf16.xpose.msra.mxu0 0
    %1138 = vmatprep.subr.bf16.mxu0 0
    %1139 = vmatpush2.bf16.xpose.msra.mxu0 0
    %1140 = vmatprep.subr.bf16.mxu0 0
    %1141 = vmatpush2.bf16.xpose.msra.mxu0 0
    %1142 = vmatprep.subr.bf16.mxu0 0
    %1143 = vmatpush2.bf16.xpose.msra.mxu0 0
    %1144 = vmatprep.subr.bf16.mxu0 0
    %1145 = vmatpush2.bf16.xpose.msra.mxu0 0
    %1146 = vmatprep.subr.bf16.mxu0 0
    %1147 = vmatpush2.bf16.xpose.msra.mxu0 0
    %1148 = vmatprep.subr.bf16.mxu0 0
    %1149 = vmatpush2.bf16.xpose.msra.mxu0 0
    %1150 = vmatprep.subr.bf16.mxu0 0
    %1151 = vmatpush2.bf16.xpose.msra.mxu0 0
    %1152 = vmatprep.mubr.bf16.mxu0 0
    %1153 = vmatmul.mubr.bf16.gmra.mxu0 %v1115
    %v1154 = vpop.f32.mrf.mxu0
    %v1155 = vadd.f32 0.0, %v1154
    %v1156 = vpop.f32.mrf.mxu0
    %v1157 = vpop.f32.mrf.mxu0
    %v1158 = vadd.f32 0.0, %v1157
    %v1159 = vpop.f32.mrf.mxu0
    %1160 = vdwg.mxu0
    %v1161 = vmul.f32 %v1014, 0.35355338
    %v1162 = vmul.f32 %v1017, 0.35355338
    %v1163 = vmul.f32 %v1061, 0.35355338
    %v1164 = vmul.f32 %v1064, 0.35355338
    %v1165 = vmul.f32 %v1108, 0.35355338
    %v1166 = vmul.f32 %v1111, 0.35355338
    %v1167 = vmul.f32 %v1155, 0.35355338
    %v1168 = vmul.f32 %v1158, 0.35355338
    %1169 = vrot.lane.b32.xlu0 %v74, 80
    %v1170 = vpop.permute.xlu0 %1169
    %1171 = vrot.lane.b32.xlu0 %v75, 80
    %v1172 = vpop.permute.xlu0 %1171
    %v1175 = vadd.f32 %v1161, %v1170
    %v1176 = vadd.f32 %v1162, %v1172
    %v1177 = vadd.f32 %v1163, %v1170
    %v1178 = vadd.f32 %v1164, %v1172
    %v1179 = vadd.f32 %v1165, %v1170
    %v1180 = vadd.f32 %v1166, %v1172
    %v1181 = vadd.f32 %v1167, %v1170
    %v1182 = vadd.f32 %v1168, %v1172
    %v1183 = vsel %vm405, %v1175, -inf
    %1184 = vmax.xlane.f32.xlu0 %v1183
    %v1185 = vpop.xlane.xlu0 %1184
    %v1186 = vsel %vm405, %v1176, -inf
    %1187 = vmax.xlane.f32.xlu0 %v1186
    %v1188 = vpop.xlane.xlu0 %1187
    %v1189 = vsel %vm405, %v1177, -inf
    %1190 = vmax.xlane.f32.xlu0 %v1189
    %v1191 = vpop.xlane.xlu0 %1190
    %v1192 = vsel %vm405, %v1178, -inf
    %1193 = vmax.xlane.f32.xlu0 %v1192
    %v1194 = vpop.xlane.xlu0 %1193
    %v1195 = vsel %vm405, %v1179, -inf
    %1196 = vmax.xlane.f32.xlu0 %v1195
    %v1197 = vpop.xlane.xlu0 %1196
    %v1198 = vsel %vm405, %v1180, -inf
    %1199 = vmax.xlane.f32.xlu0 %v1198
    %v1200 = vpop.xlane.xlu0 %1199
    %v1201 = vsel %vm405, %v1181, -inf
    %1202 = vmax.xlane.f32.xlu0 %v1201
    %v1203 = vpop.xlane.xlu0 %1202
    %v1204 = vsel %vm405, %v1182, -inf
    %1205 = vmax.xlane.f32.xlu0 %v1204
    %v1206 = vpop.xlane.xlu0 %1205
    %v1207 = vsub.f32 %v1175, %v1185
    %v1208 = vsub.f32 %v1176, %v1188
    %v1209 = vsub.f32 %v1177, %v1191
    %v1210 = vsub.f32 %v1178, %v1194
    %v1211 = vsub.f32 %v1179, %v1197
    %v1212 = vsub.f32 %v1180, %v1200
    %v1213 = vsub.f32 %v1181, %v1203
    %v1214 = vsub.f32 %v1182, %v1206
    %v1215 = vmul.f32 %v1207, 1.442695
    %v1216 = vpow.pop %v1215
    %v1217 = vmul.f32 %v1208, 1.442695
    %v1218 = vpow.pop %v1217
    %v1219 = vmul.f32 %v1209, 1.442695
    %v1220 = vpow.pop %v1219
    %v1221 = vmul.f32 %v1210, 1.442695
    %v1222 = vpow.pop %v1221
    %v1223 = vmul.f32 %v1211, 1.442695
    %v1224 = vpow.pop %v1223
    %v1225 = vmul.f32 %v1212, 1.442695
    %v1226 = vpow.pop %v1225
    %v1227 = vmul.f32 %v1213, 1.442695
    %v1228 = vpow.pop %v1227
    %v1229 = vmul.f32 %v1214, 1.442695
    %v1230 = vpow.pop %v1229
    %v1231 = vsel %vm405, %v1216, 0.0
    %1232 = vadd.xlane.f32.xlu0 %v1231
    %v1233 = vpop.xlane.xlu0 %1232
    %v1234 = vsel %vm405, %v1218, 0.0
    %1235 = vadd.xlane.f32.xlu0 %v1234
    %v1236 = vpop.xlane.xlu0 %1235
    %v1237 = vsel %vm405, %v1220, 0.0
    %1238 = vadd.xlane.f32.xlu0 %v1237
    %v1239 = vpop.xlane.xlu0 %1238
    %v1240 = vsel %vm405, %v1222, 0.0
    %1241 = vadd.xlane.f32.xlu0 %v1240
    %v1242 = vpop.xlane.xlu0 %1241
    %v1243 = vsel %vm405, %v1224, 0.0
    %1244 = vadd.xlane.f32.xlu0 %v1243
    %v1245 = vpop.xlane.xlu0 %1244
    %v1246 = vsel %vm405, %v1226, 0.0
    %1247 = vadd.xlane.f32.xlu0 %v1246
    %v1248 = vpop.xlane.xlu0 %1247
    %v1249 = vsel %vm405, %v1228, 0.0
    %1250 = vadd.xlane.f32.xlu0 %v1249
    %v1251 = vpop.xlane.xlu0 %1250
    %v1252 = vsel %vm405, %v1230, 0.0
    %1253 = vadd.xlane.f32.xlu0 %v1252
    %v1254 = vpop.xlane.xlu0 %1253
    %v1255 = vrcp.pop %v1233
    %v1256 = vrcp.pop %v1236
    %v1257 = vrcp.pop %v1239
    %v1258 = vrcp.pop %v1242
    %v1259 = vrcp.pop %v1245
    %v1260 = vrcp.pop %v1248
    %v1261 = vrcp.pop %v1251
    %v1262 = vrcp.pop %v1254
    %v1263 = vmul.f32 %v1216, %v1255
    %v1264 = vmul.f32 %v1218, %v1256
    %v1265 = vmul.f32 %v1220, %v1257
    %v1266 = vmul.f32 %v1222, %v1258
    %v1267 = vmul.f32 %v1224, %v1259
    %v1268 = vmul.f32 %v1226, %v1260
    %v1269 = vmul.f32 %v1228, %v1261
    %v1270 = vmul.f32 %v1230, %v1262
    %v1271 = vpack.c.bf16 %v1264, %v1263
    %v1272 = vpack.c.bf16 %v1266, %v1265
    %v1273 = vpack.c.bf16 %v1268, %v1267
    %v1274 = vpack.c.bf16 %v1270, %v1269
    %1276 = vrot.lane.b32.xlu0 %v969, 96
    %v1277 = vpop.permute.xlu0 %1276
    %v1280 = vsel %vm405, %v1271, 0
    %1282 = vmatprep.subr.bf16.mxu0 0
    %1283 = vmatpush1.bf16.msra.mxu0 0
    %1284 = vmatprep.subr.bf16.mxu0 0
    %1285 = vmatpush1.bf16.msra.mxu0 0
    %1286 = vmatprep.subr.bf16.mxu0 0
    %1287 = vmatpush1.bf16.msra.mxu0 0
    %1288 = vmatprep.subr.bf16.mxu0 0
    %1289 = vmatpush1.bf16.msra.mxu0 0
    %1290 = vmatprep.subr.bf16.mxu0 0
    %1291 = vmatpush1.bf16.msra.mxu0 0
    %1292 = vmatprep.subr.bf16.mxu0 0
    %1293 = vmatpush1.bf16.msra.mxu0 0
    %1294 = vmatprep.subr.bf16.mxu0 0
    %1295 = vmatpush1.bf16.msra.mxu0 0
    %1296 = vmatprep.subr.bf16.mxu0 0
    %1297 = vmatpush1.bf16.msra.mxu0 %v1277
    %1298 = vmatprep.subr.bf16.mxu0 0
    %1299 = vmatpush2.bf16.msra.mxu0 0
    %1300 = vmatprep.subr.bf16.mxu0 0
    %1301 = vmatpush2.bf16.msra.mxu0 0
    %1302 = vmatprep.subr.bf16.mxu0 0
    %1303 = vmatpush2.bf16.msra.mxu0 0
    %1304 = vmatprep.subr.bf16.mxu0 0
    %1305 = vmatpush2.bf16.msra.mxu0 0
    %1306 = vmatprep.subr.bf16.mxu0 0
    %1307 = vmatpush2.bf16.msra.mxu0 0
    %1308 = vmatprep.subr.bf16.mxu0 0
    %1309 = vmatpush2.bf16.msra.mxu0 0
    %1310 = vmatprep.subr.bf16.mxu0 0
    %1311 = vmatpush2.bf16.msra.mxu0 0
    %1312 = vmatprep.subr.bf16.mxu0 0
    %1313 = vmatpush2.bf16.msra.mxu0 0
    %1314 = vmatprep.mubr.bf16.mxu0 0
    %1315 = vmatmul.mubr.bf16.gmra.mxu0 %v1280
    %v1316 = vpop.f32.mrf.mxu0
    %v1317 = vadd.f32 0.0, %v1316
    %v1318 = vpop.f32.mrf.mxu0
    %v1319 = vpop.f32.mrf.mxu0
    %v1320 = vadd.f32 0.0, %v1319
    %v1321 = vpop.f32.mrf.mxu0
    %1322 = vdwg.mxu0
    %1324 = vrot.lane.b32.xlu0 %v970, 96
    %v1325 = vpop.permute.xlu0 %1324
    %v1328 = vsel %vm405, %v1272, 0
    %1330 = vmatprep.subr.bf16.mxu0 0
    %1331 = vmatpush1.bf16.msra.mxu0 0
    %1332 = vmatprep.subr.bf16.mxu0 0
    %1333 = vmatpush1.bf16.msra.mxu0 0
    %1334 = vmatprep.subr.bf16.mxu0 0
    %1335 = vmatpush1.bf16.msra.mxu0 0
    %1336 = vmatprep.subr.bf16.mxu0 0
    %1337 = vmatpush1.bf16.msra.mxu0 0
    %1338 = vmatprep.subr.bf16.mxu0 0
    %1339 = vmatpush1.bf16.msra.mxu0 0
    %1340 = vmatprep.subr.bf16.mxu0 0
    %1341 = vmatpush1.bf16.msra.mxu0 0
    %1342 = vmatprep.subr.bf16.mxu0 0
    %1343 = vmatpush1.bf16.msra.mxu0 0
    %1344 = vmatprep.subr.bf16.mxu0 0
    %1345 = vmatpush1.bf16.msra.mxu0 %v1325
    %1346 = vmatprep.subr.bf16.mxu0 0
    %1347 = vmatpush2.bf16.msra.mxu0 0
    %1348 = vmatprep.subr.bf16.mxu0 0
    %1349 = vmatpush2.bf16.msra.mxu0 0
    %1350 = vmatprep.subr.bf16.mxu0 0
    %1351 = vmatpush2.bf16.msra.mxu0 0
    %1352 = vmatprep.subr.bf16.mxu0 0
    %1353 = vmatpush2.bf16.msra.mxu0 0
    %1354 = vmatprep.subr.bf16.mxu0 0
    %1355 = vmatpush2.bf16.msra.mxu0 0
    %1356 = vmatprep.subr.bf16.mxu0 0
    %1357 = vmatpush2.bf16.msra.mxu0 0
    %1358 = vmatprep.subr.bf16.mxu0 0
    %1359 = vmatpush2.bf16.msra.mxu0 0
    %1360 = vmatprep.subr.bf16.mxu0 0
    %1361 = vmatpush2.bf16.msra.mxu0 0
    %1362 = vmatprep.mubr.bf16.mxu0 0
    %1363 = vmatmul.mubr.bf16.gmra.mxu0 %v1328
    %v1364 = vpop.f32.mrf.mxu0
    %v1365 = vadd.f32 0.0, %v1364
    %v1366 = vpop.f32.mrf.mxu0
    %v1367 = vpop.f32.mrf.mxu0
    %v1368 = vadd.f32 0.0, %v1367
    %v1369 = vpop.f32.mrf.mxu0
    %1370 = vdwg.mxu0
    %1372 = vrot.lane.b32.xlu0 %v971, 96
    %v1373 = vpop.permute.xlu0 %1372
    %v1376 = vsel %vm405, %v1273, 0
    %1378 = vmatprep.subr.bf16.mxu0 0
    %1379 = vmatpush1.bf16.msra.mxu0 0
    %1380 = vmatprep.subr.bf16.mxu0 0
    %1381 = vmatpush1.bf16.msra.mxu0 0
    %1382 = vmatprep.subr.bf16.mxu0 0
    %1383 = vmatpush1.bf16.msra.mxu0 0
    %1384 = vmatprep.subr.bf16.mxu0 0
    %1385 = vmatpush1.bf16.msra.mxu0 0
    %1386 = vmatprep.subr.bf16.mxu0 0
    %1387 = vmatpush1.bf16.msra.mxu0 0
    %1388 = vmatprep.subr.bf16.mxu0 0
    %1389 = vmatpush1.bf16.msra.mxu0 0
    %1390 = vmatprep.subr.bf16.mxu0 0
    %1391 = vmatpush1.bf16.msra.mxu0 0
    %1392 = vmatprep.subr.bf16.mxu0 0
    %1393 = vmatpush1.bf16.msra.mxu0 %v1373
    %1394 = vmatprep.subr.bf16.mxu0 0
    %1395 = vmatpush2.bf16.msra.mxu0 0
    %1396 = vmatprep.subr.bf16.mxu0 0
    %1397 = vmatpush2.bf16.msra.mxu0 0
    %1398 = vmatprep.subr.bf16.mxu0 0
    %1399 = vmatpush2.bf16.msra.mxu0 0
    %1400 = vmatprep.subr.bf16.mxu0 0
    %1401 = vmatpush2.bf16.msra.mxu0 0
    %1402 = vmatprep.subr.bf16.mxu0 0
    %1403 = vmatpush2.bf16.msra.mxu0 0
    %1404 = vmatprep.subr.bf16.mxu0 0
    %1405 = vmatpush2.bf16.msra.mxu0 0
    %1406 = vmatprep.subr.bf16.mxu0 0
    %1407 = vmatpush2.bf16.msra.mxu0 0
    %1408 = vmatprep.subr.bf16.mxu0 0
    %1409 = vmatpush2.bf16.msra.mxu0 0
    %1410 = vmatprep.mubr.bf16.mxu0 0
    %1411 = vmatmul.mubr.bf16.gmra.mxu0 %v1376
    %v1412 = vpop.f32.mrf.mxu0
    %v1413 = vadd.f32 0.0, %v1412
    %v1414 = vpop.f32.mrf.mxu0
    %v1415 = vpop.f32.mrf.mxu0
    %v1416 = vadd.f32 0.0, %v1415
    %v1417 = vpop.f32.mrf.mxu0
    %1418 = vdwg.mxu0
    %1420 = vrot.lane.b32.xlu0 %v972, 96
    %v1421 = vpop.permute.xlu0 %1420
    %v1424 = vsel %vm405, %v1274, 0
    %1426 = vmatprep.subr.bf16.mxu0 0
    %1427 = vmatpush1.bf16.msra.mxu0 0
    %1428 = vmatprep.subr.bf16.mxu0 0
    %1429 = vmatpush1.bf16.msra.mxu0 0
    %1430 = vmatprep.subr.bf16.mxu0 0
    %1431 = vmatpush1.bf16.msra.mxu0 0
    %1432 = vmatprep.subr.bf16.mxu0 0
    %1433 = vmatpush1.bf16.msra.mxu0 0
    %1434 = vmatprep.subr.bf16.mxu0 0
    %1435 = vmatpush1.bf16.msra.mxu0 0
    %1436 = vmatprep.subr.bf16.mxu0 0
    %1437 = vmatpush1.bf16.msra.mxu0 0
    %1438 = vmatprep.subr.bf16.mxu0 0
    %1439 = vmatpush1.bf16.msra.mxu0 0
    %1440 = vmatprep.subr.bf16.mxu0 0
    %1441 = vmatpush1.bf16.msra.mxu0 %v1421
    %1442 = vmatprep.subr.bf16.mxu0 0
    %1443 = vmatpush2.bf16.msra.mxu0 0
    %1444 = vmatprep.subr.bf16.mxu0 0
    %1445 = vmatpush2.bf16.msra.mxu0 0
    %1446 = vmatprep.subr.bf16.mxu0 0
    %1447 = vmatpush2.bf16.msra.mxu0 0
    %1448 = vmatprep.subr.bf16.mxu0 0
    %1449 = vmatpush2.bf16.msra.mxu0 0
    %1450 = vmatprep.subr.bf16.mxu0 0
    %1451 = vmatpush2.bf16.msra.mxu0 0
    %1452 = vmatprep.subr.bf16.mxu0 0
    %1453 = vmatpush2.bf16.msra.mxu0 0
    %1454 = vmatprep.subr.bf16.mxu0 0
    %1455 = vmatpush2.bf16.msra.mxu0 0
    %1456 = vmatprep.subr.bf16.mxu0 0
    %1457 = vmatpush2.bf16.msra.mxu0 0
    %1458 = vmatprep.mubr.bf16.mxu0 0
    %1459 = vmatmul.mubr.bf16.gmra.mxu0 %v1424
    %v1460 = vpop.f32.mrf.mxu0
    %v1461 = vadd.f32 0.0, %v1460
    %v1462 = vpop.f32.mrf.mxu0
    %v1463 = vpop.f32.mrf.mxu0
    %v1464 = vadd.f32 0.0, %v1463
    %v1465 = vpop.f32.mrf.mxu0
    %1466 = vdwg.mxu0
    %1469 = vrot.lane.b32.xlu0 %v1365, 8
    %v1470 = vpop.permute.xlu0 %1469
    %1471 = vrot.lane.b32.xlu0 %v1368, 8
    %v1472 = vpop.permute.xlu0 %1471
    %1477 = vrot.lane.b32.xlu0 %v1413, 16
    %v1478 = vpop.permute.xlu0 %1477
    %1479 = vrot.lane.b32.xlu0 %v1416, 16
    %v1480 = vpop.permute.xlu0 %1479
    %1485 = vrot.lane.b32.xlu0 %v1461, 24
    %v1486 = vpop.permute.xlu0 %1485
    %1487 = vrot.lane.b32.xlu0 %v1464, 24
    %v1488 = vpop.permute.xlu0 %1487
    %v1491 = vsel %vm183, %v1317, %v1470
    %v1492 = vsel %vm183, %v1320, %v1472
    %v1493 = vsel %vm405, %v1491, %v1478
    %v1494 = vsel %vm405, %v1492, %v1480
    %v1495 = vsel %vm714, %v1493, %v1486
    %v1496 = vsel %vm714, %v1494, %v1488
    %v1497 = vpack.c.bf16 %v1496, %v1495
    %v1498 = vlaneseq
    %v1499 = vshrl.u32 %v1498, 7
    %v1500 = vsub.s32 5, %v1499
    %v1501 = vrot.slane %v90, %v1500
    %1502 = vrot.lane.b32.xlu0 %v818, 32
    %v1503 = vpop.permute.xlu0 %1502
    %1504 = vrot.lane.b32.xlu0 %v819, 32
    %v1505 = vpop.permute.xlu0 %1504
    %v1509 = vsel %vm111, %v1497, 0
    %1511 = vmatprep.subr.bf16.mxu0 0
    %1512 = vmatpush1.bf16.msra.mxu0 0
    %1513 = vmatprep.subr.bf16.mxu0 0
    %1514 = vmatpush1.bf16.msra.mxu0 0
    %1515 = vmatprep.subr.bf16.mxu0 0
    %1516 = vmatpush1.bf16.msra.mxu0 0
    %1517 = vmatprep.subr.bf16.mxu0 0
    %1518 = vmatpush1.bf16.msra.mxu0 0
    %1519 = vmatprep.subr.bf16.mxu0 0
    %1520 = vmatpush1.bf16.msra.mxu0 0
    %1521 = vmatprep.subr.bf16.mxu0 0
    %1522 = vmatpush1.bf16.msra.mxu0 0
    %1523 = vmatprep.subr.bf16.mxu0 0
    %1524 = vmatpush1.bf16.msra.mxu0 %v1505
    %1525 = vmatprep.subr.bf16.mxu0 0
    %1526 = vmatpush1.bf16.msra.mxu0 %v1503
    %1527 = vmatprep.subr.bf16.mxu0 0
    %1528 = vmatpush2.bf16.msra.mxu0 0
    %1529 = vmatprep.subr.bf16.mxu0 0
    %1530 = vmatpush2.bf16.msra.mxu0 0
    %1531 = vmatprep.subr.bf16.mxu0 0
    %1532 = vmatpush2.bf16.msra.mxu0 0
    %1533 = vmatprep.subr.bf16.mxu0 0
    %1534 = vmatpush2.bf16.msra.mxu0 0
    %1535 = vmatprep.subr.bf16.mxu0 0
    %1536 = vmatpush2.bf16.msra.mxu0 0
    %1537 = vmatprep.subr.bf16.mxu0 0
    %1538 = vmatpush2.bf16.msra.mxu0 0
    %1539 = vmatprep.subr.bf16.mxu0 0
    %1540 = vmatpush2.bf16.msra.mxu0 0
    %1541 = vmatprep.subr.bf16.mxu0 0
    %1542 = vmatpush2.bf16.msra.mxu0 0
    %1543 = vmatprep.mubr.bf16.mxu0 0
    %1544 = vmatmul.mubr.bf16.gmra.mxu0 %v1509
    %v1545 = vpop.f32.mrf.mxu0
    %v1546 = vadd.f32 %v1501, %v1545
    %v1547 = vpop.f32.mrf.mxu0
    %v1548 = vpop.f32.mrf.mxu0
    %v1549 = vadd.f32 %v1501, %v1548
    %v1550 = vpop.f32.mrf.mxu0
    %1551 = vdwg.mxu0
    %v1552 = vadd.f32 %v815, %v1546
    %v1553 = vadd.f32 %v816, %v1549
    %v1554 = vsel %vm111, %v1552, 0.0
    %1555 = vadd.xlane.f32.xlu0 %v1554
    %v1556 = vpop.xlane.xlu0 %1555
    %v1557 = vsel %vm111, %v1553, 0.0
    %1558 = vadd.xlane.f32.xlu0 %v1557
    %v1559 = vpop.xlane.xlu0 %1558
    %v1560 = vmul.f32 %v1556, %v782
    %v1561 = vmul.f32 %v1559, %v782
    %v1562 = vsub.f32 %v1552, %v1560
    %v1563 = vsub.f32 %v1553, %v1561
    %v1564 = vmul.f32 %v1562, %v1562
    %v1565 = vmul.f32 %v1563, %v1563
    %v1566 = vsel %vm111, %v1564, 0.0
    %1567 = vadd.xlane.f32.xlu0 %v1566
    %v1568 = vpop.xlane.xlu0 %1567
    %v1569 = vsel %vm111, %v1565, 0.0
    %1570 = vadd.xlane.f32.xlu0 %v1569
    %v1571 = vpop.xlane.xlu0 %1570
    %v1572 = vmul.f32 %v1568, %v782
    %v1573 = vmul.f32 %v1571, %v782
    %v1574 = vadd.f32 %v1572, 1e-05
    %v1575 = vadd.f32 %v1573, 1e-05
    %v1576 = vrsqrt.pop %v1574
    %v1577 = vrsqrt.pop %v1575
    %v1578 = vmul.f32 %v1562, %v1576
    %v1579 = vmul.f32 %v1563, %v1577
    %v1580 = vlaneseq
    %v1581 = vshrl.u32 %v1580, 7
    %v1582 = vsub.s32 6, %v1581
    %v1583 = vrot.slane %v90, %v1582
    %v1584 = vmul.f32 %v1578, %v1583
    %v1585 = vmul.f32 %v1579, %v1583
    %v1586 = vlaneseq
    %v1587 = vshrl.u32 %v1586, 7
    %v1588 = vsub.s32 7, %v1587
    %v1589 = vrot.slane %v90, %v1588
    %v1590 = vadd.f32 %v1584, %v1589
    %v1591 = vadd.f32 %v1585, %v1589
    %v1592 = vmul.f32 %v1590, %v74
    %v1593 = vmul.f32 %v1591, %v75
    %v1594 = vpack.c.bf16 %v1593, %v1592
    %v1595 = vpack.c.bf16 %v93, %v92
    %v1596 = vpack.c.bf16 %v95, %v94
    %v1597 = vlaneseq
    %v1598 = vshrl.u32 %v1597, 7
    %v1599 = vsub.s32 0, %v1598
    %v1600 = vrot.slane %v91, %v1599
    %v1602 = vsel %vm111, %v1594, 0
    %1604 = vmatprep.subr.bf16.mxu0 0
    %1605 = vmatpush1.bf16.msra.mxu0 0
    %1606 = vmatprep.subr.bf16.mxu0 0
    %1607 = vmatpush1.bf16.msra.mxu0 0
    %1608 = vmatprep.subr.bf16.mxu0 0
    %1609 = vmatpush1.bf16.msra.mxu0 0
    %1610 = vmatprep.subr.bf16.mxu0 0
    %1611 = vmatpush1.bf16.msra.mxu0 0
    %1612 = vmatprep.subr.bf16.mxu0 0
    %1613 = vmatpush1.bf16.msra.mxu0 0
    %1614 = vmatprep.subr.bf16.mxu0 0
    %1615 = vmatpush1.bf16.msra.mxu0 0
    %1616 = vmatprep.subr.bf16.mxu0 0
    %1617 = vmatpush1.bf16.msra.mxu0 %v1596
    %1618 = vmatprep.subr.bf16.mxu0 0
    %1619 = vmatpush1.bf16.msra.mxu0 %v1595
    %1620 = vmatprep.subr.bf16.mxu0 0
    %1621 = vmatpush2.bf16.msra.mxu0 0
    %1622 = vmatprep.subr.bf16.mxu0 0
    %1623 = vmatpush2.bf16.msra.mxu0 0
    %1624 = vmatprep.subr.bf16.mxu0 0
    %1625 = vmatpush2.bf16.msra.mxu0 0
    %1626 = vmatprep.subr.bf16.mxu0 0
    %1627 = vmatpush2.bf16.msra.mxu0 0
    %1628 = vmatprep.subr.bf16.mxu0 0
    %1629 = vmatpush2.bf16.msra.mxu0 0
    %1630 = vmatprep.subr.bf16.mxu0 0
    %1631 = vmatpush2.bf16.msra.mxu0 0
    %1632 = vmatprep.subr.bf16.mxu0 0
    %1633 = vmatpush2.bf16.msra.mxu0 0
    %1634 = vmatprep.subr.bf16.mxu0 0
    %1635 = vmatpush2.bf16.msra.mxu0 0
    %1636 = vmatprep.mubr.bf16.mxu0 0
    %1637 = vmatmul.mubr.bf16.gmra.mxu0 %v1602
    %v1638 = vpop.f32.mrf.mxu0
    %v1639 = vadd.f32 %v1600, %v1638
    %v1640 = vpop.f32.mrf.mxu0
    %v1641 = vpop.f32.mrf.mxu0
    %v1642 = vadd.f32 %v1600, %v1641
    %v1643 = vpop.f32.mrf.mxu0
    %1644 = vdwg.mxu0
    %v1645 = vmax.f32 %v1639, 0.0
    %v1646 = vmax.f32 %v1642, 0.0
    %v1647 = vpack.c.bf16 %v1646, %v1645
    %v1648 = vpack.c.bf16 %v97, %v96
    %v1649 = vpack.c.bf16 %v99, %v98
    %v1650 = vpack.c.bf16 %v101, %v100
    %v1651 = vpack.c.bf16 %v103, %v102
    %v1652 = vlaneseq
    %v1653 = vshrl.u32 %v1652, 7
    %v1654 = vsub.s32 1, %v1653
    %v1655 = vrot.slane %v91, %v1654
    %vm1656 = vcmask 523264
    %v1658 = vsel %vm1656, %v1647, 0
    %1660 = vmatprep.subr.bf16.mxu0 0
    %1661 = vmatpush1.bf16.msra.mxu0 0
    %1662 = vmatprep.subr.bf16.mxu0 0
    %1663 = vmatpush1.bf16.msra.mxu0 0
    %1664 = vmatprep.subr.bf16.mxu0 0
    %1665 = vmatpush1.bf16.msra.mxu0 0
    %1666 = vmatprep.subr.bf16.mxu0 0
    %1667 = vmatpush1.bf16.msra.mxu0 0
    %1668 = vmatprep.subr.bf16.mxu0 0
    %1669 = vmatpush1.bf16.msra.mxu0 %v1651
    %1670 = vmatprep.subr.bf16.mxu0 0
    %1671 = vmatpush1.bf16.msra.mxu0 %v1650
    %1672 = vmatprep.subr.bf16.mxu0 0
    %1673 = vmatpush1.bf16.msra.mxu0 %v1649
    %1674 = vmatprep.subr.bf16.mxu0 0
    %1675 = vmatpush1.bf16.msra.mxu0 %v1648
    %1676 = vmatprep.subr.bf16.mxu0 0
    %1677 = vmatpush2.bf16.msra.mxu0 0
    %1678 = vmatprep.subr.bf16.mxu0 0
    %1679 = vmatpush2.bf16.msra.mxu0 0
    %1680 = vmatprep.subr.bf16.mxu0 0
    %1681 = vmatpush2.bf16.msra.mxu0 0
    %1682 = vmatprep.subr.bf16.mxu0 0
    %1683 = vmatpush2.bf16.msra.mxu0 0
    %1684 = vmatprep.subr.bf16.mxu0 0
    %1685 = vmatpush2.bf16.msra.mxu0 0
    %1686 = vmatprep.subr.bf16.mxu0 0
    %1687 = vmatpush2.bf16.msra.mxu0 0
    %1688 = vmatprep.subr.bf16.mxu0 0
    %1689 = vmatpush2.bf16.msra.mxu0 0
    %1690 = vmatprep.subr.bf16.mxu0 0
    %1691 = vmatpush2.bf16.msra.mxu0 0
    %1692 = vmatprep.mubr.bf16.mxu0 0
    %1693 = vmatmul.mubr.bf16.gmra.mxu0 %v1658
    %v1694 = vpop.f32.mrf.mxu0
    %v1695 = vadd.f32 %v1655, %v1694
    %v1696 = vpop.f32.mrf.mxu0
    %v1697 = vpop.f32.mrf.mxu0
    %v1698 = vadd.f32 %v1655, %v1697
    %v1699 = vpop.f32.mrf.mxu0
    %1700 = vdwg.mxu0
    %v1701 = vadd.f32 %v1592, %v1695
    %v1702 = vadd.f32 %v1593, %v1698
    %v1703 = vsel %vm111, %v1701, 0.0
    %1704 = vadd.xlane.f32.xlu0 %v1703
    %v1705 = vpop.xlane.xlu0 %1704
    %v1706 = vsel %vm111, %v1702, 0.0
    %1707 = vadd.xlane.f32.xlu0 %v1706
    %v1708 = vpop.xlane.xlu0 %1707
    %v1709 = vmul.f32 %v1705, %v782
    %v1710 = vmul.f32 %v1708, %v782
    %v1711 = vsub.f32 %v1701, %v1709
    %v1712 = vsub.f32 %v1702, %v1710
    %v1713 = vmul.f32 %v1711, %v1711
    %v1714 = vmul.f32 %v1712, %v1712
    %v1715 = vsel %vm111, %v1713, 0.0
    %1716 = vadd.xlane.f32.xlu0 %v1715
    %v1717 = vpop.xlane.xlu0 %1716
    %v1718 = vsel %vm111, %v1714, 0.0
    %1719 = vadd.xlane.f32.xlu0 %v1718
    %v1720 = vpop.xlane.xlu0 %1719
    %v1721 = vmul.f32 %v1717, %v782
    %v1722 = vmul.f32 %v1720, %v782
    %v1723 = vadd.f32 %v1721, 1e-05
    %v1724 = vadd.f32 %v1722, 1e-05
    %v1725 = vrsqrt.pop %v1723
    %v1726 = vrsqrt.pop %v1724
    %v1727 = vmul.f32 %v1711, %v1725
    %v1728 = vmul.f32 %v1712, %v1726
    %v1729 = vlaneseq
    %v1730 = vshrl.u32 %v1729, 7
    %v1731 = vsub.s32 2, %v1730
    %v1732 = vrot.slane %v91, %v1731
    %v1733 = vmul.f32 %v1727, %v1732
    %v1734 = vmul.f32 %v1728, %v1732
    %v1735 = vlaneseq
    %v1736 = vshrl.u32 %v1735, 7
    %v1737 = vsub.s32 3, %v1736
    %v1738 = vrot.slane %v91, %v1737
    %v1739 = vadd.f32 %v1733, %v1738
    %v1740 = vadd.f32 %v1734, %v1738
    %v1741 = vmul.f32 %v1739, %v74
    %v1742 = vmul.f32 %v1740, %v75
    %v1743 = vld [vmem:[#allocation8 + $0x40] sm:$0xff]
    %v1744 = vld [vmem:[#allocation8 + $0x48] sm:$0xff]
    %v1745 = vld [vmem:[#allocation8 + $0x50] sm:$0xff]
    %v1746 = vld [vmem:[#allocation8 + $0x58] sm:$0xff]
    %v1747 = vld [vmem:[#allocation8 + $0x60] sm:$0xff]
    %v1748 = vld [vmem:[#allocation8 + $0x68] sm:$0xff]
    %v1749 = vld [vmem:[#allocation8 + $0x70] sm:$0xff]
    %v1750 = vld [vmem:[#allocation8 + $0x78] sm:$0xff]
    %v1751 = vld [vmem:[#allocation8 + $0xb0] sm:$0xff]
    %v1752 = vld [vmem:[#allocation8 + $0xb8] sm:$0xff]
    %v1753 = vld [vmem:[#allocation8 + $0x120] sm:$0xff]
    %v1754 = vld [vmem:[#allocation8 + $0x128] sm:$0xff]
    %v1755 = vld [vmem:[#allocation8 + $0x130] sm:$0xff]
    %v1756 = vld [vmem:[#allocation8 + $0x138] sm:$0xff]
    %v1757 = vld [vmem:[#allocation8 + $0x140] sm:$0xff]
    %v1758 = vld [vmem:[#allocation8 + $0x148] sm:$0xff]
    %v1759 = vld [vmem:[#allocation8 + $0x150] sm:$0xff]
    %v1760 = vld [vmem:[#allocation8 + $0x158] sm:$0xff]
    %v1761 = vld [vmem:[#allocation8 + $0x160] sm:$0xff]
    %v1762 = vld [vmem:[#allocation8 + $0x168] sm:$0xff]
    %v1763 = vld [vmem:[#allocation8 + $0x170] sm:$0xff]
    %v1764 = vld [vmem:[#allocation8 + $0x178] sm:$0xff]
    %v1765 = vpack.c.bf16 %v1742, %v1741
    %v1766 = vpack.c.bf16 %v1744, %v1743
    %v1767 = vpack.c.bf16 %v1746, %v1745
    %v1768 = vlaneseq
    %v1769 = vshrl.u32 %v1768, 7
    %v1770 = vsub.s32 0, %v1769
    %v1771 = vrot.slane %v1751, %v1770
    %v1773 = vsel %vm111, %v1765, 0
    %1775 = vmatprep.subr.bf16.mxu0 0
    %1776 = vmatpush1.bf16.msra.mxu0 0
    %1777 = vmatprep.subr.bf16.mxu0 0
    %1778 = vmatpush1.bf16.msra.mxu0 0
    %1779 = vmatprep.subr.bf16.mxu0 0
    %1780 = vmatpush1.bf16.msra.mxu0 0
    %1781 = vmatprep.subr.bf16.mxu0 0
    %1782 = vmatpush1.bf16.msra.mxu0 0
    %1783 = vmatprep.subr.bf16.mxu0 0
    %1784 = vmatpush1.bf16.msra.mxu0 0
    %1785 = vmatprep.subr.bf16.mxu0 0
    %1786 = vmatpush1.bf16.msra.mxu0 0
    %1787 = vmatprep.subr.bf16.mxu0 0
    %1788 = vmatpush1.bf16.msra.mxu0 %v1767
    %1789 = vmatprep.subr.bf16.mxu0 0
    %1790 = vmatpush1.bf16.msra.mxu0 %v1766
    %1791 = vmatprep.subr.bf16.mxu0 0
    %1792 = vmatpush2.bf16.msra.mxu0 0
    %1793 = vmatprep.subr.bf16.mxu0 0
    %1794 = vmatpush2.bf16.msra.mxu0 0
    %1795 = vmatprep.subr.bf16.mxu0 0
    %1796 = vmatpush2.bf16.msra.mxu0 0
    %1797 = vmatprep.subr.bf16.mxu0 0
    %1798 = vmatpush2.bf16.msra.mxu0 0
    %1799 = vmatprep.subr.bf16.mxu0 0
    %1800 = vmatpush2.bf16.msra.mxu0 0
    %1801 = vmatprep.subr.bf16.mxu0 0
    %1802 = vmatpush2.bf16.msra.mxu0 0
    %1803 = vmatprep.subr.bf16.mxu0 0
    %1804 = vmatpush2.bf16.msra.mxu0 0
    %1805 = vmatprep.subr.bf16.mxu0 0
    %1806 = vmatpush2.bf16.msra.mxu0 0
    %1807 = vmatprep.mubr.bf16.mxu0 0
    %1808 = vmatmul.mubr.bf16.gmra.mxu0 %v1773
    %v1809 = vpop.f32.mrf.mxu0
    %v1810 = vadd.f32 %v1771, %v1809
    %v1811 = vpop.f32.mrf.mxu0
    %v1812 = vpop.f32.mrf.mxu0
    %v1813 = vadd.f32 %v1771, %v1812
    %v1814 = vpop.f32.mrf.mxu0
    %1815 = vdwg.mxu0
    %1818 = vrot.lane.b32.xlu0 %v1810, 120
    %v1819 = vpop.permute.xlu0 %1818
    %1820 = vrot.lane.b32.xlu0 %v1813, 120
    %v1821 = vpop.permute.xlu0 %1820
    %1824 = vrot.lane.b32.xlu0 %v1810, 112
    %v1825 = vpop.permute.xlu0 %1824
    %1826 = vrot.lane.b32.xlu0 %v1813, 112
    %v1827 = vpop.permute.xlu0 %1826
    %1830 = vrot.lane.b32.xlu0 %v1810, 104
    %v1831 = vpop.permute.xlu0 %1830
    %1832 = vrot.lane.b32.xlu0 %v1813, 104
    %v1833 = vpop.permute.xlu0 %1832
    %v1836 = vpack.c.bf16 %v1813, %v1810
    %v1837 = vpack.c.bf16 %v1821, %v1819
    %v1838 = vpack.c.bf16 %v1827, %v1825
    %v1839 = vpack.c.bf16 %v1833, %v1831
    %1841 = vrot.lane.b32.xlu0 %v1836, 96
    %v1842 = vpop.permute.xlu0 %1841
    %v1844 = vsel %vm183, %v1836, 0
    %v1847 = vsel %vm183, %v1842, 0
    %1849 = vmatprep.subr.bf16.mxu0 0
    %1850 = vmatpush1.bf16.xpose.msra.mxu0 0
    %1851 = vmatprep.subr.bf16.mxu0 0
    %1852 = vmatpush1.bf16.xpose.msra.mxu0 0
    %1853 = vmatprep.subr.bf16.mxu0 0
    %1854 = vmatpush1.bf16.xpose.msra.mxu0 0
    %1855 = vmatprep.subr.bf16.mxu0 0
    %1856 = vmatpush1.bf16.xpose.msra.mxu0 0
    %1857 = vmatprep.subr.bf16.mxu0 0
    %1858 = vmatpush1.bf16.xpose.msra.mxu0 0
    %1859 = vmatprep.subr.bf16.mxu0 0
    %1860 = vmatpush1.bf16.xpose.msra.mxu0 0
    %1861 = vmatprep.subr.bf16.mxu0 0
    %1862 = vmatpush1.bf16.xpose.msra.mxu0 0
    %1863 = vmatprep.subr.bf16.mxu0 0
    %1864 = vmatpush1.bf16.xpose.msra.mxu0 %v1847
    %1865 = vmatprep.subr.bf16.mxu0 0
    %1866 = vmatpush2.bf16.xpose.msra.mxu0 0
    %1867 = vmatprep.subr.bf16.mxu0 0
    %1868 = vmatpush2.bf16.xpose.msra.mxu0 0
    %1869 = vmatprep.subr.bf16.mxu0 0
    %1870 = vmatpush2.bf16.xpose.msra.mxu0 0
    %1871 = vmatprep.subr.bf16.mxu0 0
    %1872 = vmatpush2.bf16.xpose.msra.mxu0 0
    %1873 = vmatprep.subr.bf16.mxu0 0
    %1874 = vmatpush2.bf16.xpose.msra.mxu0 0
    %1875 = vmatprep.subr.bf16.mxu0 0
    %1876 = vmatpush2.bf16.xpose.msra.mxu0 0
    %1877 = vmatprep.subr.bf16.mxu0 0
    %1878 = vmatpush2.bf16.xpose.msra.mxu0 0
    %1879 = vmatprep.subr.bf16.mxu0 0
    %1880 = vmatpush2.bf16.xpose.msra.mxu0 0
    %1881 = vmatprep.mubr.bf16.mxu0 0
    %1882 = vmatmul.mubr.bf16.gmra.mxu0 %v1844
    %v1883 = vpop.f32.mrf.mxu0
    %v1884 = vadd.f32 0.0, %v1883
    %v1885 = vpop.f32.mrf.mxu0
    %v1886 = vpop.f32.mrf.mxu0
    %v1887 = vadd.f32 0.0, %v1886
    %v1888 = vpop.f32.mrf.mxu0
    %1889 = vdwg.mxu0
    %1891 = vrot.lane.b32.xlu0 %v1837, 96
    %v1892 = vpop.permute.xlu0 %1891
    %v1894 = vsel %vm183, %v1837, 0
    %v1897 = vsel %vm183, %v1892, 0
    %1899 = vmatprep.subr.bf16.mxu0 0
    %1900 = vmatpush1.bf16.xpose.msra.mxu0 0
    %1901 = vmatprep.subr.bf16.mxu0 0
    %1902 = vmatpush1.bf16.xpose.msra.mxu0 0
    %1903 = vmatprep.subr.bf16.mxu0 0
    %1904 = vmatpush1.bf16.xpose.msra.mxu0 0
    %1905 = vmatprep.subr.bf16.mxu0 0
    %1906 = vmatpush1.bf16.xpose.msra.mxu0 0
    %1907 = vmatprep.subr.bf16.mxu0 0
    %1908 = vmatpush1.bf16.xpose.msra.mxu0 0
    %1909 = vmatprep.subr.bf16.mxu0 0
    %1910 = vmatpush1.bf16.xpose.msra.mxu0 0
    %1911 = vmatprep.subr.bf16.mxu0 0
    %1912 = vmatpush1.bf16.xpose.msra.mxu0 0
    %1913 = vmatprep.subr.bf16.mxu0 0
    %1914 = vmatpush1.bf16.xpose.msra.mxu0 %v1897
    %1915 = vmatprep.subr.bf16.mxu0 0
    %1916 = vmatpush2.bf16.xpose.msra.mxu0 0
    %1917 = vmatprep.subr.bf16.mxu0 0
    %1918 = vmatpush2.bf16.xpose.msra.mxu0 0
    %1919 = vmatprep.subr.bf16.mxu0 0
    %1920 = vmatpush2.bf16.xpose.msra.mxu0 0
    %1921 = vmatprep.subr.bf16.mxu0 0
    %1922 = vmatpush2.bf16.xpose.msra.mxu0 0
    %1923 = vmatprep.subr.bf16.mxu0 0
    %1924 = vmatpush2.bf16.xpose.msra.mxu0 0
    %1925 = vmatprep.subr.bf16.mxu0 0
    %1926 = vmatpush2.bf16.xpose.msra.mxu0 0
    %1927 = vmatprep.subr.bf16.mxu0 0
    %1928 = vmatpush2.bf16.xpose.msra.mxu0 0
    %1929 = vmatprep.subr.bf16.mxu0 0
    %1930 = vmatpush2.bf16.xpose.msra.mxu0 0
    %1931 = vmatprep.mubr.bf16.mxu0 0
    %1932 = vmatmul.mubr.bf16.gmra.mxu0 %v1894
    %v1933 = vpop.f32.mrf.mxu0
    %v1934 = vadd.f32 0.0, %v1933
    %v1935 = vpop.f32.mrf.mxu0
    %v1936 = vpop.f32.mrf.mxu0
    %v1937 = vadd.f32 0.0, %v1936
    %v1938 = vpop.f32.mrf.mxu0
    %1939 = vdwg.mxu0
    %1941 = vrot.lane.b32.xlu0 %v1838, 96
    %v1942 = vpop.permute.xlu0 %1941
    %v1944 = vsel %vm183, %v1838, 0
    %v1947 = vsel %vm183, %v1942, 0
    %1949 = vmatprep.subr.bf16.mxu0 0
    %1950 = vmatpush1.bf16.xpose.msra.mxu0 0
    %1951 = vmatprep.subr.bf16.mxu0 0
    %1952 = vmatpush1.bf16.xpose.msra.mxu0 0
    %1953 = vmatprep.subr.bf16.mxu0 0
    %1954 = vmatpush1.bf16.xpose.msra.mxu0 0
    %1955 = vmatprep.subr.bf16.mxu0 0
    %1956 = vmatpush1.bf16.xpose.msra.mxu0 0
    %1957 = vmatprep.subr.bf16.mxu0 0
    %1958 = vmatpush1.bf16.xpose.msra.mxu0 0
    %1959 = vmatprep.subr.bf16.mxu0 0
    %1960 = vmatpush1.bf16.xpose.msra.mxu0 0
    %1961 = vmatprep.subr.bf16.mxu0 0
    %1962 = vmatpush1.bf16.xpose.msra.mxu0 0
    %1963 = vmatprep.subr.bf16.mxu0 0
    %1964 = vmatpush1.bf16.xpose.msra.mxu0 %v1947
    %1965 = vmatprep.subr.bf16.mxu0 0
    %1966 = vmatpush2.bf16.xpose.msra.mxu0 0
    %1967 = vmatprep.subr.bf16.mxu0 0
    %1968 = vmatpush2.bf16.xpose.msra.mxu0 0
    %1969 = vmatprep.subr.bf16.mxu0 0
    %1970 = vmatpush2.bf16.xpose.msra.mxu0 0
    %1971 = vmatprep.subr.bf16.mxu0 0
    %1972 = vmatpush2.bf16.xpose.msra.mxu0 0
    %1973 = vmatprep.subr.bf16.mxu0 0
    %1974 = vmatpush2.bf16.xpose.msra.mxu0 0
    %1975 = vmatprep.subr.bf16.mxu0 0
    %1976 = vmatpush2.bf16.xpose.msra.mxu0 0
    %1977 = vmatprep.subr.bf16.mxu0 0
    %1978 = vmatpush2.bf16.xpose.msra.mxu0 0
    %1979 = vmatprep.subr.bf16.mxu0 0
    %1980 = vmatpush2.bf16.xpose.msra.mxu0 0
    %1981 = vmatprep.mubr.bf16.mxu0 0
    %1982 = vmatmul.mubr.bf16.gmra.mxu0 %v1944
    %v1983 = vpop.f32.mrf.mxu0
    %v1984 = vadd.f32 0.0, %v1983
    %v1985 = vpop.f32.mrf.mxu0
    %v1986 = vpop.f32.mrf.mxu0
    %v1987 = vadd.f32 0.0, %v1986
    %v1988 = vpop.f32.mrf.mxu0
    %1989 = vdwg.mxu0
    %1991 = vrot.lane.b32.xlu0 %v1839, 96
    %v1992 = vpop.permute.xlu0 %1991
    %v1994 = vsel %vm183, %v1839, 0
    %v1997 = vsel %vm183, %v1992, 0
    %1999 = vmatprep.subr.bf16.mxu0 0
    %2000 = vmatpush1.bf16.xpose.msra.mxu0 0
    %2001 = vmatprep.subr.bf16.mxu0 0
    %2002 = vmatpush1.bf16.xpose.msra.mxu0 0
    %2003 = vmatprep.subr.bf16.mxu0 0
    %2004 = vmatpush1.bf16.xpose.msra.mxu0 0
    %2005 = vmatprep.subr.bf16.mxu0 0
    %2006 = vmatpush1.bf16.xpose.msra.mxu0 0
    %2007 = vmatprep.subr.bf16.mxu0 0
    %2008 = vmatpush1.bf16.xpose.msra.mxu0 0
    %2009 = vmatprep.subr.bf16.mxu0 0
    %2010 = vmatpush1.bf16.xpose.msra.mxu0 0
    %2011 = vmatprep.subr.bf16.mxu0 0
    %2012 = vmatpush1.bf16.xpose.msra.mxu0 0
    %2013 = vmatprep.subr.bf16.mxu0 0
    %2014 = vmatpush1.bf16.xpose.msra.mxu0 %v1997
    %2015 = vmatprep.subr.bf16.mxu0 0
    %2016 = vmatpush2.bf16.xpose.msra.mxu0 0
    %2017 = vmatprep.subr.bf16.mxu0 0
    %2018 = vmatpush2.bf16.xpose.msra.mxu0 0
    %2019 = vmatprep.subr.bf16.mxu0 0
    %2020 = vmatpush2.bf16.xpose.msra.mxu0 0
    %2021 = vmatprep.subr.bf16.mxu0 0
    %2022 = vmatpush2.bf16.xpose.msra.mxu0 0
    %2023 = vmatprep.subr.bf16.mxu0 0
    %2024 = vmatpush2.bf16.xpose.msra.mxu0 0
    %2025 = vmatprep.subr.bf16.mxu0 0
    %2026 = vmatpush2.bf16.xpose.msra.mxu0 0
    %2027 = vmatprep.subr.bf16.mxu0 0
    %2028 = vmatpush2.bf16.xpose.msra.mxu0 0
    %2029 = vmatprep.subr.bf16.mxu0 0
    %2030 = vmatpush2.bf16.xpose.msra.mxu0 0
    %2031 = vmatprep.mubr.bf16.mxu0 0
    %2032 = vmatmul.mubr.bf16.gmra.mxu0 %v1994
    %v2033 = vpop.f32.mrf.mxu0
    %v2034 = vadd.f32 0.0, %v2033
    %v2035 = vpop.f32.mrf.mxu0
    %v2036 = vpop.f32.mrf.mxu0
    %v2037 = vadd.f32 0.0, %v2036
    %v2038 = vpop.f32.mrf.mxu0
    %2039 = vdwg.mxu0
    %v2040 = vmul.f32 %v1884, 0.35355338
    %v2041 = vmul.f32 %v1887, 0.35355338
    %v2042 = vmul.f32 %v1934, 0.35355338
    %v2043 = vmul.f32 %v1937, 0.35355338
    %v2044 = vmul.f32 %v1984, 0.35355338
    %v2045 = vmul.f32 %v1987, 0.35355338
    %v2046 = vmul.f32 %v2034, 0.35355338
    %v2047 = vmul.f32 %v2037, 0.35355338
    %v2048 = vadd.f32 %v2040, %v392
    %v2049 = vadd.f32 %v2041, %v394
    %v2050 = vadd.f32 %v2042, %v392
    %v2051 = vadd.f32 %v2043, %v394
    %v2052 = vadd.f32 %v2044, %v392
    %v2053 = vadd.f32 %v2045, %v394
    %v2054 = vadd.f32 %v2046, %v392
    %v2055 = vadd.f32 %v2047, %v394
    %v2056 = vsel %vm405, %v2048, -inf
    %2057 = vmax.xlane.f32.xlu0 %v2056
    %v2058 = vpop.xlane.xlu0 %2057
    %v2059 = vsel %vm405, %v2049, -inf
    %2060 = vmax.xlane.f32.xlu0 %v2059
    %v2061 = vpop.xlane.xlu0 %2060
    %v2062 = vsel %vm405, %v2050, -inf
    %2063 = vmax.xlane.f32.xlu0 %v2062
    %v2064 = vpop.xlane.xlu0 %2063
    %v2065 = vsel %vm405, %v2051, -inf
    %2066 = vmax.xlane.f32.xlu0 %v2065
    %v2067 = vpop.xlane.xlu0 %2066
    %v2068 = vsel %vm405, %v2052, -inf
    %2069 = vmax.xlane.f32.xlu0 %v2068
    %v2070 = vpop.xlane.xlu0 %2069
    %v2071 = vsel %vm405, %v2053, -inf
    %2072 = vmax.xlane.f32.xlu0 %v2071
    %v2073 = vpop.xlane.xlu0 %2072
    %v2074 = vsel %vm405, %v2054, -inf
    %2075 = vmax.xlane.f32.xlu0 %v2074
    %v2076 = vpop.xlane.xlu0 %2075
    %v2077 = vsel %vm405, %v2055, -inf
    %2078 = vmax.xlane.f32.xlu0 %v2077
    %v2079 = vpop.xlane.xlu0 %2078
    %v2080 = vsub.f32 %v2048, %v2058
    %v2081 = vsub.f32 %v2049, %v2061
    %v2082 = vsub.f32 %v2050, %v2064
    %v2083 = vsub.f32 %v2051, %v2067
    %v2084 = vsub.f32 %v2052, %v2070
    %v2085 = vsub.f32 %v2053, %v2073
    %v2086 = vsub.f32 %v2054, %v2076
    %v2087 = vsub.f32 %v2055, %v2079
    %v2088 = vmul.f32 %v2080, 1.442695
    %v2089 = vpow.pop %v2088
    %v2090 = vmul.f32 %v2081, 1.442695
    %v2091 = vpow.pop %v2090
    %v2092 = vmul.f32 %v2082, 1.442695
    %v2093 = vpow.pop %v2092
    %v2094 = vmul.f32 %v2083, 1.442695
    %v2095 = vpow.pop %v2094
    %v2096 = vmul.f32 %v2084, 1.442695
    %v2097 = vpow.pop %v2096
    %v2098 = vmul.f32 %v2085, 1.442695
    %v2099 = vpow.pop %v2098
    %v2100 = vmul.f32 %v2086, 1.442695
    %v2101 = vpow.pop %v2100
    %v2102 = vmul.f32 %v2087, 1.442695
    %v2103 = vpow.pop %v2102
    %v2104 = vsel %vm405, %v2089, 0.0
    %2105 = vadd.xlane.f32.xlu0 %v2104
    %v2106 = vpop.xlane.xlu0 %2105
    %v2107 = vsel %vm405, %v2091, 0.0
    %2108 = vadd.xlane.f32.xlu0 %v2107
    %v2109 = vpop.xlane.xlu0 %2108
    %v2110 = vsel %vm405, %v2093, 0.0
    %2111 = vadd.xlane.f32.xlu0 %v2110
    %v2112 = vpop.xlane.xlu0 %2111
    %v2113 = vsel %vm405, %v2095, 0.0
    %2114 = vadd.xlane.f32.xlu0 %v2113
    %v2115 = vpop.xlane.xlu0 %2114
    %v2116 = vsel %vm405, %v2097, 0.0
    %2117 = vadd.xlane.f32.xlu0 %v2116
    %v2118 = vpop.xlane.xlu0 %2117
    %v2119 = vsel %vm405, %v2099, 0.0
    %2120 = vadd.xlane.f32.xlu0 %v2119
    %v2121 = vpop.xlane.xlu0 %2120
    %v2122 = vsel %vm405, %v2101, 0.0
    %2123 = vadd.xlane.f32.xlu0 %v2122
    %v2124 = vpop.xlane.xlu0 %2123
    %v2125 = vsel %vm405, %v2103, 0.0
    %2126 = vadd.xlane.f32.xlu0 %v2125
    %v2127 = vpop.xlane.xlu0 %2126
    %v2128 = vrcp.pop %v2106
    %v2129 = vrcp.pop %v2109
    %v2130 = vrcp.pop %v2112
    %v2131 = vrcp.pop %v2115
    %v2132 = vrcp.pop %v2118
    %v2133 = vrcp.pop %v2121
    %v2134 = vrcp.pop %v2124
    %v2135 = vrcp.pop %v2127
    %v2136 = vmul.f32 %v2089, %v2128
    %v2137 = vmul.f32 %v2091, %v2129
    %v2138 = vmul.f32 %v2093, %v2130
    %v2139 = vmul.f32 %v2095, %v2131
    %v2140 = vmul.f32 %v2097, %v2132
    %v2141 = vmul.f32 %v2099, %v2133
    %v2142 = vmul.f32 %v2101, %v2134
    %v2143 = vmul.f32 %v2103, %v2135
    %v2144 = vpack.c.bf16 %v2137, %v2136
    %v2145 = vpack.c.bf16 %v2139, %v2138
    %v2146 = vpack.c.bf16 %v2141, %v2140
    %v2147 = vpack.c.bf16 %v2143, %v2142
    %2148 = vrot.lane.b32.xlu0 %v1836, 64
    %v2149 = vpop.permute.xlu0 %2148
    %v2152 = vsel %vm405, %v2144, 0
    %2154 = vmatprep.subr.bf16.mxu0 0
    %2155 = vmatpush1.bf16.msra.mxu0 0
    %2156 = vmatprep.subr.bf16.mxu0 0
    %2157 = vmatpush1.bf16.msra.mxu0 0
    %2158 = vmatprep.subr.bf16.mxu0 0
    %2159 = vmatpush1.bf16.msra.mxu0 0
    %2160 = vmatprep.subr.bf16.mxu0 0
    %2161 = vmatpush1.bf16.msra.mxu0 0
    %2162 = vmatprep.subr.bf16.mxu0 0
    %2163 = vmatpush1.bf16.msra.mxu0 0
    %2164 = vmatprep.subr.bf16.mxu0 0
    %2165 = vmatpush1.bf16.msra.mxu0 0
    %2166 = vmatprep.subr.bf16.mxu0 0
    %2167 = vmatpush1.bf16.msra.mxu0 0
    %2168 = vmatprep.subr.bf16.mxu0 0
    %2169 = vmatpush1.bf16.msra.mxu0 %v2149
    %2170 = vmatprep.subr.bf16.mxu0 0
    %2171 = vmatpush2.bf16.msra.mxu0 0
    %2172 = vmatprep.subr.bf16.mxu0 0
    %2173 = vmatpush2.bf16.msra.mxu0 0
    %2174 = vmatprep.subr.bf16.mxu0 0
    %2175 = vmatpush2.bf16.msra.mxu0 0
    %2176 = vmatprep.subr.bf16.mxu0 0
    %2177 = vmatpush2.bf16.msra.mxu0 0
    %2178 = vmatprep.subr.bf16.mxu0 0
    %2179 = vmatpush2.bf16.msra.mxu0 0
    %2180 = vmatprep.subr.bf16.mxu0 0
    %2181 = vmatpush2.bf16.msra.mxu0 0
    %2182 = vmatprep.subr.bf16.mxu0 0
    %2183 = vmatpush2.bf16.msra.mxu0 0
    %2184 = vmatprep.subr.bf16.mxu0 0
    %2185 = vmatpush2.bf16.msra.mxu0 0
    %2186 = vmatprep.mubr.bf16.mxu0 0
    %2187 = vmatmul.mubr.bf16.gmra.mxu0 %v2152
    %v2188 = vpop.f32.mrf.mxu0
    %v2189 = vadd.f32 0.0, %v2188
    %v2190 = vpop.f32.mrf.mxu0
    %v2191 = vpop.f32.mrf.mxu0
    %v2192 = vadd.f32 0.0, %v2191
    %v2193 = vpop.f32.mrf.mxu0
    %2194 = vdwg.mxu0
    %2195 = vrot.lane.b32.xlu0 %v1837, 64
    %v2196 = vpop.permute.xlu0 %2195
    %v2199 = vsel %vm405, %v2145, 0
    %2201 = vmatprep.subr.bf16.mxu0 0
    %2202 = vmatpush1.bf16.msra.mxu0 0
    %2203 = vmatprep.subr.bf16.mxu0 0
    %2204 = vmatpush1.bf16.msra.mxu0 0
    %2205 = vmatprep.subr.bf16.mxu0 0
    %2206 = vmatpush1.bf16.msra.mxu0 0
    %2207 = vmatprep.subr.bf16.mxu0 0
    %2208 = vmatpush1.bf16.msra.mxu0 0
    %2209 = vmatprep.subr.bf16.mxu0 0
    %2210 = vmatpush1.bf16.msra.mxu0 0
    %2211 = vmatprep.subr.bf16.mxu0 0
    %2212 = vmatpush1.bf16.msra.mxu0 0
    %2213 = vmatprep.subr.bf16.mxu0 0
    %2214 = vmatpush1.bf16.msra.mxu0 0
    %2215 = vmatprep.subr.bf16.mxu0 0
    %2216 = vmatpush1.bf16.msra.mxu0 %v2196
    %2217 = vmatprep.subr.bf16.mxu0 0
    %2218 = vmatpush2.bf16.msra.mxu0 0
    %2219 = vmatprep.subr.bf16.mxu0 0
    %2220 = vmatpush2.bf16.msra.mxu0 0
    %2221 = vmatprep.subr.bf16.mxu0 0
    %2222 = vmatpush2.bf16.msra.mxu0 0
    %2223 = vmatprep.subr.bf16.mxu0 0
    %2224 = vmatpush2.bf16.msra.mxu0 0
    %2225 = vmatprep.subr.bf16.mxu0 0
    %2226 = vmatpush2.bf16.msra.mxu0 0
    %2227 = vmatprep.subr.bf16.mxu0 0
    %2228 = vmatpush2.bf16.msra.mxu0 0
    %2229 = vmatprep.subr.bf16.mxu0 0
    %2230 = vmatpush2.bf16.msra.mxu0 0
    %2231 = vmatprep.subr.bf16.mxu0 0
    %2232 = vmatpush2.bf16.msra.mxu0 0
    %2233 = vmatprep.mubr.bf16.mxu0 0
    %2234 = vmatmul.mubr.bf16.gmra.mxu0 %v2199
    %v2235 = vpop.f32.mrf.mxu0
    %v2236 = vadd.f32 0.0, %v2235
    %v2237 = vpop.f32.mrf.mxu0
    %v2238 = vpop.f32.mrf.mxu0
    %v2239 = vadd.f32 0.0, %v2238
    %v2240 = vpop.f32.mrf.mxu0
    %2241 = vdwg.mxu0
    %2242 = vrot.lane.b32.xlu0 %v1838, 64
    %v2243 = vpop.permute.xlu0 %2242
    %v2246 = vsel %vm405, %v2146, 0
    %2248 = vmatprep.subr.bf16.mxu0 0
    %2249 = vmatpush1.bf16.msra.mxu0 0
    %2250 = vmatprep.subr.bf16.mxu0 0
    %2251 = vmatpush1.bf16.msra.mxu0 0
    %2252 = vmatprep.subr.bf16.mxu0 0
    %2253 = vmatpush1.bf16.msra.mxu0 0
    %2254 = vmatprep.subr.bf16.mxu0 0
    %2255 = vmatpush1.bf16.msra.mxu0 0
    %2256 = vmatprep.subr.bf16.mxu0 0
    %2257 = vmatpush1.bf16.msra.mxu0 0
    %2258 = vmatprep.subr.bf16.mxu0 0
    %2259 = vmatpush1.bf16.msra.mxu0 0
    %2260 = vmatprep.subr.bf16.mxu0 0
    %2261 = vmatpush1.bf16.msra.mxu0 0
    %2262 = vmatprep.subr.bf16.mxu0 0
    %2263 = vmatpush1.bf16.msra.mxu0 %v2243
    %2264 = vmatprep.subr.bf16.mxu0 0
    %2265 = vmatpush2.bf16.msra.mxu0 0
    %2266 = vmatprep.subr.bf16.mxu0 0
    %2267 = vmatpush2.bf16.msra.mxu0 0
    %2268 = vmatprep.subr.bf16.mxu0 0
    %2269 = vmatpush2.bf16.msra.mxu0 0
    %2270 = vmatprep.subr.bf16.mxu0 0
    %2271 = vmatpush2.bf16.msra.mxu0 0
    %2272 = vmatprep.subr.bf16.mxu0 0
    %2273 = vmatpush2.bf16.msra.mxu0 0
    %2274 = vmatprep.subr.bf16.mxu0 0
    %2275 = vmatpush2.bf16.msra.mxu0 0
    %2276 = vmatprep.subr.bf16.mxu0 0
    %2277 = vmatpush2.bf16.msra.mxu0 0
    %2278 = vmatprep.subr.bf16.mxu0 0
    %2279 = vmatpush2.bf16.msra.mxu0 0
    %2280 = vmatprep.mubr.bf16.mxu0 0
    %2281 = vmatmul.mubr.bf16.gmra.mxu0 %v2246
    %v2282 = vpop.f32.mrf.mxu0
    %v2283 = vadd.f32 0.0, %v2282
    %v2284 = vpop.f32.mrf.mxu0
    %v2285 = vpop.f32.mrf.mxu0
    %v2286 = vadd.f32 0.0, %v2285
    %v2287 = vpop.f32.mrf.mxu0
    %2288 = vdwg.mxu0
    %2289 = vrot.lane.b32.xlu0 %v1839, 64
    %v2290 = vpop.permute.xlu0 %2289
    %v2293 = vsel %vm405, %v2147, 0
    %2295 = vmatprep.subr.bf16.mxu0 0
    %2296 = vmatpush1.bf16.msra.mxu0 0
    %2297 = vmatprep.subr.bf16.mxu0 0
    %2298 = vmatpush1.bf16.msra.mxu0 0
    %2299 = vmatprep.subr.bf16.mxu0 0
    %2300 = vmatpush1.bf16.msra.mxu0 0
    %2301 = vmatprep.subr.bf16.mxu0 0
    %2302 = vmatpush1.bf16.msra.mxu0 0
    %2303 = vmatprep.subr.bf16.mxu0 0
    %2304 = vmatpush1.bf16.msra.mxu0 0
    %2305 = vmatprep.subr.bf16.mxu0 0
    %2306 = vmatpush1.bf16.msra.mxu0 0
    %2307 = vmatprep.subr.bf16.mxu0 0
    %2308 = vmatpush1.bf16.msra.mxu0 0
    %2309 = vmatprep.subr.bf16.mxu0 0
    %2310 = vmatpush1.bf16.msra.mxu0 %v2290
    %2311 = vmatprep.subr.bf16.mxu0 0
    %2312 = vmatpush2.bf16.msra.mxu0 0
    %2313 = vmatprep.subr.bf16.mxu0 0
    %2314 = vmatpush2.bf16.msra.mxu0 0
    %2315 = vmatprep.subr.bf16.mxu0 0
    %2316 = vmatpush2.bf16.msra.mxu0 0
    %2317 = vmatprep.subr.bf16.mxu0 0
    %2318 = vmatpush2.bf16.msra.mxu0 0
    %2319 = vmatprep.subr.bf16.mxu0 0
    %2320 = vmatpush2.bf16.msra.mxu0 0
    %2321 = vmatprep.subr.bf16.mxu0 0
    %2322 = vmatpush2.bf16.msra.mxu0 0
    %2323 = vmatprep.subr.bf16.mxu0 0
    %2324 = vmatpush2.bf16.msra.mxu0 0
    %2325 = vmatprep.subr.bf16.mxu0 0
    %2326 = vmatpush2.bf16.msra.mxu0 0
    %2327 = vmatprep.mubr.bf16.mxu0 0
    %2328 = vmatmul.mubr.bf16.gmra.mxu0 %v2293
    %v2329 = vpop.f32.mrf.mxu0
    %v2330 = vadd.f32 0.0, %v2329
    %v2331 = vpop.f32.mrf.mxu0
    %v2332 = vpop.f32.mrf.mxu0
    %v2333 = vadd.f32 0.0, %v2332
    %v2334 = vpop.f32.mrf.mxu0
    %2335 = vdwg.mxu0
    %2338 = vrot.lane.b32.xlu0 %v2236, 8
    %v2339 = vpop.permute.xlu0 %2338
    %2340 = vrot.lane.b32.xlu0 %v2239, 8
    %v2341 = vpop.permute.xlu0 %2340
    %2346 = vrot.lane.b32.xlu0 %v2283, 16
    %v2347 = vpop.permute.xlu0 %2346
    %2348 = vrot.lane.b32.xlu0 %v2286, 16
    %v2349 = vpop.permute.xlu0 %2348
    %2354 = vrot.lane.b32.xlu0 %v2330, 24
    %v2355 = vpop.permute.xlu0 %2354
    %2356 = vrot.lane.b32.xlu0 %v2333, 24
    %v2357 = vpop.permute.xlu0 %2356
    %v2360 = vsel %vm183, %v2189, %v2339
    %v2361 = vsel %vm183, %v2192, %v2341
    %v2362 = vsel %vm405, %v2360, %v2347
    %v2363 = vsel %vm405, %v2361, %v2349
    %v2364 = vsel %vm714, %v2362, %v2355
    %v2365 = vsel %vm714, %v2363, %v2357
    %v2366 = vpack.c.bf16 %v2365, %v2364
    %v2367 = vlaneseq
    %v2368 = vshrl.u32 %v2367, 7
    %v2369 = vsub.s32 2, %v2368
    %v2370 = vrot.slane %v1751, %v2369
    %2373 = vrot.lane.b32.xlu0 %v1766, 32
    %v2374 = vpop.permute.xlu0 %2373
    %2375 = vrot.lane.b32.xlu0 %v1767, 32
    %v2376 = vpop.permute.xlu0 %2375
    %v2380 = vsel %vm111, %v2366, 0
    %2382 = vmatprep.subr.bf16.mxu0 0
    %2383 = vmatpush1.bf16.msra.mxu0 0
    %2384 = vmatprep.subr.bf16.mxu0 0
    %2385 = vmatpush1.bf16.msra.mxu0 0
    %2386 = vmatprep.subr.bf16.mxu0 0
    %2387 = vmatpush1.bf16.msra.mxu0 0
    %2388 = vmatprep.subr.bf16.mxu0 0
    %2389 = vmatpush1.bf16.msra.mxu0 0
    %2390 = vmatprep.subr.bf16.mxu0 0
    %2391 = vmatpush1.bf16.msra.mxu0 0
    %2392 = vmatprep.subr.bf16.mxu0 0
    %2393 = vmatpush1.bf16.msra.mxu0 0
    %2394 = vmatprep.subr.bf16.mxu0 0
    %2395 = vmatpush1.bf16.msra.mxu0 %v2376
    %2396 = vmatprep.subr.bf16.mxu0 0
    %2397 = vmatpush1.bf16.msra.mxu0 %v2374
    %2398 = vmatprep.subr.bf16.mxu0 0
    %2399 = vmatpush2.bf16.msra.mxu0 0
    %2400 = vmatprep.subr.bf16.mxu0 0
    %2401 = vmatpush2.bf16.msra.mxu0 0
    %2402 = vmatprep.subr.bf16.mxu0 0
    %2403 = vmatpush2.bf16.msra.mxu0 0
    %2404 = vmatprep.subr.bf16.mxu0 0
    %2405 = vmatpush2.bf16.msra.mxu0 0
    %2406 = vmatprep.subr.bf16.mxu0 0
    %2407 = vmatpush2.bf16.msra.mxu0 0
    %2408 = vmatprep.subr.bf16.mxu0 0
    %2409 = vmatpush2.bf16.msra.mxu0 0
    %2410 = vmatprep.subr.bf16.mxu0 0
    %2411 = vmatpush2.bf16.msra.mxu0 0
    %2412 = vmatprep.subr.bf16.mxu0 0
    %2413 = vmatpush2.bf16.msra.mxu0 0
    %2414 = vmatprep.mubr.bf16.mxu0 0
    %2415 = vmatmul.mubr.bf16.gmra.mxu0 %v2380
    %v2416 = vpop.f32.mrf.mxu0
    %v2417 = vadd.f32 %v2370, %v2416
    %v2418 = vpop.f32.mrf.mxu0
    %v2419 = vpop.f32.mrf.mxu0
    %v2420 = vadd.f32 %v2370, %v2419
    %v2421 = vpop.f32.mrf.mxu0
    %2422 = vdwg.mxu0
    %v2423 = vadd.f32 %v1741, %v2417
    %v2424 = vadd.f32 %v1742, %v2420
    %v2425 = vsel %vm111, %v2423, 0.0
    %2426 = vadd.xlane.f32.xlu0 %v2425
    %v2427 = vpop.xlane.xlu0 %2426
    %v2428 = vsel %vm111, %v2424, 0.0
    %2429 = vadd.xlane.f32.xlu0 %v2428
    %v2430 = vpop.xlane.xlu0 %2429
    %v2431 = vmul.f32 %v2427, %v782
    %v2432 = vmul.f32 %v2430, %v782
    %v2433 = vsub.f32 %v2423, %v2431
    %v2434 = vsub.f32 %v2424, %v2432
    %v2435 = vmul.f32 %v2433, %v2433
    %v2436 = vmul.f32 %v2434, %v2434
    %v2437 = vsel %vm111, %v2435, 0.0
    %2438 = vadd.xlane.f32.xlu0 %v2437
    %v2439 = vpop.xlane.xlu0 %2438
    %v2440 = vsel %vm111, %v2436, 0.0
    %2441 = vadd.xlane.f32.xlu0 %v2440
    %v2442 = vpop.xlane.xlu0 %2441
    %v2443 = vmul.f32 %v2439, %v782
    %v2444 = vmul.f32 %v2442, %v782
    %v2445 = vadd.f32 %v2443, 1e-05
    %v2446 = vadd.f32 %v2444, 1e-05
    %v2447 = vrsqrt.pop %v2445
    %v2448 = vrsqrt.pop %v2446
    %v2449 = vmul.f32 %v2433, %v2447
    %v2450 = vmul.f32 %v2434, %v2448
    %v2451 = vlaneseq
    %v2452 = vshrl.u32 %v2451, 7
    %v2453 = vsub.s32 3, %v2452
    %v2454 = vrot.slane %v1751, %v2453
    %v2455 = vmul.f32 %v2449, %v2454
    %v2456 = vmul.f32 %v2450, %v2454
    %v2457 = vlaneseq
    %v2458 = vshrl.u32 %v2457, 7
    %v2459 = vsub.s32 4, %v2458
    %v2460 = vrot.slane %v1751, %v2459
    %v2461 = vadd.f32 %v2455, %v2460
    %v2462 = vadd.f32 %v2456, %v2460
    %v2463 = vmul.f32 %v2461, %v74
    %v2464 = vmul.f32 %v2462, %v75
    %v2465 = vpack.c.bf16 %v2464, %v2463
    %v2466 = vpack.c.bf16 %v1748, %v1747
    %v2467 = vpack.c.bf16 %v1750, %v1749
    %v2468 = vlaneseq
    %v2469 = vshrl.u32 %v2468, 7
    %v2470 = vsub.s32 1, %v2469
    %v2471 = vrot.slane %v1751, %v2470
    %v2473 = vsel %vm111, %v2465, 0
    %2475 = vmatprep.subr.bf16.mxu0 0
    %2476 = vmatpush1.bf16.msra.mxu0 0
    %2477 = vmatprep.subr.bf16.mxu0 0
    %2478 = vmatpush1.bf16.msra.mxu0 0
    %2479 = vmatprep.subr.bf16.mxu0 0
    %2480 = vmatpush1.bf16.msra.mxu0 0
    %2481 = vmatprep.subr.bf16.mxu0 0
    %2482 = vmatpush1.bf16.msra.mxu0 0
    %2483 = vmatprep.subr.bf16.mxu0 0
    %2484 = vmatpush1.bf16.msra.mxu0 0
    %2485 = vmatprep.subr.bf16.mxu0 0
    %2486 = vmatpush1.bf16.msra.mxu0 0
    %2487 = vmatprep.subr.bf16.mxu0 0
    %2488 = vmatpush1.bf16.msra.mxu0 %v2467
    %2489 = vmatprep.subr.bf16.mxu0 0
    %2490 = vmatpush1.bf16.msra.mxu0 %v2466
    %2491 = vmatprep.subr.bf16.mxu0 0
    %2492 = vmatpush2.bf16.msra.mxu0 0
    %2493 = vmatprep.subr.bf16.mxu0 0
    %2494 = vmatpush2.bf16.msra.mxu0 0
    %2495 = vmatprep.subr.bf16.mxu0 0
    %2496 = vmatpush2.bf16.msra.mxu0 0
    %2497 = vmatprep.subr.bf16.mxu0 0
    %2498 = vmatpush2.bf16.msra.mxu0 0
    %2499 = vmatprep.subr.bf16.mxu0 0
    %2500 = vmatpush2.bf16.msra.mxu0 0
    %2501 = vmatprep.subr.bf16.mxu0 0
    %2502 = vmatpush2.bf16.msra.mxu0 0
    %2503 = vmatprep.subr.bf16.mxu0 0
    %2504 = vmatpush2.bf16.msra.mxu0 0
    %2505 = vmatprep.subr.bf16.mxu0 0
    %2506 = vmatpush2.bf16.msra.mxu0 0
    %2507 = vmatprep.mubr.bf16.mxu0 0
    %2508 = vmatmul.mubr.bf16.gmra.mxu0 %v2473
    %v2509 = vpop.f32.mrf.mxu0
    %v2510 = vadd.f32 %v2471, %v2509
    %v2511 = vpop.f32.mrf.mxu0
    %v2512 = vpop.f32.mrf.mxu0
    %v2513 = vadd.f32 %v2471, %v2512
    %v2514 = vpop.f32.mrf.mxu0
    %2515 = vdwg.mxu0
    %v2516 = vpack.c.bf16 %v81, %v80
    %2519 = vrot.lane.b32.xlu0 %v2466, 96
    %v2520 = vpop.permute.xlu0 %2519
    %2521 = vrot.lane.b32.xlu0 %v2467, 96
    %v2522 = vpop.permute.xlu0 %2521
    %2526 = vrot.lane.b32.xlu0 %v2471, 96
    %v2527 = vpop.permute.xlu0 %2526
    %v2530 = vsel %vm111, %v2516, 0
    %2532 = vmatprep.subr.bf16.mxu0 0
    %2533 = vmatpush1.bf16.msra.mxu0 0
    %2534 = vmatprep.subr.bf16.mxu0 0
    %2535 = vmatpush1.bf16.msra.mxu0 0
    %2536 = vmatprep.subr.bf16.mxu0 0
    %2537 = vmatpush1.bf16.msra.mxu0 0
    %2538 = vmatprep.subr.bf16.mxu0 0
    %2539 = vmatpush1.bf16.msra.mxu0 0
    %2540 = vmatprep.subr.bf16.mxu0 0
    %2541 = vmatpush1.bf16.msra.mxu0 0
    %2542 = vmatprep.subr.bf16.mxu0 0
    %2543 = vmatpush1.bf16.msra.mxu0 0
    %2544 = vmatprep.subr.bf16.mxu0 0
    %2545 = vmatpush1.bf16.msra.mxu0 %v2522
    %2546 = vmatprep.subr.bf16.mxu0 0
    %2547 = vmatpush1.bf16.msra.mxu0 %v2520
    %2548 = vmatprep.subr.bf16.mxu0 0
    %2549 = vmatpush2.bf16.msra.mxu0 0
    %2550 = vmatprep.subr.bf16.mxu0 0
    %2551 = vmatpush2.bf16.msra.mxu0 0
    %2552 = vmatprep.subr.bf16.mxu0 0
    %2553 = vmatpush2.bf16.msra.mxu0 0
    %2554 = vmatprep.subr.bf16.mxu0 0
    %2555 = vmatpush2.bf16.msra.mxu0 0
    %2556 = vmatprep.subr.bf16.mxu0 0
    %2557 = vmatpush2.bf16.msra.mxu0 0
    %2558 = vmatprep.subr.bf16.mxu0 0
    %2559 = vmatpush2.bf16.msra.mxu0 0
    %2560 = vmatprep.subr.bf16.mxu0 0
    %2561 = vmatpush2.bf16.msra.mxu0 0
    %2562 = vmatprep.subr.bf16.mxu0 0
    %2563 = vmatpush2.bf16.msra.mxu0 0
    %2564 = vmatprep.mubr.bf16.mxu0 0
    %2565 = vmatmul.mubr.bf16.gmra.mxu0 %v2530
    %v2566 = vpop.f32.mrf.mxu0
    %v2567 = vadd.f32 %v2527, %v2566
    %v2568 = vpop.f32.mrf.mxu0
    %v2569 = vpop.f32.mrf.mxu0
    %v2570 = vadd.f32 %v2527, %v2569
    %v2571 = vpop.f32.mrf.mxu0
    %2572 = vdwg.mxu0
    %2575 = vrot.lane.b32.xlu0 %v2510, 120
    %v2576 = vpop.permute.xlu0 %2575
    %2577 = vrot.lane.b32.xlu0 %v2513, 120
    %v2578 = vpop.permute.xlu0 %2577
    %2581 = vrot.lane.b32.xlu0 %v2510, 112
    %v2582 = vpop.permute.xlu0 %2581
    %2583 = vrot.lane.b32.xlu0 %v2513, 112
    %v2584 = vpop.permute.xlu0 %2583
    %2587 = vrot.lane.b32.xlu0 %v2510, 104
    %v2588 = vpop.permute.xlu0 %2587
    %2589 = vrot.lane.b32.xlu0 %v2513, 104
    %v2590 = vpop.permute.xlu0 %2589
    %2595 = vrot.lane.b32.xlu0 %v2567, 120
    %v2596 = vpop.permute.xlu0 %2595
    %2597 = vrot.lane.b32.xlu0 %v2570, 120
    %v2598 = vpop.permute.xlu0 %2597
    %2601 = vrot.lane.b32.xlu0 %v2567, 112
    %v2602 = vpop.permute.xlu0 %2601
    %2603 = vrot.lane.b32.xlu0 %v2570, 112
    %v2604 = vpop.permute.xlu0 %2603
    %2607 = vrot.lane.b32.xlu0 %v2567, 104
    %v2608 = vpop.permute.xlu0 %2607
    %2609 = vrot.lane.b32.xlu0 %v2570, 104
    %v2610 = vpop.permute.xlu0 %2609
    %v2613 = vpack.c.bf16 %v2513, %v2510
    %v2614 = vpack.c.bf16 %v2578, %v2576
    %v2615 = vpack.c.bf16 %v2584, %v2582
    %v2616 = vpack.c.bf16 %v2590, %v2588
    %v2617 = vpack.c.bf16 %v2570, %v2567
    %v2618 = vpack.c.bf16 %v2598, %v2596
    %v2619 = vpack.c.bf16 %v2604, %v2602
    %v2620 = vpack.c.bf16 %v2610, %v2608
    %v2622 = vsel %vm183, %v2613, 0
    %v2625 = vsel %vm183, %v2617, 0
    %2627 = vmatprep.subr.bf16.mxu0 0
    %2628 = vmatpush1.bf16.xpose.msra.mxu0 0
    %2629 = vmatprep.subr.bf16.mxu0 0
    %2630 = vmatpush1.bf16.xpose.msra.mxu0 0
    %2631 = vmatprep.subr.bf16.mxu0 0
    %2632 = vmatpush1.bf16.xpose.msra.mxu0 0
    %2633 = vmatprep.subr.bf16.mxu0 0
    %2634 = vmatpush1.bf16.xpose.msra.mxu0 0
    %2635 = vmatprep.subr.bf16.mxu0 0
    %2636 = vmatpush1.bf16.xpose.msra.mxu0 0
    %2637 = vmatprep.subr.bf16.mxu0 0
    %2638 = vmatpush1.bf16.xpose.msra.mxu0 0
    %2639 = vmatprep.subr.bf16.mxu0 0
    %2640 = vmatpush1.bf16.xpose.msra.mxu0 0
    %2641 = vmatprep.subr.bf16.mxu0 0
    %2642 = vmatpush1.bf16.xpose.msra.mxu0 %v2625
    %2643 = vmatprep.subr.bf16.mxu0 0
    %2644 = vmatpush2.bf16.xpose.msra.mxu0 0
    %2645 = vmatprep.subr.bf16.mxu0 0
    %2646 = vmatpush2.bf16.xpose.msra.mxu0 0
    %2647 = vmatprep.subr.bf16.mxu0 0
    %2648 = vmatpush2.bf16.xpose.msra.mxu0 0
    %2649 = vmatprep.subr.bf16.mxu0 0
    %2650 = vmatpush2.bf16.xpose.msra.mxu0 0
    %2651 = vmatprep.subr.bf16.mxu0 0
    %2652 = vmatpush2.bf16.xpose.msra.mxu0 0
    %2653 = vmatprep.subr.bf16.mxu0 0
    %2654 = vmatpush2.bf16.xpose.msra.mxu0 0
    %2655 = vmatprep.subr.bf16.mxu0 0
    %2656 = vmatpush2.bf16.xpose.msra.mxu0 0
    %2657 = vmatprep.subr.bf16.mxu0 0
    %2658 = vmatpush2.bf16.xpose.msra.mxu0 0
    %2659 = vmatprep.mubr.bf16.mxu0 0
    %2660 = vmatmul.mubr.bf16.gmra.mxu0 %v2622
    %v2661 = vpop.f32.mrf.mxu0
    %v2662 = vadd.f32 0.0, %v2661
    %v2663 = vpop.f32.mrf.mxu0
    %v2664 = vpop.f32.mrf.mxu0
    %v2665 = vadd.f32 0.0, %v2664
    %v2666 = vpop.f32.mrf.mxu0
    %2667 = vdwg.mxu0
    %v2669 = vsel %vm183, %v2614, 0
    %v2672 = vsel %vm183, %v2618, 0
    %2674 = vmatprep.subr.bf16.mxu0 0
    %2675 = vmatpush1.bf16.xpose.msra.mxu0 0
    %2676 = vmatprep.subr.bf16.mxu0 0
    %2677 = vmatpush1.bf16.xpose.msra.mxu0 0
    %2678 = vmatprep.subr.bf16.mxu0 0
    %2679 = vmatpush1.bf16.xpose.msra.mxu0 0
    %2680 = vmatprep.subr.bf16.mxu0 0
    %2681 = vmatpush1.bf16.xpose.msra.mxu0 0
    %2682 = vmatprep.subr.bf16.mxu0 0
    %2683 = vmatpush1.bf16.xpose.msra.mxu0 0
    %2684 = vmatprep.subr.bf16.mxu0 0
    %2685 = vmatpush1.bf16.xpose.msra.mxu0 0
    %2686 = vmatprep.subr.bf16.mxu0 0
    %2687 = vmatpush1.bf16.xpose.msra.mxu0 0
    %2688 = vmatprep.subr.bf16.mxu0 0
    %2689 = vmatpush1.bf16.xpose.msra.mxu0 %v2672
    %2690 = vmatprep.subr.bf16.mxu0 0
    %2691 = vmatpush2.bf16.xpose.msra.mxu0 0
    %2692 = vmatprep.subr.bf16.mxu0 0
    %2693 = vmatpush2.bf16.xpose.msra.mxu0 0
    %2694 = vmatprep.subr.bf16.mxu0 0
    %2695 = vmatpush2.bf16.xpose.msra.mxu0 0
    %2696 = vmatprep.subr.bf16.mxu0 0
    %2697 = vmatpush2.bf16.xpose.msra.mxu0 0
    %2698 = vmatprep.subr.bf16.mxu0 0
    %2699 = vmatpush2.bf16.xpose.msra.mxu0 0
    %2700 = vmatprep.subr.bf16.mxu0 0
    %2701 = vmatpush2.bf16.xpose.msra.mxu0 0
    %2702 = vmatprep.subr.bf16.mxu0 0
    %2703 = vmatpush2.bf16.xpose.msra.mxu0 0
    %2704 = vmatprep.subr.bf16.mxu0 0
    %2705 = vmatpush2.bf16.xpose.msra.mxu0 0
    %2706 = vmatprep.mubr.bf16.mxu0 0
    %2707 = vmatmul.mubr.bf16.gmra.mxu0 %v2669
    %v2708 = vpop.f32.mrf.mxu0
    %v2709 = vadd.f32 0.0, %v2708
    %v2710 = vpop.f32.mrf.mxu0
    %v2711 = vpop.f32.mrf.mxu0
    %v2712 = vadd.f32 0.0, %v2711
    %v2713 = vpop.f32.mrf.mxu0
    %2714 = vdwg.mxu0
    %v2716 = vsel %vm183, %v2615, 0
    %v2719 = vsel %vm183, %v2619, 0
    %2721 = vmatprep.subr.bf16.mxu0 0
    %2722 = vmatpush1.bf16.xpose.msra.mxu0 0
    %2723 = vmatprep.subr.bf16.mxu0 0
    %2724 = vmatpush1.bf16.xpose.msra.mxu0 0
    %2725 = vmatprep.subr.bf16.mxu0 0
    %2726 = vmatpush1.bf16.xpose.msra.mxu0 0
    %2727 = vmatprep.subr.bf16.mxu0 0
    %2728 = vmatpush1.bf16.xpose.msra.mxu0 0
    %2729 = vmatprep.subr.bf16.mxu0 0
    %2730 = vmatpush1.bf16.xpose.msra.mxu0 0
    %2731 = vmatprep.subr.bf16.mxu0 0
    %2732 = vmatpush1.bf16.xpose.msra.mxu0 0
    %2733 = vmatprep.subr.bf16.mxu0 0
    %2734 = vmatpush1.bf16.xpose.msra.mxu0 0
    %2735 = vmatprep.subr.bf16.mxu0 0
    %2736 = vmatpush1.bf16.xpose.msra.mxu0 %v2719
    %2737 = vmatprep.subr.bf16.mxu0 0
    %2738 = vmatpush2.bf16.xpose.msra.mxu0 0
    %2739 = vmatprep.subr.bf16.mxu0 0
    %2740 = vmatpush2.bf16.xpose.msra.mxu0 0
    %2741 = vmatprep.subr.bf16.mxu0 0
    %2742 = vmatpush2.bf16.xpose.msra.mxu0 0
    %2743 = vmatprep.subr.bf16.mxu0 0
    %2744 = vmatpush2.bf16.xpose.msra.mxu0 0
    %2745 = vmatprep.subr.bf16.mxu0 0
    %2746 = vmatpush2.bf16.xpose.msra.mxu0 0
    %2747 = vmatprep.subr.bf16.mxu0 0
    %2748 = vmatpush2.bf16.xpose.msra.mxu0 0
    %2749 = vmatprep.subr.bf16.mxu0 0
    %2750 = vmatpush2.bf16.xpose.msra.mxu0 0
    %2751 = vmatprep.subr.bf16.mxu0 0
    %2752 = vmatpush2.bf16.xpose.msra.mxu0 0
    %2753 = vmatprep.mubr.bf16.mxu0 0
    %2754 = vmatmul.mubr.bf16.gmra.mxu0 %v2716
    %v2755 = vpop.f32.mrf.mxu0
    %v2756 = vadd.f32 0.0, %v2755
    %v2757 = vpop.f32.mrf.mxu0
    %v2758 = vpop.f32.mrf.mxu0
    %v2759 = vadd.f32 0.0, %v2758
    %v2760 = vpop.f32.mrf.mxu0
    %2761 = vdwg.mxu0
    %v2763 = vsel %vm183, %v2616, 0
    %v2766 = vsel %vm183, %v2620, 0
    %2768 = vmatprep.subr.bf16.mxu0 0
    %2769 = vmatpush1.bf16.xpose.msra.mxu0 0
    %2770 = vmatprep.subr.bf16.mxu0 0
    %2771 = vmatpush1.bf16.xpose.msra.mxu0 0
    %2772 = vmatprep.subr.bf16.mxu0 0
    %2773 = vmatpush1.bf16.xpose.msra.mxu0 0
    %2774 = vmatprep.subr.bf16.mxu0 0
    %2775 = vmatpush1.bf16.xpose.msra.mxu0 0
    %2776 = vmatprep.subr.bf16.mxu0 0
    %2777 = vmatpush1.bf16.xpose.msra.mxu0 0
    %2778 = vmatprep.subr.bf16.mxu0 0
    %2779 = vmatpush1.bf16.xpose.msra.mxu0 0
    %2780 = vmatprep.subr.bf16.mxu0 0
    %2781 = vmatpush1.bf16.xpose.msra.mxu0 0
    %2782 = vmatprep.subr.bf16.mxu0 0
    %2783 = vmatpush1.bf16.xpose.msra.mxu0 %v2766
    %2784 = vmatprep.subr.bf16.mxu0 0
    %2785 = vmatpush2.bf16.xpose.msra.mxu0 0
    %2786 = vmatprep.subr.bf16.mxu0 0
    %2787 = vmatpush2.bf16.xpose.msra.mxu0 0
    %2788 = vmatprep.subr.bf16.mxu0 0
    %2789 = vmatpush2.bf16.xpose.msra.mxu0 0
    %2790 = vmatprep.subr.bf16.mxu0 0
    %2791 = vmatpush2.bf16.xpose.msra.mxu0 0
    %2792 = vmatprep.subr.bf16.mxu0 0
    %2793 = vmatpush2.bf16.xpose.msra.mxu0 0
    %2794 = vmatprep.subr.bf16.mxu0 0
    %2795 = vmatpush2.bf16.xpose.msra.mxu0 0
    %2796 = vmatprep.subr.bf16.mxu0 0
    %2797 = vmatpush2.bf16.xpose.msra.mxu0 0
    %2798 = vmatprep.subr.bf16.mxu0 0
    %2799 = vmatpush2.bf16.xpose.msra.mxu0 0
    %2800 = vmatprep.mubr.bf16.mxu0 0
    %2801 = vmatmul.mubr.bf16.gmra.mxu0 %v2763
    %v2802 = vpop.f32.mrf.mxu0
    %v2803 = vadd.f32 0.0, %v2802
    %v2804 = vpop.f32.mrf.mxu0
    %v2805 = vpop.f32.mrf.mxu0
    %v2806 = vadd.f32 0.0, %v2805
    %v2807 = vpop.f32.mrf.mxu0
    %2808 = vdwg.mxu0
    %v2809 = vmul.f32 %v2662, 0.35355338
    %v2810 = vmul.f32 %v2665, 0.35355338
    %v2811 = vmul.f32 %v2709, 0.35355338
    %v2812 = vmul.f32 %v2712, 0.35355338
    %v2813 = vmul.f32 %v2756, 0.35355338
    %v2814 = vmul.f32 %v2759, 0.35355338
    %v2815 = vmul.f32 %v2803, 0.35355338
    %v2816 = vmul.f32 %v2806, 0.35355338
    %v2817 = vadd.f32 %v2809, %v1170
    %v2818 = vadd.f32 %v2810, %v1172
    %v2819 = vadd.f32 %v2811, %v1170
    %v2820 = vadd.f32 %v2812, %v1172
    %v2821 = vadd.f32 %v2813, %v1170
    %v2822 = vadd.f32 %v2814, %v1172
    %v2823 = vadd.f32 %v2815, %v1170
    %v2824 = vadd.f32 %v2816, %v1172
    %v2825 = vsel %vm405, %v2817, -inf
    %2826 = vmax.xlane.f32.xlu0 %v2825
    %v2827 = vpop.xlane.xlu0 %2826
    %v2828 = vsel %vm405, %v2818, -inf
    %2829 = vmax.xlane.f32.xlu0 %v2828
    %v2830 = vpop.xlane.xlu0 %2829
    %v2831 = vsel %vm405, %v2819, -inf
    %2832 = vmax.xlane.f32.xlu0 %v2831
    %v2833 = vpop.xlane.xlu0 %2832
    %v2834 = vsel %vm405, %v2820, -inf
    %2835 = vmax.xlane.f32.xlu0 %v2834
    %v2836 = vpop.xlane.xlu0 %2835
    %v2837 = vsel %vm405, %v2821, -inf
    %2838 = vmax.xlane.f32.xlu0 %v2837
    %v2839 = vpop.xlane.xlu0 %2838
    %v2840 = vsel %vm405, %v2822, -inf
    %2841 = vmax.xlane.f32.xlu0 %v2840
    %v2842 = vpop.xlane.xlu0 %2841
    %v2843 = vsel %vm405, %v2823, -inf
    %2844 = vmax.xlane.f32.xlu0 %v2843
    %v2845 = vpop.xlane.xlu0 %2844
    %v2846 = vsel %vm405, %v2824, -inf
    %2847 = vmax.xlane.f32.xlu0 %v2846
    %v2848 = vpop.xlane.xlu0 %2847
    %v2849 = vsub.f32 %v2817, %v2827
    %v2850 = vsub.f32 %v2818, %v2830
    %v2851 = vsub.f32 %v2819, %v2833
    %v2852 = vsub.f32 %v2820, %v2836
    %v2853 = vsub.f32 %v2821, %v2839
    %v2854 = vsub.f32 %v2822, %v2842
    %v2855 = vsub.f32 %v2823, %v2845
    %v2856 = vsub.f32 %v2824, %v2848
    %v2857 = vmul.f32 %v2849, 1.442695
    %v2858 = vpow.pop %v2857
    %v2859 = vmul.f32 %v2850, 1.442695
    %v2860 = vpow.pop %v2859
    %v2861 = vmul.f32 %v2851, 1.442695
    %v2862 = vpow.pop %v2861
    %v2863 = vmul.f32 %v2852, 1.442695
    %v2864 = vpow.pop %v2863
    %v2865 = vmul.f32 %v2853, 1.442695
    %v2866 = vpow.pop %v2865
    %v2867 = vmul.f32 %v2854, 1.442695
    %v2868 = vpow.pop %v2867
    %v2869 = vmul.f32 %v2855, 1.442695
    %v2870 = vpow.pop %v2869
    %v2871 = vmul.f32 %v2856, 1.442695
    %v2872 = vpow.pop %v2871
    %v2873 = vsel %vm405, %v2858, 0.0
    %2874 = vadd.xlane.f32.xlu0 %v2873
    %v2875 = vpop.xlane.xlu0 %2874
    %v2876 = vsel %vm405, %v2860, 0.0
    %2877 = vadd.xlane.f32.xlu0 %v2876
    %v2878 = vpop.xlane.xlu0 %2877
    %v2879 = vsel %vm405, %v2862, 0.0
    %2880 = vadd.xlane.f32.xlu0 %v2879
    %v2881 = vpop.xlane.xlu0 %2880
    %v2882 = vsel %vm405, %v2864, 0.0
    %2883 = vadd.xlane.f32.xlu0 %v2882
    %v2884 = vpop.xlane.xlu0 %2883
    %v2885 = vsel %vm405, %v2866, 0.0
    %2886 = vadd.xlane.f32.xlu0 %v2885
    %v2887 = vpop.xlane.xlu0 %2886
    %v2888 = vsel %vm405, %v2868, 0.0
    %2889 = vadd.xlane.f32.xlu0 %v2888
    %v2890 = vpop.xlane.xlu0 %2889
    %v2891 = vsel %vm405, %v2870, 0.0
    %2892 = vadd.xlane.f32.xlu0 %v2891
    %v2893 = vpop.xlane.xlu0 %2892
    %v2894 = vsel %vm405, %v2872, 0.0
    %2895 = vadd.xlane.f32.xlu0 %v2894
    %v2896 = vpop.xlane.xlu0 %2895
    %v2897 = vrcp.pop %v2875
    %v2898 = vrcp.pop %v2878
    %v2899 = vrcp.pop %v2881
    %v2900 = vrcp.pop %v2884
    %v2901 = vrcp.pop %v2887
    %v2902 = vrcp.pop %v2890
    %v2903 = vrcp.pop %v2893
    %v2904 = vrcp.pop %v2896
    %v2905 = vmul.f32 %v2858, %v2897
    %v2906 = vmul.f32 %v2860, %v2898
    %v2907 = vmul.f32 %v2862, %v2899
    %v2908 = vmul.f32 %v2864, %v2900
    %v2909 = vmul.f32 %v2866, %v2901
    %v2910 = vmul.f32 %v2868, %v2902
    %v2911 = vmul.f32 %v2870, %v2903
    %v2912 = vmul.f32 %v2872, %v2904
    %v2913 = vpack.c.bf16 %v2906, %v2905
    %v2914 = vpack.c.bf16 %v2908, %v2907
    %v2915 = vpack.c.bf16 %v2910, %v2909
    %v2916 = vpack.c.bf16 %v2912, %v2911
    %2918 = vrot.lane.b32.xlu0 %v2617, 96
    %v2919 = vpop.permute.xlu0 %2918
    %v2922 = vsel %vm405, %v2913, 0
    %2924 = vmatprep.subr.bf16.mxu0 0
    %2925 = vmatpush1.bf16.msra.mxu0 0
    %2926 = vmatprep.subr.bf16.mxu0 0
    %2927 = vmatpush1.bf16.msra.mxu0 0
    %2928 = vmatprep.subr.bf16.mxu0 0
    %2929 = vmatpush1.bf16.msra.mxu0 0
    %2930 = vmatprep.subr.bf16.mxu0 0
    %2931 = vmatpush1.bf16.msra.mxu0 0
    %2932 = vmatprep.subr.bf16.mxu0 0
    %2933 = vmatpush1.bf16.msra.mxu0 0
    %2934 = vmatprep.subr.bf16.mxu0 0
    %2935 = vmatpush1.bf16.msra.mxu0 0
    %2936 = vmatprep.subr.bf16.mxu0 0
    %2937 = vmatpush1.bf16.msra.mxu0 0
    %2938 = vmatprep.subr.bf16.mxu0 0
    %2939 = vmatpush1.bf16.msra.mxu0 %v2919
    %2940 = vmatprep.subr.bf16.mxu0 0
    %2941 = vmatpush2.bf16.msra.mxu0 0
    %2942 = vmatprep.subr.bf16.mxu0 0
    %2943 = vmatpush2.bf16.msra.mxu0 0
    %2944 = vmatprep.subr.bf16.mxu0 0
    %2945 = vmatpush2.bf16.msra.mxu0 0
    %2946 = vmatprep.subr.bf16.mxu0 0
    %2947 = vmatpush2.bf16.msra.mxu0 0
    %2948 = vmatprep.subr.bf16.mxu0 0
    %2949 = vmatpush2.bf16.msra.mxu0 0
    %2950 = vmatprep.subr.bf16.mxu0 0
    %2951 = vmatpush2.bf16.msra.mxu0 0
    %2952 = vmatprep.subr.bf16.mxu0 0
    %2953 = vmatpush2.bf16.msra.mxu0 0
    %2954 = vmatprep.subr.bf16.mxu0 0
    %2955 = vmatpush2.bf16.msra.mxu0 0
    %2956 = vmatprep.mubr.bf16.mxu0 0
    %2957 = vmatmul.mubr.bf16.gmra.mxu0 %v2922
    %v2958 = vpop.f32.mrf.mxu0
    %v2959 = vadd.f32 0.0, %v2958
    %v2960 = vpop.f32.mrf.mxu0
    %v2961 = vpop.f32.mrf.mxu0
    %v2962 = vadd.f32 0.0, %v2961
    %v2963 = vpop.f32.mrf.mxu0
    %2964 = vdwg.mxu0
    %2966 = vrot.lane.b32.xlu0 %v2618, 96
    %v2967 = vpop.permute.xlu0 %2966
    %v2970 = vsel %vm405, %v2914, 0
    %2972 = vmatprep.subr.bf16.mxu0 0
    %2973 = vmatpush1.bf16.msra.mxu0 0
    %2974 = vmatprep.subr.bf16.mxu0 0
    %2975 = vmatpush1.bf16.msra.mxu0 0
    %2976 = vmatprep.subr.bf16.mxu0 0
    %2977 = vmatpush1.bf16.msra.mxu0 0
    %2978 = vmatprep.subr.bf16.mxu0 0
    %2979 = vmatpush1.bf16.msra.mxu0 0
    %2980 = vmatprep.subr.bf16.mxu0 0
    %2981 = vmatpush1.bf16.msra.mxu0 0
    %2982 = vmatprep.subr.bf16.mxu0 0
    %2983 = vmatpush1.bf16.msra.mxu0 0
    %2984 = vmatprep.subr.bf16.mxu0 0
    %2985 = vmatpush1.bf16.msra.mxu0 0
    %2986 = vmatprep.subr.bf16.mxu0 0
    %2987 = vmatpush1.bf16.msra.mxu0 %v2967
    %2988 = vmatprep.subr.bf16.mxu0 0
    %2989 = vmatpush2.bf16.msra.mxu0 0
    %2990 = vmatprep.subr.bf16.mxu0 0
    %2991 = vmatpush2.bf16.msra.mxu0 0
    %2992 = vmatprep.subr.bf16.mxu0 0
    %2993 = vmatpush2.bf16.msra.mxu0 0
    %2994 = vmatprep.subr.bf16.mxu0 0
    %2995 = vmatpush2.bf16.msra.mxu0 0
    %2996 = vmatprep.subr.bf16.mxu0 0
    %2997 = vmatpush2.bf16.msra.mxu0 0
    %2998 = vmatprep.subr.bf16.mxu0 0
    %2999 = vmatpush2.bf16.msra.mxu0 0
    %3000 = vmatprep.subr.bf16.mxu0 0
    %3001 = vmatpush2.bf16.msra.mxu0 0
    %3002 = vmatprep.subr.bf16.mxu0 0
    %3003 = vmatpush2.bf16.msra.mxu0 0
    %3004 = vmatprep.mubr.bf16.mxu0 0
    %3005 = vmatmul.mubr.bf16.gmra.mxu0 %v2970
    %v3006 = vpop.f32.mrf.mxu0
    %v3007 = vadd.f32 0.0, %v3006
    %v3008 = vpop.f32.mrf.mxu0
    %v3009 = vpop.f32.mrf.mxu0
    %v3010 = vadd.f32 0.0, %v3009
    %v3011 = vpop.f32.mrf.mxu0
    %3012 = vdwg.mxu0
    %3014 = vrot.lane.b32.xlu0 %v2619, 96
    %v3015 = vpop.permute.xlu0 %3014
    %v3018 = vsel %vm405, %v2915, 0
    %3020 = vmatprep.subr.bf16.mxu0 0
    %3021 = vmatpush1.bf16.msra.mxu0 0
    %3022 = vmatprep.subr.bf16.mxu0 0
    %3023 = vmatpush1.bf16.msra.mxu0 0
    %3024 = vmatprep.subr.bf16.mxu0 0
    %3025 = vmatpush1.bf16.msra.mxu0 0
    %3026 = vmatprep.subr.bf16.mxu0 0
    %3027 = vmatpush1.bf16.msra.mxu0 0
    %3028 = vmatprep.subr.bf16.mxu0 0
    %3029 = vmatpush1.bf16.msra.mxu0 0
    %3030 = vmatprep.subr.bf16.mxu0 0
    %3031 = vmatpush1.bf16.msra.mxu0 0
    %3032 = vmatprep.subr.bf16.mxu0 0
    %3033 = vmatpush1.bf16.msra.mxu0 0
    %3034 = vmatprep.subr.bf16.mxu0 0
    %3035 = vmatpush1.bf16.msra.mxu0 %v3015
    %3036 = vmatprep.subr.bf16.mxu0 0
    %3037 = vmatpush2.bf16.msra.mxu0 0
    %3038 = vmatprep.subr.bf16.mxu0 0
    %3039 = vmatpush2.bf16.msra.mxu0 0
    %3040 = vmatprep.subr.bf16.mxu0 0
    %3041 = vmatpush2.bf16.msra.mxu0 0
    %3042 = vmatprep.subr.bf16.mxu0 0
    %3043 = vmatpush2.bf16.msra.mxu0 0
    %3044 = vmatprep.subr.bf16.mxu0 0
    %3045 = vmatpush2.bf16.msra.mxu0 0
    %3046 = vmatprep.subr.bf16.mxu0 0
    %3047 = vmatpush2.bf16.msra.mxu0 0
    %3048 = vmatprep.subr.bf16.mxu0 0
    %3049 = vmatpush2.bf16.msra.mxu0 0
    %3050 = vmatprep.subr.bf16.mxu0 0
    %3051 = vmatpush2.bf16.msra.mxu0 0
    %3052 = vmatprep.mubr.bf16.mxu0 0
    %3053 = vmatmul.mubr.bf16.gmra.mxu0 %v3018
    %v3054 = vpop.f32.mrf.mxu0
    %v3055 = vadd.f32 0.0, %v3054
    %v3056 = vpop.f32.mrf.mxu0
    %v3057 = vpop.f32.mrf.mxu0
    %v3058 = vadd.f32 0.0, %v3057
    %v3059 = vpop.f32.mrf.mxu0
    %3060 = vdwg.mxu0
    %3062 = vrot.lane.b32.xlu0 %v2620, 96
    %v3063 = vpop.permute.xlu0 %3062
    %v3066 = vsel %vm405, %v2916, 0
    %3068 = vmatprep.subr.bf16.mxu0 0
    %3069 = vmatpush1.bf16.msra.mxu0 0
    %3070 = vmatprep.subr.bf16.mxu0 0
    %3071 = vmatpush1.bf16.msra.mxu0 0
    %3072 = vmatprep.subr.bf16.mxu0 0
    %3073 = vmatpush1.bf16.msra.mxu0 0
    %3074 = vmatprep.subr.bf16.mxu0 0
    %3075 = vmatpush1.bf16.msra.mxu0 0
    %3076 = vmatprep.subr.bf16.mxu0 0
    %3077 = vmatpush1.bf16.msra.mxu0 0
    %3078 = vmatprep.subr.bf16.mxu0 0
    %3079 = vmatpush1.bf16.msra.mxu0 0
    %3080 = vmatprep.subr.bf16.mxu0 0
    %3081 = vmatpush1.bf16.msra.mxu0 0
    %3082 = vmatprep.subr.bf16.mxu0 0
    %3083 = vmatpush1.bf16.msra.mxu0 %v3063
    %3084 = vmatprep.subr.bf16.mxu0 0
    %3085 = vmatpush2.bf16.msra.mxu0 0
    %3086 = vmatprep.subr.bf16.mxu0 0
    %3087 = vmatpush2.bf16.msra.mxu0 0
    %3088 = vmatprep.subr.bf16.mxu0 0
    %3089 = vmatpush2.bf16.msra.mxu0 0
    %3090 = vmatprep.subr.bf16.mxu0 0
    %3091 = vmatpush2.bf16.msra.mxu0 0
    %3092 = vmatprep.subr.bf16.mxu0 0
    %3093 = vmatpush2.bf16.msra.mxu0 0
    %3094 = vmatprep.subr.bf16.mxu0 0
    %3095 = vmatpush2.bf16.msra.mxu0 0
    %3096 = vmatprep.subr.bf16.mxu0 0
    %3097 = vmatpush2.bf16.msra.mxu0 0
    %3098 = vmatprep.subr.bf16.mxu0 0
    %3099 = vmatpush2.bf16.msra.mxu0 0
    %3100 = vmatprep.mubr.bf16.mxu0 0
    %3101 = vmatmul.mubr.bf16.gmra.mxu0 %v3066
    %v3102 = vpop.f32.mrf.mxu0
    %v3103 = vadd.f32 0.0, %v3102
    %v3104 = vpop.f32.mrf.mxu0
    %v3105 = vpop.f32.mrf.mxu0
    %v3106 = vadd.f32 0.0, %v3105
    %v3107 = vpop.f32.mrf.mxu0
    %3108 = vdwg.mxu0
    %3111 = vrot.lane.b32.xlu0 %v3007, 8
    %v3112 = vpop.permute.xlu0 %3111
    %3113 = vrot.lane.b32.xlu0 %v3010, 8
    %v3114 = vpop.permute.xlu0 %3113
    %3119 = vrot.lane.b32.xlu0 %v3055, 16
    %v3120 = vpop.permute.xlu0 %3119
    %3121 = vrot.lane.b32.xlu0 %v3058, 16
    %v3122 = vpop.permute.xlu0 %3121
    %3127 = vrot.lane.b32.xlu0 %v3103, 24
    %v3128 = vpop.permute.xlu0 %3127
    %3129 = vrot.lane.b32.xlu0 %v3106, 24
    %v3130 = vpop.permute.xlu0 %3129
    %v3133 = vsel %vm183, %v2959, %v3112
    %v3134 = vsel %vm183, %v2962, %v3114
    %v3135 = vsel %vm405, %v3133, %v3120
    %v3136 = vsel %vm405, %v3134, %v3122
    %v3137 = vsel %vm714, %v3135, %v3128
    %v3138 = vsel %vm714, %v3136, %v3130
    %v3139 = vpack.c.bf16 %v3138, %v3137
    %v3140 = vlaneseq
    %v3141 = vshrl.u32 %v3140, 7
    %v3142 = vsub.s32 5, %v3141
    %v3143 = vrot.slane %v1751, %v3142
    %3144 = vrot.lane.b32.xlu0 %v2466, 32
    %v3145 = vpop.permute.xlu0 %3144
    %3146 = vrot.lane.b32.xlu0 %v2467, 32
    %v3147 = vpop.permute.xlu0 %3146
    %v3151 = vsel %vm111, %v3139, 0
    %3153 = vmatprep.subr.bf16.mxu0 0
    %3154 = vmatpush1.bf16.msra.mxu0 0
    %3155 = vmatprep.subr.bf16.mxu0 0
    %3156 = vmatpush1.bf16.msra.mxu0 0
    %3157 = vmatprep.subr.bf16.mxu0 0
    %3158 = vmatpush1.bf16.msra.mxu0 0
    %3159 = vmatprep.subr.bf16.mxu0 0
    %3160 = vmatpush1.bf16.msra.mxu0 0
    %3161 = vmatprep.subr.bf16.mxu0 0
    %3162 = vmatpush1.bf16.msra.mxu0 0
    %3163 = vmatprep.subr.bf16.mxu0 0
    %3164 = vmatpush1.bf16.msra.mxu0 0
    %3165 = vmatprep.subr.bf16.mxu0 0
    %3166 = vmatpush1.bf16.msra.mxu0 %v3147
    %3167 = vmatprep.subr.bf16.mxu0 0
    %3168 = vmatpush1.bf16.msra.mxu0 %v3145
    %3169 = vmatprep.subr.bf16.mxu0 0
    %3170 = vmatpush2.bf16.msra.mxu0 0
    %3171 = vmatprep.subr.bf16.mxu0 0
    %3172 = vmatpush2.bf16.msra.mxu0 0
    %3173 = vmatprep.subr.bf16.mxu0 0
    %3174 = vmatpush2.bf16.msra.mxu0 0
    %3175 = vmatprep.subr.bf16.mxu0 0
    %3176 = vmatpush2.bf16.msra.mxu0 0
    %3177 = vmatprep.subr.bf16.mxu0 0
    %3178 = vmatpush2.bf16.msra.mxu0 0
    %3179 = vmatprep.subr.bf16.mxu0 0
    %3180 = vmatpush2.bf16.msra.mxu0 0
    %3181 = vmatprep.subr.bf16.mxu0 0
    %3182 = vmatpush2.bf16.msra.mxu0 0
    %3183 = vmatprep.subr.bf16.mxu0 0
    %3184 = vmatpush2.bf16.msra.mxu0 0
    %3185 = vmatprep.mubr.bf16.mxu0 0
    %3186 = vmatmul.mubr.bf16.gmra.mxu0 %v3151
    %v3187 = vpop.f32.mrf.mxu0
    %v3188 = vadd.f32 %v3143, %v3187
    %v3189 = vpop.f32.mrf.mxu0
    %v3190 = vpop.f32.mrf.mxu0
    %v3191 = vadd.f32 %v3143, %v3190
    %v3192 = vpop.f32.mrf.mxu0
    %3193 = vdwg.mxu0
    %v3194 = vadd.f32 %v2463, %v3188
    %v3195 = vadd.f32 %v2464, %v3191
    %v3196 = vsel %vm111, %v3194, 0.0
    %3197 = vadd.xlane.f32.xlu0 %v3196
    %v3198 = vpop.xlane.xlu0 %3197
    %v3199 = vsel %vm111, %v3195, 0.0
    %3200 = vadd.xlane.f32.xlu0 %v3199
    %v3201 = vpop.xlane.xlu0 %3200
    %v3202 = vmul.f32 %v3198, %v782
    %v3203 = vmul.f32 %v3201, %v782
    %v3204 = vsub.f32 %v3194, %v3202
    %v3205 = vsub.f32 %v3195, %v3203
    %v3206 = vmul.f32 %v3204, %v3204
    %v3207 = vmul.f32 %v3205, %v3205
    %v3208 = vsel %vm111, %v3206, 0.0
    %3209 = vadd.xlane.f32.xlu0 %v3208
    %v3210 = vpop.xlane.xlu0 %3209
    %v3211 = vsel %vm111, %v3207, 0.0
    %3212 = vadd.xlane.f32.xlu0 %v3211
    %v3213 = vpop.xlane.xlu0 %3212
    %v3214 = vmul.f32 %v3210, %v782
    %v3215 = vmul.f32 %v3213, %v782
    %v3216 = vadd.f32 %v3214, 1e-05
    %v3217 = vadd.f32 %v3215, 1e-05
    %v3218 = vrsqrt.pop %v3216
    %v3219 = vrsqrt.pop %v3217
    %v3220 = vmul.f32 %v3204, %v3218
    %v3221 = vmul.f32 %v3205, %v3219
    %v3222 = vlaneseq
    %v3223 = vshrl.u32 %v3222, 7
    %v3224 = vsub.s32 6, %v3223
    %v3225 = vrot.slane %v1751, %v3224
    %v3226 = vmul.f32 %v3220, %v3225
    %v3227 = vmul.f32 %v3221, %v3225
    %v3228 = vlaneseq
    %v3229 = vshrl.u32 %v3228, 7
    %v3230 = vsub.s32 7, %v3229
    %v3231 = vrot.slane %v1751, %v3230
    %v3232 = vadd.f32 %v3226, %v3231
    %v3233 = vadd.f32 %v3227, %v3231
    %v3234 = vmul.f32 %v3232, %v74
    %v3235 = vmul.f32 %v3233, %v75
    %v3236 = vpack.c.bf16 %v3235, %v3234
    %v3237 = vpack.c.bf16 %v1754, %v1753
    %v3238 = vpack.c.bf16 %v1756, %v1755
    %v3239 = vlaneseq
    %v3240 = vshrl.u32 %v3239, 7
    %v3241 = vsub.s32 0, %v3240
    %v3242 = vrot.slane %v1752, %v3241
    %v3244 = vsel %vm111, %v3236, 0
    %3246 = vmatprep.subr.bf16.mxu0 0
    %3247 = vmatpush1.bf16.msra.mxu0 0
    %3248 = vmatprep.subr.bf16.mxu0 0
    %3249 = vmatpush1.bf16.msra.mxu0 0
    %3250 = vmatprep.subr.bf16.mxu0 0
    %3251 = vmatpush1.bf16.msra.mxu0 0
    %3252 = vmatprep.subr.bf16.mxu0 0
    %3253 = vmatpush1.bf16.msra.mxu0 0
    %3254 = vmatprep.subr.bf16.mxu0 0
    %3255 = vmatpush1.bf16.msra.mxu0 0
    %3256 = vmatprep.subr.bf16.mxu0 0
    %3257 = vmatpush1.bf16.msra.mxu0 0
    %3258 = vmatprep.subr.bf16.mxu0 0
    %3259 = vmatpush1.bf16.msra.mxu0 %v3238
    %3260 = vmatprep.subr.bf16.mxu0 0
    %3261 = vmatpush1.bf16.msra.mxu0 %v3237
    %3262 = vmatprep.subr.bf16.mxu0 0
    %3263 = vmatpush2.bf16.msra.mxu0 0
    %3264 = vmatprep.subr.bf16.mxu0 0
    %3265 = vmatpush2.bf16.msra.mxu0 0
    %3266 = vmatprep.subr.bf16.mxu0 0
    %3267 = vmatpush2.bf16.msra.mxu0 0
    %3268 = vmatprep.subr.bf16.mxu0 0
    %3269 = vmatpush2.bf16.msra.mxu0 0
    %3270 = vmatprep.subr.bf16.mxu0 0
    %3271 = vmatpush2.bf16.msra.mxu0 0
    %3272 = vmatprep.subr.bf16.mxu0 0
    %3273 = vmatpush2.bf16.msra.mxu0 0
    %3274 = vmatprep.subr.bf16.mxu0 0
    %3275 = vmatpush2.bf16.msra.mxu0 0
    %3276 = vmatprep.subr.bf16.mxu0 0
    %3277 = vmatpush2.bf16.msra.mxu0 0
    %3278 = vmatprep.mubr.bf16.mxu0 0
    %3279 = vmatmul.mubr.bf16.gmra.mxu0 %v3244
    %v3280 = vpop.f32.mrf.mxu0
    %v3281 = vadd.f32 %v3242, %v3280
    %v3282 = vpop.f32.mrf.mxu0
    %v3283 = vpop.f32.mrf.mxu0
    %v3284 = vadd.f32 %v3242, %v3283
    %v3285 = vpop.f32.mrf.mxu0
    %3286 = vdwg.mxu0
    %v3287 = vmax.f32 %v3281, 0.0
    %v3288 = vmax.f32 %v3284, 0.0
    %v3289 = vpack.c.bf16 %v3288, %v3287
    %v3290 = vpack.c.bf16 %v1758, %v1757
    %v3291 = vpack.c.bf16 %v1760, %v1759
    %v3292 = vpack.c.bf16 %v1762, %v1761
    %v3293 = vpack.c.bf16 %v1764, %v1763
    %v3294 = vlaneseq
    %v3295 = vshrl.u32 %v3294, 7
    %v3296 = vsub.s32 1, %v3295
    %v3297 = vrot.slane %v1752, %v3296
    %v3299 = vsel %vm1656, %v3289, 0
    %3301 = vmatprep.subr.bf16.mxu0 0
    %3302 = vmatpush1.bf16.msra.mxu0 0
    %3303 = vmatprep.subr.bf16.mxu0 0
    %3304 = vmatpush1.bf16.msra.mxu0 0
    %3305 = vmatprep.subr.bf16.mxu0 0
    %3306 = vmatpush1.bf16.msra.mxu0 0
    %3307 = vmatprep.subr.bf16.mxu0 0
    %3308 = vmatpush1.bf16.msra.mxu0 0
    %3309 = vmatprep.subr.bf16.mxu0 0
    %3310 = vmatpush1.bf16.msra.mxu0 %v3293
    %3311 = vmatprep.subr.bf16.mxu0 0
    %3312 = vmatpush1.bf16.msra.mxu0 %v3292
    %3313 = vmatprep.subr.bf16.mxu0 0
    %3314 = vmatpush1.bf16.msra.mxu0 %v3291
    %3315 = vmatprep.subr.bf16.mxu0 0
    %3316 = vmatpush1.bf16.msra.mxu0 %v3290
    %3317 = vmatprep.subr.bf16.mxu0 0
    %3318 = vmatpush2.bf16.msra.mxu0 0
    %3319 = vmatprep.subr.bf16.mxu0 0
    %3320 = vmatpush2.bf16.msra.mxu0 0
    %3321 = vmatprep.subr.bf16.mxu0 0
    %3322 = vmatpush2.bf16.msra.mxu0 0
    %3323 = vmatprep.subr.bf16.mxu0 0
    %3324 = vmatpush2.bf16.msra.mxu0 0
    %3325 = vmatprep.subr.bf16.mxu0 0
    %3326 = vmatpush2.bf16.msra.mxu0 0
    %3327 = vmatprep.subr.bf16.mxu0 0
    %3328 = vmatpush2.bf16.msra.mxu0 0
    %3329 = vmatprep.subr.bf16.mxu0 0
    %3330 = vmatpush2.bf16.msra.mxu0 0
    %3331 = vmatprep.subr.bf16.mxu0 0
    %3332 = vmatpush2.bf16.msra.mxu0 0
    %3333 = vmatprep.mubr.bf16.mxu0 0
    %3334 = vmatmul.mubr.bf16.gmra.mxu0 %v3299
    %v3335 = vpop.f32.mrf.mxu0
    %v3336 = vadd.f32 %v3297, %v3335
    %v3337 = vpop.f32.mrf.mxu0
    %v3338 = vpop.f32.mrf.mxu0
    %v3339 = vadd.f32 %v3297, %v3338
    %v3340 = vpop.f32.mrf.mxu0
    %3341 = vdwg.mxu0
    %v3342 = vadd.f32 %v3234, %v3336
    %v3343 = vadd.f32 %v3235, %v3339
    %v3344 = vsel %vm111, %v3342, 0.0
    %3345 = vadd.xlane.f32.xlu0 %v3344
    %v3346 = vpop.xlane.xlu0 %3345
    %v3347 = vsel %vm111, %v3343, 0.0
    %3348 = vadd.xlane.f32.xlu0 %v3347
    %v3349 = vpop.xlane.xlu0 %3348
    %v3350 = vmul.f32 %v3346, %v782
    %v3351 = vmul.f32 %v3349, %v782
    %v3352 = vsub.f32 %v3342, %v3350
    %v3353 = vsub.f32 %v3343, %v3351
    %v3354 = vmul.f32 %v3352, %v3352
    %v3355 = vmul.f32 %v3353, %v3353
    %v3356 = vsel %vm111, %v3354, 0.0
    %3357 = vadd.xlane.f32.xlu0 %v3356
    %v3358 = vpop.xlane.xlu0 %3357
    %v3359 = vsel %vm111, %v3355, 0.0
    %3360 = vadd.xlane.f32.xlu0 %v3359
    %v3361 = vpop.xlane.xlu0 %3360
    %v3362 = vmul.f32 %v3358, %v782
    %v3363 = vmul.f32 %v3361, %v782
    %v3364 = vadd.f32 %v3362, 1e-05
    %v3365 = vadd.f32 %v3363, 1e-05
    %v3366 = vrsqrt.pop %v3364
    %v3367 = vrsqrt.pop %v3365
    %v3368 = vmul.f32 %v3352, %v3366
    %v3369 = vmul.f32 %v3353, %v3367
    %v3370 = vlaneseq
    %v3371 = vshrl.u32 %v3370, 7
    %v3372 = vsub.s32 2, %v3371
    %v3373 = vrot.slane %v1752, %v3372
    %v3374 = vmul.f32 %v3368, %v3373
    %v3375 = vmul.f32 %v3369, %v3373
    %v3376 = vlaneseq
    %v3377 = vshrl.u32 %v3376, 7
    %v3378 = vsub.s32 3, %v3377
    %v3379 = vrot.slane %v1752, %v3378
    %v3380 = vadd.f32 %v3374, %v3379
    %v3381 = vadd.f32 %v3375, %v3379
    %v3382 = vmul.f32 %v3380, %v74
    %v3383 = vmul.f32 %v3381, %v75
    %v3384 = vld [vmem:[#allocation8 + $0x80] sm:$0xff]
    %v3385 = vld [vmem:[#allocation8 + $0x88] sm:$0xff]
    %v3386 = vld [vmem:[#allocation8 + $0x90] sm:$0xff]
    %v3387 = vld [vmem:[#allocation8 + $0x98] sm:$0xff]
    %v3388 = vpack.c.bf16 %v3383, %v3382
    %v3389 = vpack.c.bf16 %v3385, %v3384
    %v3390 = vpack.c.bf16 %v3387, %v3386
    %v3392 = vsel %vm111, %v3388, 0
    %3394 = vmatprep.subr.bf16.mxu0 0
    %3395 = vmatpush1.bf16.msra.mxu0 0
    %3396 = vmatprep.subr.bf16.mxu0 0
    %3397 = vmatpush1.bf16.msra.mxu0 0
    %3398 = vmatprep.subr.bf16.mxu0 0
    %3399 = vmatpush1.bf16.msra.mxu0 0
    %3400 = vmatprep.subr.bf16.mxu0 0
    %3401 = vmatpush1.bf16.msra.mxu0 0
    %3402 = vmatprep.subr.bf16.mxu0 0
    %3403 = vmatpush1.bf16.msra.mxu0 0
    %3404 = vmatprep.subr.bf16.mxu0 0
    %3405 = vmatpush1.bf16.msra.mxu0 0
    %3406 = vmatprep.subr.bf16.mxu0 0
    %3407 = vmatpush1.bf16.msra.mxu0 %v3390
    %3408 = vmatprep.subr.bf16.mxu0 0
    %3409 = vmatpush1.bf16.msra.mxu0 %v3389
    %3410 = vmatprep.subr.bf16.mxu0 0
    %3411 = vmatpush2.bf16.msra.mxu0 0
    %3412 = vmatprep.subr.bf16.mxu0 0
    %3413 = vmatpush2.bf16.msra.mxu0 0
    %3414 = vmatprep.subr.bf16.mxu0 0
    %3415 = vmatpush2.bf16.msra.mxu0 0
    %3416 = vmatprep.subr.bf16.mxu0 0
    %3417 = vmatpush2.bf16.msra.mxu0 0
    %3418 = vmatprep.subr.bf16.mxu0 0
    %3419 = vmatpush2.bf16.msra.mxu0 0
    %3420 = vmatprep.subr.bf16.mxu0 0
    %3421 = vmatpush2.bf16.msra.mxu0 0
    %3422 = vmatprep.subr.bf16.mxu0 0
    %3423 = vmatpush2.bf16.msra.mxu0 0
    %3424 = vmatprep.subr.bf16.mxu0 0
    %3425 = vmatpush2.bf16.msra.mxu0 0
    %3426 = vmatprep.mubr.bf16.mxu0 0
    %3427 = vmatmul.mubr.bf16.gmra.mxu0 %v3392
    %v3428 = vpop.f32.mrf.mxu0
    %v3429 = vadd.f32 0.0, %v3428
    %v3430 = vpop.f32.mrf.mxu0
    %v3431 = vpop.f32.mrf.mxu0
    %v3432 = vadd.f32 0.0, %v3431
    %v3433 = vpop.f32.mrf.mxu0
    %3434 = vdwg.mxu0
    %v3435 = vlaneseq
    %v3436 = vand.u32 %v3435, 127
    %vm3437 = vcmp.lt.s32.totalorder %v3436, 50
    %v3438 = vsel %vm3437, 1, 0
    %vm3439 = vcmp.eq.s32.totalorder %v3438, 1
    %v3440 = vsel %vm3439, %v3429, -1e+30
    %v3441 = vsel %vm3439, %v3432, -1e+30
    %3442 = vmax.xlane.f32.xlu0 %v3440
    %v3443 = vpop.xlane.xlu0 %3442
    %3444 = vmax.xlane.f32.xlu0 %v3441
    %v3445 = vpop.xlane.xlu0 %3444
    %v3446 = vsub.f32 %v3440, %v3443
    %v3447 = vsub.f32 %v3441, %v3445
    %v3448 = vmul.f32 %v3446, 1.442695
    %v3449 = vpow.pop %v3448
    %v3450 = vmul.f32 %v3447, 1.442695
    %v3451 = vpow.pop %v3450
    %3452 = vadd.xlane.f32.xlu0 %v3449
    %v3453 = vpop.xlane.xlu0 %3452
    %3454 = vadd.xlane.f32.xlu0 %v3451
    %v3455 = vpop.xlane.xlu0 %3454
    %v3456 = vlog2.pop %v3453
    %v3457 = vmul.f32 %v3456, 0.6931472
    %v3458 = vlog2.pop %v3455
    %v3459 = vmul.f32 %v3458, 0.6931472
    %v3460 = vsub.f32 %v3446, %v3457
    %v3461 = vsub.f32 %v3447, %v3459
    %3462 = vst [vmem:[#allocation10] sm:$0xff] %v3460
    %3463 = vst [vmem:[#allocation10 + $0x8] sm:$0xff] %v3461
    // Predicated region
    $region34: #{tpu_custom_call.1} parent=1 // pred_check
      _
    $region35: #{tpu_custom_call.1} parent=1 // pred_check_branch
      %3465 = sbr.rel (0) target = $region37
    $region36: #{tpu_custom_call.1} parent=1 // pred_region
      %s3467 = ssub.s32 256, 256
      %3468 = vsyncadd [#allocation4], %s3467
      %s3469 = sshll.u32 [#allocation10], 4
      %s3470 = int_to_ptr.vmem [resolvable:$true] %s3469
      %3475 = dma.vmem_to_hbm [thread:$0]  %s3470, 256, %s4, [#allocation4], 128, 128, 8
    $region37: #{tpu_custom_call.1} parent=1 // pred_fallthru
      _
    // Predicated region
    $region38: #{tpu_custom_call.1} parent=1 // pred_check
      _
    $region39: #{tpu_custom_call.1} parent=1 // pred_check_branch
      %3477 = sbr.rel (0) target = $region41
    $region40: #{tpu_custom_call.1} parent=1 // pred_region
      %3478 = dma.done [#allocation4], 256
    $region41: #{tpu_custom_call.1} parent=1 // pred_fallthru
      _
    %3479 = vsyncpa [#allocation3], 1
    %3480 = vsyncpa [#allocation6], 1
    %3481 = vsyncpa [#allocation9], 1
    %3482 = vsyncpa [#allocation4], 1

</llo_original>
